<compile_context>
chip_gen: v6e
topology: v6e:2x2x1
jax: 0.10.0
libtpu: 0.0.40
codegen_flags: <defaults>
</compile_context>

<pallas_src>
import functools
import math

import jax
import jax.numpy as jnp
from jax.experimental import pallas as pl
from jax.experimental.pallas import tpu as pltpu

MXU_DTYPE = jnp.bfloat16   # MXU operand dtype; accumulation is always f32.
LN_EPS = 1e-5


# ------------------------------ tiling helper --------------------------------

def _pick_tile(dim, target, align):
    """Largest tile <= target that exactly divides `dim` and is a multiple of `align`;
    falls back to the full dim (block == full extent is always legal)."""
    if dim <= target:
        return dim
    t = (target // align) * align
    while t >= align:
        if dim % t == 0:
            return t
        t -= align
    return dim


def _cparams(*sem):
    return pltpu.CompilerParams(dimension_semantics=sem)


# ----------------------------- Pallas kernels --------------------------------

def _matmul_bias_kernel(x_ref, w_ref, b_ref, o_ref, acc_ref):
    # K-tiled matmul with f32 accumulator: out = x @ w + b
    @pl.when(pl.program_id(2) == 0)
    def _():
        acc_ref[...] = jnp.zeros_like(acc_ref)

    acc_ref[...] += jnp.dot(x_ref[...].astype(MXU_DTYPE),
                            w_ref[...].astype(MXU_DTYPE),
                            preferred_element_type=jnp.float32)

    @pl.when(pl.program_id(2) == pl.num_programs(2) - 1)
    def _():
        o_ref[...] = (acc_ref[...] + b_ref[...]).astype(o_ref.dtype)


def _matmul_resid_kernel(x_ref, w_ref, b_ref, r_ref, o_ref, acc_ref):
    # K-tiled matmul with f32 accumulator: out = x @ w + b + residual
    @pl.when(pl.program_id(2) == 0)
    def _():
        acc_ref[...] = jnp.zeros_like(acc_ref)

    acc_ref[...] += jnp.dot(x_ref[...].astype(MXU_DTYPE),
                            w_ref[...].astype(MXU_DTYPE),
                            preferred_element_type=jnp.float32)

    @pl.when(pl.program_id(2) == pl.num_programs(2) - 1)
    def _():
        o_ref[...] = (acc_ref[...] + b_ref[...]
                      + r_ref[...].astype(jnp.float32)).astype(o_ref.dtype)


def _ln_matmul_kernel(x_ref, g_ref, b_ref, w_ref, bias_ref, o_ref, *, gelu):
    # Fused LayerNorm (full feature dim per block) + matmul (+ optional GELU).
    x = x_ref[...].astype(jnp.float32)
    mu = jnp.mean(x, axis=-1, keepdims=True)
    var = jnp.mean((x - mu) ** 2, axis=-1, keepdims=True)
    xn = (x - mu) * jax.lax.rsqrt(var + LN_EPS)
    xn = xn * g_ref[...] + b_ref[...]
    y = jnp.dot(xn.astype(MXU_DTYPE), w_ref[...].astype(MXU_DTYPE),
                preferred_element_type=jnp.float32) + bias_ref[...]
    if gelu:
        # tanh-approx GELU (EUP friendly).
        # TODO(synk): PyTorch nn.GELU() default is the exact erf form; outputs differ slightly.
        c = math.sqrt(2.0 / math.pi)
        y = 0.5 * y * (1.0 + jnp.tanh(c * (y + 0.044715 * y * y * y)))
    o_ref[...] = y.astype(o_ref.dtype)


def _ln_qkv_kernel(x_ref, g_ref, b_ref, wq_ref, wk_ref, wv_ref,
                   bq_ref, bk_ref, bv_ref, q_ref, k_ref, v_ref):
    # Fused LayerNorm + Q/K/V projections (three outputs; LN computed once per row block).
    x = x_ref[...].astype(jnp.float32)
    mu = jnp.mean(x, axis=-1, keepdims=True)
    var = jnp.mean((x - mu) ** 2, axis=-1, keepdims=True)
    xn = (x - mu) * jax.lax.rsqrt(var + LN_EPS)
    xn = (xn * g_ref[...] + b_ref[...]).astype(MXU_DTYPE)
    q_ref[...] = (jnp.dot(xn, wq_ref[...].astype(MXU_DTYPE),
                          preferred_element_type=jnp.float32)
                  + bq_ref[...]).astype(q_ref.dtype)
    k_ref[...] = (jnp.dot(xn, wk_ref[...].astype(MXU_DTYPE),
                          preferred_element_type=jnp.float32)
                  + bk_ref[...]).astype(k_ref.dtype)
    v_ref[...] = (jnp.dot(xn, wv_ref[...].astype(MXU_DTYPE),
                          preferred_element_type=jnp.float32)
                  + bv_ref[...]).astype(v_ref.dtype)


def _layernorm_kernel(x_ref, g_ref, b_ref, o_ref):
    x = x_ref[...].astype(jnp.float32)
    mu = jnp.mean(x, axis=-1, keepdims=True)
    var = jnp.mean((x - mu) ** 2, axis=-1, keepdims=True)
    y = (x - mu) * jax.lax.rsqrt(var + LN_EPS)
    o_ref[...] = (y * g_ref[...] + b_ref[...]).astype(o_ref.dtype)


def _add_pos_ln_kernel(x_ref, pos_ref, g_ref, b_ref, o_ref):
    x = x_ref[...].astype(jnp.float32) + pos_ref[...].astype(jnp.float32)
    mu = jnp.mean(x, axis=-1, keepdims=True)
    var = jnp.mean((x - mu) ** 2, axis=-1, keepdims=True)
    y = (x - mu) * jax.lax.rsqrt(var + LN_EPS)
    o_ref[...] = (y * g_ref[...] + b_ref[...]).astype(o_ref.dtype)


def _mha_kernel(q_ref, k_ref, v_ref, o_ref, *, heads, scale):
    # All heads of a batch block processed in one grid step (no head transposes in HBM).
    q = q_ref[...]
    k = k_ref[...]
    v = v_ref[...]
    E = q.shape[-1]
    hd = E // heads
    outs = []
    for h in range(heads):                      # static unroll: heads batched per grid step
        sl = slice(h * hd, (h + 1) * hd)
        qh = q[:, :, sl].astype(MXU_DTYPE)
        kh = k[:, :, sl].astype(MXU_DTYPE)
        vh = v[:, :, sl].astype(MXU_DTYPE)
        s = jnp.einsum('bqd,bkd->bqk', qh, kh,
                       preferred_element_type=jnp.float32) * scale
        s = s - jnp.max(s, axis=-1, keepdims=True)
        p = jnp.exp(s)
        inv = pl.reciprocal(jnp.sum(p, axis=-1, keepdims=True), approx=True)
        p = (p * inv).astype(MXU_DTYPE)
        outs.append(jnp.einsum('bqk,bkd->bqd', p, vh,
                               preferred_element_type=jnp.float32))
    o_ref[...] = jnp.concatenate(outs, axis=-1).astype(o_ref.dtype)


# -------------------------------- wrappers ------------------------------------

def pallas_linear_bias(x, w, b, *, tm=256, tn=512, tk=512):
    M, K = x.shape
    N = w.shape[1]
    tm = _pick_tile(M, tm, 8)
    tn = _pick_tile(N, tn, 128)
    tk = _pick_tile(K, tk, 128)
    return pl.pallas_call(
        _matmul_bias_kernel,
        out_shape=jax.ShapeDtypeStruct((M, N), jnp.float32),
        grid=(M // tm, N // tn, K // tk),
        in_specs=[
            pl.BlockSpec((tm, tk), lambda i, j, k: (i, k)),
            pl.BlockSpec((tk, tn), lambda i, j, k: (k, j)),
            pl.BlockSpec((1, tn), lambda i, j, k: (0, j)),
        ],
        out_specs=pl.BlockSpec((tm, tn), lambda i, j, k: (i, j)),
        scratch_shapes=[pltpu.VMEM((tm, tn), jnp.float32)],
        compiler_params=_cparams("parallel", "parallel", "arbitrary"),
    )(x, w, b.reshape(1, N))


def pallas_linear_residual(x, w, b, res, *, tm=256, tn=512, tk=512):
    M, K = x.shape
    N = w.shape[1]
    tm = _pick_tile(M, tm, 8)
    tn = _pick_tile(N, tn, 128)
    tk = _pick_tile(K, tk, 128)
    return pl.pallas_call(
        _matmul_resid_kernel,
        out_shape=jax.ShapeDtypeStruct((M, N), res.dtype),
        grid=(M // tm, N // tn, K // tk),
        in_specs=[
            pl.BlockSpec((tm, tk), lambda i, j, k: (i, k)),
            pl.BlockSpec((tk, tn), lambda i, j, k: (k, j)),
            pl.BlockSpec((1, tn), lambda i, j, k: (0, j)),
            pl.BlockSpec((tm, tn), lambda i, j, k: (i, j)),
        ],
        out_specs=pl.BlockSpec((tm, tn), lambda i, j, k: (i, j)),
        scratch_shapes=[pltpu.VMEM((tm, tn), jnp.float32)],
        compiler_params=_cparams("parallel", "parallel", "arbitrary"),
    )(x, w, b.reshape(1, N), res)


def pallas_ln_matmul(x, g, b, w, bias, *, gelu=False, tm=256, tn=512):
    # LN needs the full feature dim, so K stays whole; M/N tiled.
    M, K = x.shape
    N = w.shape[1]
    tm = _pick_tile(M, tm, 8)
    tn = _pick_tile(N, tn, 128)
    kern = functools.partial(_ln_matmul_kernel, gelu=gelu)
    return pl.pallas_call(
        kern,
        out_shape=jax.ShapeDtypeStruct((M, N), x.dtype),
        grid=(M // tm, N // tn),
        in_specs=[
            pl.BlockSpec((tm, K), lambda i, j: (i, 0)),
            pl.BlockSpec((1, K), lambda i, j: (0, 0)),
            pl.BlockSpec((1, K), lambda i, j: (0, 0)),
            pl.BlockSpec((K, tn), lambda i, j: (0, j)),
            pl.BlockSpec((1, tn), lambda i, j: (0, j)),
        ],
        out_specs=pl.BlockSpec((tm, tn), lambda i, j: (i, j)),
        compiler_params=_cparams("parallel", "parallel"),
    )(x, g.reshape(1, K), b.reshape(1, K), w, bias.reshape(1, N))


def pallas_ln_qkv(x, g, b, wq, wk, wv, bq, bk, bv, *, tm=256):
    M, K = x.shape
    E = wq.shape[1]
    tm = _pick_tile(M, tm, 8)
    row = pl.BlockSpec((tm, K), lambda i: (i, 0))
    wspec = pl.BlockSpec((K, E), lambda i: (0, 0))
    vec_k = pl.BlockSpec((1, K), lambda i: (0, 0))
    vec_e = pl.BlockSpec((1, E), lambda i: (0, 0))
    ospec = pl.BlockSpec((tm, E), lambda i: (i, 0))
    out_sds = jax.ShapeDtypeStruct((M, E), x.dtype)
    return pl.pallas_call(
        _ln_qkv_kernel,
        out_shape=(out_sds, out_sds, out_sds),
        grid=(M // tm,),
        in_specs=[row, vec_k, vec_k, wspec, wspec, wspec, vec_e, vec_e, vec_e],
        out_specs=(ospec, ospec, ospec),
        compiler_params=_cparams("parallel"),
    )(x, g.reshape(1, K), b.reshape(1, K), wq, wk, wv,
      bq.reshape(1, E), bk.reshape(1, E), bv.reshape(1, E))


def pallas_layernorm(x, g, b, *, tm=512):
    M, E = x.shape
    tm = _pick_tile(M, tm, 8)
    return pl.pallas_call(
        _layernorm_kernel,
        out_shape=jax.ShapeDtypeStruct((M, E), x.dtype),
        grid=(M // tm,),
        in_specs=[pl.BlockSpec((tm, E), lambda i: (i, 0)),
                  pl.BlockSpec((1, E), lambda i: (0, 0)),
                  pl.BlockSpec((1, E), lambda i: (0, 0))],
        out_specs=pl.BlockSpec((tm, E), lambda i: (i, 0)),
        compiler_params=_cparams("parallel"),
    )(x, g.reshape(1, E), b.reshape(1, E))


def pallas_add_pos_layernorm(x, pos, g, b, *, tb=256):
    BT, P, E = x.shape
    tb = _pick_tile(BT, tb, 1)
    return pl.pallas_call(
        _add_pos_ln_kernel,
        out_shape=jax.ShapeDtypeStruct((BT, P, E), x.dtype),
        grid=(BT // tb,),
        in_specs=[
            pl.BlockSpec((tb, P, E), lambda i: (i, 0, 0)),
            pl.BlockSpec((1, P, E), lambda i: (0, 0, 0)),
            pl.BlockSpec((1, 1, E), lambda i: (0, 0, 0)),
            pl.BlockSpec((1, 1, E), lambda i: (0, 0, 0)),
        ],
        out_specs=pl.BlockSpec((tb, P, E), lambda i: (i, 0, 0)),
        compiler_params=_cparams("parallel"),
    )(x, pos.reshape(1, P, E), g.reshape(1, 1, E), b.reshape(1, 1, E))


def pallas_mha(q, k, v, *, heads):
    BT, P, E = q.shape
    hd = E // heads
    scale = 1.0 / math.sqrt(hd)
    # VMEM-budget-aware batch tile: q/k/v/out blocks (double-buffered) + f32 score temps.
    per_bt = 4 * 2 * P * E * 4 + heads * P * P * 4 * 2
    bb = max(1, (16 << 20) // max(per_bt, 1))
    bb = _pick_tile(BT, min(bb, BT), 1)
    kern = functools.partial(_mha_kernel, heads=heads, scale=scale)
    spec = pl.BlockSpec((bb, P, E), lambda i: (i, 0, 0))
    return pl.pallas_call(
        kern,
        out_shape=jax.ShapeDtypeStruct((BT, P, E), q.dtype),
        grid=(BT // bb,),
        in_specs=[spec, spec, spec],
        out_specs=spec,
        compiler_params=_cparams("parallel"),
    )(q, k, v)


# ------------------------------ parameter init --------------------------------

def init_params(key, *, inp_dim, n_patches, embed_dim, enc_heads, enc_depth):
    proj_dim = n_patches * embed_dim
    ks = iter(jax.random.split(key, 4 + enc_depth * 8))
    E = embed_dim

    def nrm(shape, dtype=MXU_DTYPE):
        # weights stored in bf16 (MXU operand dtype, halves HBM/VMEM traffic)
        return (0.02 * jax.random.normal(next(ks), shape, dtype=jnp.float32)).astype(dtype)

    params = {
        "proj_w": nrm((inp_dim, proj_dim)),
        "proj_b": jnp.zeros((proj_dim,), jnp.float32),
        "pos": nrm((n_patches, E), jnp.float32),
        "pen_g": jnp.ones((E,), jnp.float32),
        "pen_b": jnp.zeros((E,), jnp.float32),
        "fn_g": jnp.ones((E,), jnp.float32),
        "fn_b": jnp.zeros((E,), jnp.float32),
        "layers": [],
    }
    for _ in range(enc_depth):
        params["layers"].append({
            "ln1_g": jnp.ones((E,), jnp.float32), "ln1_b": jnp.zeros((E,), jnp.float32),
            "wq": nrm((E, E)), "bq": jnp.zeros((E,), jnp.float32),
            "wk": nrm((E, E)), "bk": jnp.zeros((E,), jnp.float32),
            "wv": nrm((E, E)), "bv": jnp.zeros((E,), jnp.float32),
            "wo": nrm((E, E)), "bo": jnp.zeros((E,), jnp.float32),
            "ln2_g": jnp.ones((E,), jnp.float32), "ln2_b": jnp.zeros((E,), jnp.float32),
            "w1": nrm((E, 4 * E)), "b1": jnp.zeros((4 * E,), jnp.float32),
            "w2": nrm((4 * E, E)), "b2": jnp.zeros((E,), jnp.float32),
        })
    return params


# --------------------------------- forward ------------------------------------

def ijepa_forward(params, x, *, n_patches, embed_dim, enc_heads):
    B, T, E_in = x.shape
    BT = B * T
    P, E, H = n_patches, embed_dim, enc_heads

    # projector (tiled M/N/K matmul, f32 accumulator)
    x2 = x.reshape(BT, E_in)
    x2 = pallas_linear_bias(x2, params["proj_w"], params["proj_b"])      # (BT, P*E)
    x3 = x2.reshape(BT, P, E)

    # + pos_embedding.weight, post_emb_norm (fused, tiled over BT)
    x3 = pallas_add_pos_layernorm(x3, params["pos"], params["pen_g"], params["pen_b"])

    # student encoder (pre-norm transformer)
    h = x3.reshape(BT * P, E)
    for layer in params["layers"]:
        # fused LN1 + QKV projection -> q/k/v as (BT*P, E) slabs (no HBM head transposes)
        q, k, v = pallas_ln_qkv(h, layer["ln1_g"], layer["ln1_b"],
                                layer["wq"], layer["wk"], layer["wv"],
                                layer["bq"], layer["bk"], layer["bv"])
        ao = pallas_mha(q.reshape(BT, P, E), k.reshape(BT, P, E),
                        v.reshape(BT, P, E), heads=H)                    # (BT, P, E)
        # attention output projection + bias + residual (fused)
        h = pallas_linear_residual(ao.reshape(BT * P, E), layer["wo"], layer["bo"], h)

        # fused LN2 + FF1 + GELU, then FF2 + bias + residual (fused)
        ff = pallas_ln_matmul(h, layer["ln2_g"], layer["ln2_b"],
                              layer["w1"], layer["b1"], gelu=True)       # (BT*P, 4E)
        h = pallas_linear_residual(ff, layer["w2"], layer["b2"], h)

    h = pallas_layernorm(h, params["fn_g"], params["fn_b"])
    return h.reshape(BT, P, E)


# ----------------------------------- main --------------------------------------

if __name__ == "__main__":
    # Small config consistent with the module: proj_dim = n_patches * embed_dim.
    B, T = 2, 2
    inp_dim = 32
    n_patches = 8
    embed_dim = 32
    enc_heads = 4
    enc_depth = 2

    key = jax.random.PRNGKey(0)
    kx, kp = jax.random.split(key)
    x = jax.random.normal(kx, (B, T, inp_dim), dtype=jnp.float32)
    params = init_params(kp, inp_dim=inp_dim, n_patches=n_patches,
                         embed_dim=embed_dim, enc_heads=enc_heads,
                         enc_depth=enc_depth)

    fwd = jax.jit(functools.partial(ijepa_forward, n_patches=n_patches,
                                    embed_dim=embed_dim, enc_heads=enc_heads))
    out = fwd(params, x)
    jax.block_until_ready(out)

    assert out.shape == (B * T, n_patches, embed_dim), out.shape
    assert jnp.all(jnp.isfinite(out))
    print("KERNEL_OK")
</pallas_src>

<mosaic_0001>
module attributes {stable_mosaic.version = 11 : i64} {
  func.func @_matmul_bias_kernel(%arg0: i32, %arg1: i32, %arg2: i32, %arg3: memref<4x32xf32, #tpu.memory_space<vmem>>, %arg4: memref<32x256xbf16, #tpu.memory_space<vmem>>, %arg5: memref<1x256xf32, #tpu.memory_space<vmem>>, %arg6: memref<4x256xf32, #tpu.memory_space<vmem>>, %arg7: memref<4x256xf32, #tpu.memory_space<vmem>>) attributes {dimension_semantics = [#tpu.dimension_semantics<parallel>, #tpu.dimension_semantics<parallel>, #tpu.dimension_semantics<arbitrary>], iteration_bounds = array<i64: 1, 1, 1>, scalar_prefetch = 0 : i64, scratch_operands = 1 : i64, tpu.core_type = #tpu.core_type<tc>, window_params = [{transform_indices = @transform_0, window_bounds = array<i64: 4, 32>}, {transform_indices = @transform_1, window_bounds = array<i64: 32, 256>}, {transform_indices = @transform_2, window_bounds = array<i64: 1, 256>}, {transform_indices = @transform_3, window_bounds = array<i64: 4, 256>}]} {
    %c0_i32 = arith.constant 0 : i32
    %0 = arith.cmpi eq, %arg2, %c0_i32 : i32
    %1 = arith.extui %0 : i1 to i32
    %c0_i32_0 = arith.constant 0 : i32
    %2 = arith.cmpi ne, %1, %c0_i32_0 : i32
    scf.if %2 {
      %cst_10 = arith.constant 0.000000e+00 : f32
      %13 = vector.broadcast %cst_10 : f32 to vector<4x256xf32>
      %c0_11 = arith.constant 0 : index
      %c0_12 = arith.constant 0 : index
      %14 = vector.load %arg7[%c0_11, %c0_12] : memref<4x256xf32, #tpu.memory_space<vmem>>, vector<4x256xf32>
      tpu.vector_store %arg7[%c0_11, %c0_12], %13 {strides = array<i32>} : memref<4x256xf32, #tpu.memory_space<vmem>>, vector<4x256xf32>,
    } else {
    }
    %c0 = arith.constant 0 : index
    %c0_1 = arith.constant 0 : index
    %3 = vector.load %arg7[%c0, %c0_1] : memref<4x256xf32, #tpu.memory_space<vmem>>, vector<4x256xf32>
    %c0_2 = arith.constant 0 : index
    %c0_3 = arith.constant 0 : index
    %4 = vector.load %arg3[%c0_2, %c0_3] : memref<4x32xf32, #tpu.memory_space<vmem>>, vector<4x32xf32>
    %5 = arith.truncf %4 : vector<4x32xf32> to vector<4x32xbf16>
    %c0_4 = arith.constant 0 : index
    %c0_5 = arith.constant 0 : index
    %6 = vector.load %arg4[%c0_4, %c0_5] : memref<32x256xbf16, #tpu.memory_space<vmem>>, vector<32x256xbf16>
    %cst = arith.constant dense<0.000000e+00> : vector<4x256xf32>
    %7 = tpu.matmul %5, %6, %cst {dimension_numbers = #tpu.dot_dimension_numbers<[1], [0], [0], [1], [0, 0, 1, 1], [], []>} : vector<4x32xbf16>, vector<32x256xbf16>, vector<4x256xf32> -> vector<4x256xf32>
    %8 = arith.addf %3, %7 : vector<4x256xf32>
    %c0_6 = arith.constant 0 : index
    %c0_7 = arith.constant 0 : index
    %9 = vector.load %arg7[%c0_6, %c0_7] : memref<4x256xf32, #tpu.memory_space<vmem>>, vector<4x256xf32>
    tpu.vector_store %arg7[%c0_6, %c0_7], %8 {strides = array<i32>} : memref<4x256xf32, #tpu.memory_space<vmem>>, vector<4x256xf32>,
    %c0_i32_8 = arith.constant 0 : i32
    %10 = arith.cmpi eq, %arg2, %c0_i32_8 : i32
    %11 = arith.extui %10 : i1 to i32
    %c0_i32_9 = arith.constant 0 : i32
    %12 = arith.cmpi ne, %11, %c0_i32_9 : i32
    scf.if %12 {
      %c0_10 = arith.constant 0 : index
      %c0_11 = arith.constant 0 : index
      %13 = vector.load %arg7[%c0_10, %c0_11] : memref<4x256xf32, #tpu.memory_space<vmem>>, vector<4x256xf32>
      %c0_12 = arith.constant 0 : index
      %c0_13 = arith.constant 0 : index
      %14 = vector.load %arg5[%c0_12, %c0_13] : memref<1x256xf32, #tpu.memory_space<vmem>>, vector<1x256xf32>
      %15 = vector.broadcast %14 : vector<1x256xf32> to vector<4x256xf32>
      %16 = arith.addf %13, %15 : vector<4x256xf32>
      %c0_14 = arith.constant 0 : index
      %c0_15 = arith.constant 0 : index
      %17 = vector.load %arg6[%c0_14, %c0_15] : memref<4x256xf32, #tpu.memory_space<vmem>>, vector<4x256xf32>
      tpu.vector_store %arg6[%c0_14, %c0_15], %16 {strides = array<i32>} : memref<4x256xf32, #tpu.memory_space<vmem>>, vector<4x256xf32>,
    } else {
    }
    return
  }
  func.func @transform_0(%arg0: i32, %arg1: i32, %arg2: i32) -> (i32, i32) {
    %c0_i32 = arith.constant 0 : i32
    return %arg0, %arg2 : i32, i32
  }
  func.func @transform_1(%arg0: i32, %arg1: i32, %arg2: i32) -> (i32, i32) {
    %c0_i32 = arith.constant 0 : i32
    return %arg2, %arg1 : i32, i32
  }
  func.func @transform_2(%arg0: i32, %arg1: i32, %arg2: i32) -> (i32, i32) {
    %c0_i32 = arith.constant 0 : i32
    %c0_i32_0 = arith.constant 0 : i32
    return %c0_i32, %arg1 : i32, i32
  }
  func.func @transform_3(%arg0: i32, %arg1: i32, %arg2: i32) -> (i32, i32) {
    %c0_i32 = arith.constant 0 : i32
    return %arg0, %arg1 : i32, i32
  }
}

module attributes {stable_mosaic.version = 11 : i64} {
  func.func @_ln_qkv_kernel(%arg0: i32, %arg1: memref<32x32xf32, #tpu.memory_space<vmem>>, %arg2: memref<1x32xf32, #tpu.memory_space<vmem>>, %arg3: memref<1x32xf32, #tpu.memory_space<vmem>>, %arg4: memref<32x32xbf16, #tpu.memory_space<vmem>>, %arg5: memref<32x32xbf16, #tpu.memory_space<vmem>>, %arg6: memref<32x32xbf16, #tpu.memory_space<vmem>>, %arg7: memref<1x32xf32, #tpu.memory_space<vmem>>, %arg8: memref<1x32xf32, #tpu.memory_space<vmem>>, %arg9: memref<1x32xf32, #tpu.memory_space<vmem>>, %arg10: memref<32x32xf32, #tpu.memory_space<vmem>>, %arg11: memref<32x32xf32, #tpu.memory_space<vmem>>, %arg12: memref<32x32xf32, #tpu.memory_space<vmem>>) attributes {dimension_semantics = [#tpu.dimension_semantics<parallel>], iteration_bounds = array<i64: 1>, scalar_prefetch = 0 : i64, scratch_operands = 0 : i64, tpu.core_type = #tpu.core_type<tc>, window_params = [{transform_indices = @transform_0, window_bounds = array<i64: 32, 32>}, {pipeline_mode = #tpu.pipeline_mode<synchronous>, transform_indices = @transform_1, window_bounds = array<i64: 1, 32>}, {pipeline_mode = #tpu.pipeline_mode<synchronous>, transform_indices = @transform_2, window_bounds = array<i64: 1, 32>}, {pipeline_mode = #tpu.pipeline_mode<synchronous>, transform_indices = @transform_3, window_bounds = array<i64: 32, 32>}, {pipeline_mode = #tpu.pipeline_mode<synchronous>, transform_indices = @transform_4, window_bounds = array<i64: 32, 32>}, {pipeline_mode = #tpu.pipeline_mode<synchronous>, transform_indices = @transform_5, window_bounds = array<i64: 32, 32>}, {pipeline_mode = #tpu.pipeline_mode<synchronous>, transform_indices = @transform_6, window_bounds = array<i64: 1, 32>}, {pipeline_mode = #tpu.pipeline_mode<synchronous>, transform_indices = @transform_7, window_bounds = array<i64: 1, 32>}, {pipeline_mode = #tpu.pipeline_mode<synchronous>, transform_indices = @transform_8, window_bounds = array<i64: 1, 32>}, {transform_indices = @transform_9, window_bounds = array<i64: 32, 32>}, {transform_indices = @transform_10, window_bounds = array<i64: 32, 32>}, {transform_indices = @transform_11, window_bounds = array<i64: 32, 32>}]} {
    %c0 = arith.constant 0 : index
    %c0_0 = arith.constant 0 : index
    %0 = vector.load %arg1[%c0, %c0_0] : memref<32x32xf32, #tpu.memory_space<vmem>>, vector<32x32xf32>
    %cst = arith.constant dense<0.000000e+00> : vector<32xf32>
    %1 = vector.multi_reduction <add>, %0, %cst [1] : vector<32x32xf32> to vector<32xf32>
    %2 = vector.shape_cast %1 : vector<32xf32> to vector<32x1xf32>
    %cst_1 = arith.constant 3.200000e+01 : f32
    %3 = vector.broadcast %cst_1 : f32 to vector<32x1xf32>
    %4 = arith.divf %2, %3 : vector<32x1xf32>
    %5 = vector.broadcast %4 : vector<32x1xf32> to vector<32x32xf32>
    %6 = arith.subf %0, %5 : vector<32x32xf32>
    %7 = arith.mulf %6, %6 : vector<32x32xf32>
    %cst_2 = arith.constant dense<0.000000e+00> : vector<32xf32>
    %8 = vector.multi_reduction <add>, %7, %cst_2 [1] : vector<32x32xf32> to vector<32xf32>
    %9 = vector.shape_cast %8 : vector<32xf32> to vector<32x1xf32>
    %cst_3 = arith.constant 3.200000e+01 : f32
    %10 = vector.broadcast %cst_3 : f32 to vector<32x1xf32>
    %11 = arith.divf %9, %10 : vector<32x1xf32>
    %12 = vector.broadcast %4 : vector<32x1xf32> to vector<32x32xf32>
    %13 = arith.subf %0, %12 : vector<32x32xf32>
    %cst_4 = arith.constant 9.99999974E-6 : f32
    %14 = vector.broadcast %cst_4 : f32 to vector<32x1xf32>
    %15 = arith.addf %11, %14 : vector<32x1xf32>
    %16 = math.rsqrt %15 : vector<32x1xf32>
    %17 = vector.broadcast %16 : vector<32x1xf32> to vector<32x32xf32>
    %18 = arith.mulf %13, %17 : vector<32x32xf32>
    %c0_5 = arith.constant 0 : index
    %c0_6 = arith.constant 0 : index
    %19 = vector.load %arg2[%c0_5, %c0_6] : memref<1x32xf32, #tpu.memory_space<vmem>>, vector<1x32xf32>
    %20 = vector.broadcast %19 : vector<1x32xf32> to vector<32x32xf32>
    %21 = arith.mulf %18, %20 : vector<32x32xf32>
    %c0_7 = arith.constant 0 : index
    %c0_8 = arith.constant 0 : index
    %22 = vector.load %arg3[%c0_7, %c0_8] : memref<1x32xf32, #tpu.memory_space<vmem>>, vector<1x32xf32>
    %23 = vector.broadcast %22 : vector<1x32xf32> to vector<32x32xf32>
    %24 = arith.addf %21, %23 : vector<32x32xf32>
    %25 = arith.truncf %24 : vector<32x32xf32> to vector<32x32xbf16>
    %c0_9 = arith.constant 0 : index
    %c0_10 = arith.constant 0 : index
    %26 = vector.load %arg4[%c0_9, %c0_10] : memref<32x32xbf16, #tpu.memory_space<vmem>>, vector<32x32xbf16>
    %cst_11 = arith.constant dense<0.000000e+00> : vector<32x32xf32>
    %27 = tpu.matmul %25, %26, %cst_11 {dimension_numbers = #tpu.dot_dimension_numbers<[1], [0], [0], [1], [0, 0, 1, 1], [], []>} : vector<32x32xbf16>, vector<32x32xbf16>, vector<32x32xf32> -> vector<32x32xf32>
    %c0_12 = arith.constant 0 : index
    %c0_13 = arith.constant 0 : index
    %28 = vector.load %arg7[%c0_12, %c0_13] : memref<1x32xf32, #tpu.memory_space<vmem>>, vector<1x32xf32>
    %29 = vector.broadcast %28 : vector<1x32xf32> to vector<32x32xf32>
    %30 = arith.addf %27, %29 : vector<32x32xf32>
    %c0_14 = arith.constant 0 : index
    %c0_15 = arith.constant 0 : index
    %31 = vector.load %arg10[%c0_14, %c0_15] : memref<32x32xf32, #tpu.memory_space<vmem>>, vector<32x32xf32>
    tpu.vector_store %arg10[%c0_14, %c0_15], %30 {strides = array<i32>} : memref<32x32xf32, #tpu.memory_space<vmem>>, vector<32x32xf32>,
    %c0_16 = arith.constant 0 : index
    %c0_17 = arith.constant 0 : index
    %32 = vector.load %arg5[%c0_16, %c0_17] : memref<32x32xbf16, #tpu.memory_space<vmem>>, vector<32x32xbf16>
    %cst_18 = arith.constant dense<0.000000e+00> : vector<32x32xf32>
    %33 = tpu.matmul %25, %32, %cst_18 {dimension_numbers = #tpu.dot_dimension_numbers<[1], [0], [0], [1], [0, 0, 1, 1], [], []>} : vector<32x32xbf16>, vector<32x32xbf16>, vector<32x32xf32> -> vector<32x32xf32>
    %c0_19 = arith.constant 0 : index
    %c0_20 = arith.constant 0 : index
    %34 = vector.load %arg8[%c0_19, %c0_20] : memref<1x32xf32, #tpu.memory_space<vmem>>, vector<1x32xf32>
    %35 = vector.broadcast %34 : vector<1x32xf32> to vector<32x32xf32>
    %36 = arith.addf %33, %35 : vector<32x32xf32>
    %c0_21 = arith.constant 0 : index
    %c0_22 = arith.constant 0 : index
    %37 = vector.load %arg11[%c0_21, %c0_22] : memref<32x32xf32, #tpu.memory_space<vmem>>, vector<32x32xf32>
    tpu.vector_store %arg11[%c0_21, %c0_22], %36 {strides = array<i32>} : memref<32x32xf32, #tpu.memory_space<vmem>>, vector<32x32xf32>,
    %c0_23 = arith.constant 0 : index
    %c0_24 = arith.constant 0 : index
    %38 = vector.load %arg6[%c0_23, %c0_24] : memref<32x32xbf16, #tpu.memory_space<vmem>>, vector<32x32xbf16>
    %cst_25 = arith.constant dense<0.000000e+00> : vector<32x32xf32>
    %39 = tpu.matmul %25, %38, %cst_25 {dimension_numbers = #tpu.dot_dimension_numbers<[1], [0], [0], [1], [0, 0, 1, 1], [], []>} : vector<32x32xbf16>, vector<32x32xbf16>, vector<32x32xf32> -> vector<32x32xf32>
    %c0_26 = arith.constant 0 : index
    %c0_27 = arith.constant 0 : index
    %40 = vector.load %arg9[%c0_26, %c0_27] : memref<1x32xf32, #tpu.memory_space<vmem>>, vector<1x32xf32>
    %41 = vector.broadcast %40 : vector<1x32xf32> to vector<32x32xf32>
    %42 = arith.addf %39, %41 : vector<32x32xf32>
    %c0_28 = arith.constant 0 : index
    %c0_29 = arith.constant 0 : index
    %43 = vector.load %arg12[%c0_28, %c0_29] : memref<32x32xf32, #tpu.memory_space<vmem>>, vector<32x32xf32>
    tpu.vector_store %arg12[%c0_28, %c0_29], %42 {strides = array<i32>} : memref<32x32xf32, #tpu.memory_space<vmem>>, vector<32x32xf32>,
    return
  }
  func.func @transform_0(%arg0: i32) -> (i32, i32) {
    %c0_i32 = arith.constant 0 : i32
    %c0_i32_0 = arith.constant 0 : i32
    return %arg0, %c0_i32 : i32, i32
  }
  func.func @transform_1(%arg0: i32) -> (i32, i32) {
    %c0_i32 = arith.constant 0 : i32
    %c0_i32_0 = arith.constant 0 : i32
    %c0_i32_1 = arith.constant 0 : i32
    return %c0_i32, %c0_i32_0 : i32, i32
  }
  func.func @transform_2(%arg0: i32) -> (i32, i32) {
    %c0_i32 = arith.constant 0 : i32
    %c0_i32_0 = arith.constant 0 : i32
    %c0_i32_1 = arith.constant 0 : i32
    return %c0_i32, %c0_i32_0 : i32, i32
  }
  func.func @transform_3(%arg0: i32) -> (i32, i32) {
    %c0_i32 = arith.constant 0 : i32
    %c0_i32_0 = arith.constant 0 : i32
    %c0_i32_1 = arith.constant 0 : i32
    return %c0_i32, %c0_i32_0 : i32, i32
  }
  func.func @transform_4(%arg0: i32) -> (i32, i32) {
    %c0_i32 = arith.constant 0 : i32
    %c0_i32_0 = arith.constant 0 : i32
    %c0_i32_1 = arith.constant 0 : i32
    return %c0_i32, %c0_i32_0 : i32, i32
  }
  func.func @transform_5(%arg0: i32) -> (i32, i32) {
    %c0_i32 = arith.constant 0 : i32
    %c0_i32_0 = arith.constant 0 : i32
    %c0_i32_1 = arith.constant 0 : i32
    return %c0_i32, %c0_i32_0 : i32, i32
  }
  func.func @transform_6(%arg0: i32) -> (i32, i32) {
    %c0_i32 = arith.constant 0 : i32
    %c0_i32_0 = arith.constant 0 : i32
    %c0_i32_1 = arith.constant 0 : i32
    return %c0_i32, %c0_i32_0 : i32, i32
  }
  func.func @transform_7(%arg0: i32) -> (i32, i32) {
    %c0_i32 = arith.constant 0 : i32
    %c0_i32_0 = arith.constant 0 : i32
    %c0_i32_1 = arith.constant 0 : i32
    return %c0_i32, %c0_i32_0 : i32, i32
  }
  func.func @transform_8(%arg0: i32) -> (i32, i32) {
    %c0_i32 = arith.constant 0 : i32
    %c0_i32_0 = arith.constant 0 : i32
    %c0_i32_1 = arith.constant 0 : i32
    return %c0_i32, %c0_i32_0 : i32, i32
  }
  func.func @transform_9(%arg0: i32) -> (i32, i32) {
    %c0_i32 = arith.constant 0 : i32
    %c0_i32_0 = arith.constant 0 : i32
    return %arg0, %c0_i32 : i32, i32
  }
  func.func @transform_10(%arg0: i32) -> (i32, i32) {
    %c0_i32 = arith.constant 0 : i32
    %c0_i32_0 = arith.constant 0 : i32
    return %arg0, %c0_i32 : i32, i32
  }
  func.func @transform_11(%arg0: i32) -> (i32, i32) {
    %c0_i32 = arith.constant 0 : i32
    %c0_i32_0 = arith.constant 0 : i32
    return %arg0, %c0_i32 : i32, i32
  }
}

module attributes {stable_mosaic.version = 11 : i64} {
  func.func @_add_pos_ln_kernel(%arg0: i32, %arg1: memref<4x8x32xf32, #tpu.memory_space<vmem>>, %arg2: memref<1x8x32xf32, #tpu.memory_space<vmem>>, %arg3: memref<1x1x32xf32, #tpu.memory_space<vmem>>, %arg4: memref<1x1x32xf32, #tpu.memory_space<vmem>>, %arg5: memref<4x8x32xf32, #tpu.memory_space<vmem>>) attributes {dimension_semantics = [#tpu.dimension_semantics<parallel>], iteration_bounds = array<i64: 1>, scalar_prefetch = 0 : i64, scratch_operands = 0 : i64, tpu.core_type = #tpu.core_type<tc>, window_params = [{transform_indices = @transform_0, window_bounds = array<i64: 4, 8, 32>}, {pipeline_mode = #tpu.pipeline_mode<synchronous>, transform_indices = @transform_1, window_bounds = array<i64: 1, 8, 32>}, {pipeline_mode = #tpu.pipeline_mode<synchronous>, transform_indices = @transform_2, window_bounds = array<i64: 1, 1, 32>}, {pipeline_mode = #tpu.pipeline_mode<synchronous>, transform_indices = @transform_3, window_bounds = array<i64: 1, 1, 32>}, {transform_indices = @transform_4, window_bounds = array<i64: 4, 8, 32>}]} {
    %c0 = arith.constant 0 : index
    %c0_0 = arith.constant 0 : index
    %c0_1 = arith.constant 0 : index
    %0 = vector.load %arg1[%c0, %c0_0, %c0_1] : memref<4x8x32xf32, #tpu.memory_space<vmem>>, vector<4x8x32xf32>
    %c0_2 = arith.constant 0 : index
    %c0_3 = arith.constant 0 : index
    %c0_4 = arith.constant 0 : index
    %1 = vector.load %arg2[%c0_2, %c0_3, %c0_4] : memref<1x8x32xf32, #tpu.memory_space<vmem>>, vector<1x8x32xf32>
    %2 = vector.broadcast %1 : vector<1x8x32xf32> to vector<4x8x32xf32>
    %3 = arith.addf %0, %2 : vector<4x8x32xf32>
    %cst = arith.constant dense<0.000000e+00> : vector<4x8xf32>
    %4 = vector.multi_reduction <add>, %3, %cst [2] : vector<4x8x32xf32> to vector<4x8xf32>
    %5 = vector.shape_cast %4 : vector<4x8xf32> to vector<4x8x1xf32>
    %cst_5 = arith.constant 3.200000e+01 : f32
    %6 = vector.broadcast %cst_5 : f32 to vector<4x8x1xf32>
    %7 = arith.divf %5, %6 : vector<4x8x1xf32>
    %8 = vector.broadcast %7 : vector<4x8x1xf32> to vector<4x8x32xf32>
    %9 = arith.subf %3, %8 : vector<4x8x32xf32>
    %10 = arith.mulf %9, %9 : vector<4x8x32xf32>
    %cst_6 = arith.constant dense<0.000000e+00> : vector<4x8xf32>
    %11 = vector.multi_reduction <add>, %10, %cst_6 [2] : vector<4x8x32xf32> to vector<4x8xf32>
    %12 = vector.shape_cast %11 : vector<4x8xf32> to vector<4x8x1xf32>
    %cst_7 = arith.constant 3.200000e+01 : f32
    %13 = vector.broadcast %cst_7 : f32 to vector<4x8x1xf32>
    %14 = arith.divf %12, %13 : vector<4x8x1xf32>
    %15 = vector.broadcast %7 : vector<4x8x1xf32> to vector<4x8x32xf32>
    %16 = arith.subf %3, %15 : vector<4x8x32xf32>
    %cst_8 = arith.constant 9.99999974E-6 : f32
    %17 = vector.broadcast %cst_8 : f32 to vector<4x8x1xf32>
    %18 = arith.addf %14, %17 : vector<4x8x1xf32>
    %19 = math.rsqrt %18 : vector<4x8x1xf32>
    %20 = vector.broadcast %19 : vector<4x8x1xf32> to vector<4x8x32xf32>
    %21 = arith.mulf %16, %20 : vector<4x8x32xf32>
    %c0_9 = arith.constant 0 : index
    %c0_10 = arith.constant 0 : index
    %c0_11 = arith.constant 0 : index
    %22 = vector.load %arg3[%c0_9, %c0_10, %c0_11] : memref<1x1x32xf32, #tpu.memory_space<vmem>>, vector<1x1x32xf32>
    %23 = vector.broadcast %22 : vector<1x1x32xf32> to vector<4x8x32xf32>
    %24 = arith.mulf %21, %23 : vector<4x8x32xf32>
    %c0_12 = arith.constant 0 : index
    %c0_13 = arith.constant 0 : index
    %c0_14 = arith.constant 0 : index
    %25 = vector.load %arg4[%c0_12, %c0_13, %c0_14] : memref<1x1x32xf32, #tpu.memory_space<vmem>>, vector<1x1x32xf32>
    %26 = vector.broadcast %25 : vector<1x1x32xf32> to vector<4x8x32xf32>
    %27 = arith.addf %24, %26 : vector<4x8x32xf32>
    %c0_15 = arith.constant 0 : index
    %c0_16 = arith.constant 0 : index
    %c0_17 = arith.constant 0 : index
    %28 = vector.load %arg5[%c0_15, %c0_16, %c0_17] : memref<4x8x32xf32, #tpu.memory_space<vmem>>, vector<4x8x32xf32>
    tpu.vector_store %arg5[%c0_15, %c0_16, %c0_17], %27 {strides = array<i32>} : memref<4x8x32xf32, #tpu.memory_space<vmem>>, vector<4x8x32xf32>,
    return
  }
  func.func @transform_0(%arg0: i32) -> (i32, i32, i32) {
    %c0_i32 = arith.constant 0 : i32
    %c0_i32_0 = arith.constant 0 : i32
    %c0_i32_1 = arith.constant 0 : i32
    return %arg0, %c0_i32, %c0_i32_0 : i32, i32, i32
  }
  func.func @transform_1(%arg0: i32) -> (i32, i32, i32) {
    %c0_i32 = arith.constant 0 : i32
    %c0_i32_0 = arith.constant 0 : i32
    %c0_i32_1 = arith.constant 0 : i32
    %c0_i32_2 = arith.constant 0 : i32
    return %c0_i32, %c0_i32_0, %c0_i32_1 : i32, i32, i32
  }
  func.func @transform_2(%arg0: i32) -> (i32, i32, i32) {
    %c0_i32 = arith.constant 0 : i32
    %c0_i32_0 = arith.constant 0 : i32
    %c0_i32_1 = arith.constant 0 : i32
    %c0_i32_2 = arith.constant 0 : i32
    return %c0_i32, %c0_i32_0, %c0_i32_1 : i32, i32, i32
  }
  func.func @transform_3(%arg0: i32) -> (i32, i32, i32) {
    %c0_i32 = arith.constant 0 : i32
    %c0_i32_0 = arith.constant 0 : i32
    %c0_i32_1 = arith.constant 0 : i32
    %c0_i32_2 = arith.constant 0 : i32
    return %c0_i32, %c0_i32_0, %c0_i32_1 : i32, i32, i32
  }
  func.func @transform_4(%arg0: i32) -> (i32, i32, i32) {
    %c0_i32 = arith.constant 0 : i32
    %c0_i32_0 = arith.constant 0 : i32
    %c0_i32_1 = arith.constant 0 : i32
    return %arg0, %c0_i32, %c0_i32_0 : i32, i32, i32
  }
}

module attributes {stable_mosaic.version = 11 : i64} {
  func.func @_mha_kernel(%arg0: i32, %arg1: memref<4x8x32xf32, #tpu.memory_space<vmem>>, %arg2: memref<4x8x32xf32, #tpu.memory_space<vmem>>, %arg3: memref<4x8x32xf32, #tpu.memory_space<vmem>>, %arg4: memref<4x8x32xf32, #tpu.memory_space<vmem>>) attributes {dimension_semantics = [#tpu.dimension_semantics<parallel>], iteration_bounds = array<i64: 1>, scalar_prefetch = 0 : i64, scratch_operands = 0 : i64, tpu.core_type = #tpu.core_type<tc>, window_params = [{transform_indices = @transform_0, window_bounds = array<i64: 4, 8, 32>}, {transform_indices = @transform_1, window_bounds = array<i64: 4, 8, 32>}, {transform_indices = @transform_2, window_bounds = array<i64: 4, 8, 32>}, {transform_indices = @transform_3, window_bounds = array<i64: 4, 8, 32>}]} {
    %c0 = arith.constant 0 : index
    %c0_0 = arith.constant 0 : index
    %c0_1 = arith.constant 0 : index
    %0 = vector.load %arg1[%c0, %c0_0, %c0_1] : memref<4x8x32xf32, #tpu.memory_space<vmem>>, vector<4x8x32xf32>
    %c0_2 = arith.constant 0 : index
    %c0_3 = arith.constant 0 : index
    %c0_4 = arith.constant 0 : index
    %1 = vector.load %arg2[%c0_2, %c0_3, %c0_4] : memref<4x8x32xf32, #tpu.memory_space<vmem>>, vector<4x8x32xf32>
    %c0_5 = arith.constant 0 : index
    %c0_6 = arith.constant 0 : index
    %c0_7 = arith.constant 0 : index
    %2 = vector.load %arg3[%c0_5, %c0_6, %c0_7] : memref<4x8x32xf32, #tpu.memory_space<vmem>>, vector<4x8x32xf32>
    %3 = vector.extract_strided_slice %0 {offsets = [0, 0, 0], sizes = [4, 8, 8], strides = [1, 1, 1]} : vector<4x8x32xf32> to vector<4x8x8xf32>
    %4 = arith.truncf %3 : vector<4x8x8xf32> to vector<4x8x8xbf16>
    %5 = vector.extract_strided_slice %1 {offsets = [0, 0, 0], sizes = [4, 8, 8], strides = [1, 1, 1]} : vector<4x8x32xf32> to vector<4x8x8xf32>
    %6 = arith.truncf %5 : vector<4x8x8xf32> to vector<4x8x8xbf16>
    %7 = vector.extract_strided_slice %2 {offsets = [0, 0, 0], sizes = [4, 8, 8], strides = [1, 1, 1]} : vector<4x8x32xf32> to vector<4x8x8xf32>
    %8 = arith.truncf %7 : vector<4x8x8xf32> to vector<4x8x8xbf16>
    "tpu.trace_start"() <{level = 10 : i32, message = "bqd,bkd->bqk"}> : () -> ()
    %cst = arith.constant dense<0.000000e+00> : vector<4x8x8xf32>
    %9 = tpu.matmul %4, %6, %cst {dimension_numbers = #tpu.dot_dimension_numbers<[2], [2], [1], [1], [0, 0, 0, 1, 1, 1], [0], [0]>} : vector<4x8x8xbf16>, vector<4x8x8xbf16>, vector<4x8x8xf32> -> vector<4x8x8xf32>
    "tpu.trace_stop"() : () -> ()
    %cst_8 = arith.constant 0.353553385 : f32
    %10 = vector.broadcast %cst_8 : f32 to vector<4x8x8xf32>
    %11 = arith.mulf %9, %10 : vector<4x8x8xf32>
    %cst_9 = arith.constant dense<0xFF800000> : vector<4x8xf32>
    %12 = vector.multi_reduction <maximumf>, %11, %cst_9 [2] : vector<4x8x8xf32> to vector<4x8xf32>
    %13 = vector.shape_cast %12 : vector<4x8xf32> to vector<4x8x1xf32>
    %14 = vector.broadcast %13 : vector<4x8x1xf32> to vector<4x8x8xf32>
    %15 = arith.subf %11, %14 : vector<4x8x8xf32>
    %16 = math.exp %15 : vector<4x8x8xf32>
    %cst_10 = arith.constant dense<0.000000e+00> : vector<4x8xf32>
    %17 = vector.multi_reduction <add>, %16, %cst_10 [2] : vector<4x8x8xf32> to vector<4x8xf32>
    %18 = vector.shape_cast %17 : vector<4x8xf32> to vector<4x8x1xf32>
    %19 = tpu.reciprocal %18 {approx = true} : vector<4x8x1xf32> -> vector<4x8x1xf32>
    %20 = vector.broadcast %19 : vector<4x8x1xf32> to vector<4x8x8xf32>
    %21 = arith.mulf %16, %20 : vector<4x8x8xf32>
    %22 = arith.truncf %21 : vector<4x8x8xf32> to vector<4x8x8xbf16>
    "tpu.trace_start"() <{level = 10 : i32, message = "bqk,bkd->bqd"}> : () -> ()
    %cst_11 = arith.constant dense<0.000000e+00> : vector<4x8x8xf32>
    %23 = tpu.matmul %22, %8, %cst_11 {dimension_numbers = #tpu.dot_dimension_numbers<[2], [1], [1], [2], [0, 0, 0, 1, 1, 2], [0], [0]>} : vector<4x8x8xbf16>, vector<4x8x8xbf16>, vector<4x8x8xf32> -> vector<4x8x8xf32>
    "tpu.trace_stop"() : () -> ()
    %24 = vector.extract_strided_slice %0 {offsets = [0, 0, 8], sizes = [4, 8, 8], strides = [1, 1, 1]} : vector<4x8x32xf32> to vector<4x8x8xf32>
    %25 = arith.truncf %24 : vector<4x8x8xf32> to vector<4x8x8xbf16>
    %26 = vector.extract_strided_slice %1 {offsets = [0, 0, 8], sizes = [4, 8, 8], strides = [1, 1, 1]} : vector<4x8x32xf32> to vector<4x8x8xf32>
    %27 = arith.truncf %26 : vector<4x8x8xf32> to vector<4x8x8xbf16>
    %28 = vector.extract_strided_slice %2 {offsets = [0, 0, 8], sizes = [4, 8, 8], strides = [1, 1, 1]} : vector<4x8x32xf32> to vector<4x8x8xf32>
    %29 = arith.truncf %28 : vector<4x8x8xf32> to vector<4x8x8xbf16>
    "tpu.trace_start"() <{level = 10 : i32, message = "bqd,bkd->bqk"}> : () -> ()
    %cst_12 = arith.constant dense<0.000000e+00> : vector<4x8x8xf32>
    %30 = tpu.matmul %25, %27, %cst_12 {dimension_numbers = #tpu.dot_dimension_numbers<[2], [2], [1], [1], [0, 0, 0, 1, 1, 1], [0], [0]>} : vector<4x8x8xbf16>, vector<4x8x8xbf16>, vector<4x8x8xf32> -> vector<4x8x8xf32>
    "tpu.trace_stop"() : () -> ()
    %cst_13 = arith.constant 0.353553385 : f32
    %31 = vector.broadcast %cst_13 : f32 to vector<4x8x8xf32>
    %32 = arith.mulf %30, %31 : vector<4x8x8xf32>
    %cst_14 = arith.constant dense<0xFF800000> : vector<4x8xf32>
    %33 = vector.multi_reduction <maximumf>, %32, %cst_14 [2] : vector<4x8x8xf32> to vector<4x8xf32>
    %34 = vector.shape_cast %33 : vector<4x8xf32> to vector<4x8x1xf32>
    %35 = vector.broadcast %34 : vector<4x8x1xf32> to vector<4x8x8xf32>
    %36 = arith.subf %32, %35 : vector<4x8x8xf32>
    %37 = math.exp %36 : vector<4x8x8xf32>
    %cst_15 = arith.constant dense<0.000000e+00> : vector<4x8xf32>
    %38 = vector.multi_reduction <add>, %37, %cst_15 [2] : vector<4x8x8xf32> to vector<4x8xf32>
    %39 = vector.shape_cast %38 : vector<4x8xf32> to vector<4x8x1xf32>
    %40 = tpu.reciprocal %39 {approx = true} : vector<4x8x1xf32> -> vector<4x8x1xf32>
    %41 = vector.broadcast %40 : vector<4x8x1xf32> to vector<4x8x8xf32>
    %42 = arith.mulf %37, %41 : vector<4x8x8xf32>
    %43 = arith.truncf %42 : vector<4x8x8xf32> to vector<4x8x8xbf16>
    "tpu.trace_start"() <{level = 10 : i32, message = "bqk,bkd->bqd"}> : () -> ()
    %cst_16 = arith.constant dense<0.000000e+00> : vector<4x8x8xf32>
    %44 = tpu.matmul %43, %29, %cst_16 {dimension_numbers = #tpu.dot_dimension_numbers<[2], [1], [1], [2], [0, 0, 0, 1, 1, 2], [0], [0]>} : vector<4x8x8xbf16>, vector<4x8x8xbf16>, vector<4x8x8xf32> -> vector<4x8x8xf32>
    "tpu.trace_stop"() : () -> ()
    %45 = vector.extract_strided_slice %0 {offsets = [0, 0, 16], sizes = [4, 8, 8], strides = [1, 1, 1]} : vector<4x8x32xf32> to vector<4x8x8xf32>
    %46 = arith.truncf %45 : vector<4x8x8xf32> to vector<4x8x8xbf16>
    %47 = vector.extract_strided_slice %1 {offsets = [0, 0, 16], sizes = [4, 8, 8], strides = [1, 1, 1]} : vector<4x8x32xf32> to vector<4x8x8xf32>
    %48 = arith.truncf %47 : vector<4x8x8xf32> to vector<4x8x8xbf16>
    %49 = vector.extract_strided_slice %2 {offsets = [0, 0, 16], sizes = [4, 8, 8], strides = [1, 1, 1]} : vector<4x8x32xf32> to vector<4x8x8xf32>
    %50 = arith.truncf %49 : vector<4x8x8xf32> to vector<4x8x8xbf16>
    "tpu.trace_start"() <{level = 10 : i32, message = "bqd,bkd->bqk"}> : () -> ()
    %cst_17 = arith.constant dense<0.000000e+00> : vector<4x8x8xf32>
    %51 = tpu.matmul %46, %48, %cst_17 {dimension_numbers = #tpu.dot_dimension_numbers<[2], [2], [1], [1], [0, 0, 0, 1, 1, 1], [0], [0]>} : vector<4x8x8xbf16>, vector<4x8x8xbf16>, vector<4x8x8xf32> -> vector<4x8x8xf32>
    "tpu.trace_stop"() : () -> ()
    %cst_18 = arith.constant 0.353553385 : f32
    %52 = vector.broadcast %cst_18 : f32 to vector<4x8x8xf32>
    %53 = arith.mulf %51, %52 : vector<4x8x8xf32>
    %cst_19 = arith.constant dense<0xFF800000> : vector<4x8xf32>
    %54 = vector.multi_reduction <maximumf>, %53, %cst_19 [2] : vector<4x8x8xf32> to vector<4x8xf32>
    %55 = vector.shape_cast %54 : vector<4x8xf32> to vector<4x8x1xf32>
    %56 = vector.broadcast %55 : vector<4x8x1xf32> to vector<4x8x8xf32>
    %57 = arith.subf %53, %56 : vector<4x8x8xf32>
    %58 = math.exp %57 : vector<4x8x8xf32>
    %cst_20 = arith.constant dense<0.000000e+00> : vector<4x8xf32>
    %59 = vector.multi_reduction <add>, %58, %cst_20 [2] : vector<4x8x8xf32> to vector<4x8xf32>
    %60 = vector.shape_cast %59 : vector<4x8xf32> to vector<4x8x1xf32>
    %61 = tpu.reciprocal %60 {approx = true} : vector<4x8x1xf32> -> vector<4x8x1xf32>
    %62 = vector.broadcast %61 : vector<4x8x1xf32> to vector<4x8x8xf32>
    %63 = arith.mulf %58, %62 : vector<4x8x8xf32>
    %64 = arith.truncf %63 : vector<4x8x8xf32> to vector<4x8x8xbf16>
    "tpu.trace_start"() <{level = 10 : i32, message = "bqk,bkd->bqd"}> : () -> ()
    %cst_21 = arith.constant dense<0.000000e+00> : vector<4x8x8xf32>
    %65 = tpu.matmul %64, %50, %cst_21 {dimension_numbers = #tpu.dot_dimension_numbers<[2], [1], [1], [2], [0, 0, 0, 1, 1, 2], [0], [0]>} : vector<4x8x8xbf16>, vector<4x8x8xbf16>, vector<4x8x8xf32> -> vector<4x8x8xf32>
    "tpu.trace_stop"() : () -> ()
    %66 = vector.extract_strided_slice %0 {offsets = [0, 0, 24], sizes = [4, 8, 8], strides = [1, 1, 1]} : vector<4x8x32xf32> to vector<4x8x8xf32>
    %67 = arith.truncf %66 : vector<4x8x8xf32> to vector<4x8x8xbf16>
    %68 = vector.extract_strided_slice %1 {offsets = [0, 0, 24], sizes = [4, 8, 8], strides = [1, 1, 1]} : vector<4x8x32xf32> to vector<4x8x8xf32>
    %69 = arith.truncf %68 : vector<4x8x8xf32> to vector<4x8x8xbf16>
    %70 = vector.extract_strided_slice %2 {offsets = [0, 0, 24], sizes = [4, 8, 8], strides = [1, 1, 1]} : vector<4x8x32xf32> to vector<4x8x8xf32>
    %71 = arith.truncf %70 : vector<4x8x8xf32> to vector<4x8x8xbf16>
    "tpu.trace_start"() <{level = 10 : i32, message = "bqd,bkd->bqk"}> : () -> ()
    %cst_22 = arith.constant dense<0.000000e+00> : vector<4x8x8xf32>
    %72 = tpu.matmul %67, %69, %cst_22 {dimension_numbers = #tpu.dot_dimension_numbers<[2], [2], [1], [1], [0, 0, 0, 1, 1, 1], [0], [0]>} : vector<4x8x8xbf16>, vector<4x8x8xbf16>, vector<4x8x8xf32> -> vector<4x8x8xf32>
    "tpu.trace_stop"() : () -> ()
    %cst_23 = arith.constant 0.353553385 : f32
    %73 = vector.broadcast %cst_23 : f32 to vector<4x8x8xf32>
    %74 = arith.mulf %72, %73 : vector<4x8x8xf32>
    %cst_24 = arith.constant dense<0xFF800000> : vector<4x8xf32>
    %75 = vector.multi_reduction <maximumf>, %74, %cst_24 [2] : vector<4x8x8xf32> to vector<4x8xf32>
    %76 = vector.shape_cast %75 : vector<4x8xf32> to vector<4x8x1xf32>
    %77 = vector.broadcast %76 : vector<4x8x1xf32> to vector<4x8x8xf32>
    %78 = arith.subf %74, %77 : vector<4x8x8xf32>
    %79 = math.exp %78 : vector<4x8x8xf32>
    %cst_25 = arith.constant dense<0.000000e+00> : vector<4x8xf32>
    %80 = vector.multi_reduction <add>, %79, %cst_25 [2] : vector<4x8x8xf32> to vector<4x8xf32>
    %81 = vector.shape_cast %80 : vector<4x8xf32> to vector<4x8x1xf32>
    %82 = tpu.reciprocal %81 {approx = true} : vector<4x8x1xf32> -> vector<4x8x1xf32>
    %83 = vector.broadcast %82 : vector<4x8x1xf32> to vector<4x8x8xf32>
    %84 = arith.mulf %79, %83 : vector<4x8x8xf32>
    %85 = arith.truncf %84 : vector<4x8x8xf32> to vector<4x8x8xbf16>
    "tpu.trace_start"() <{level = 10 : i32, message = "bqk,bkd->bqd"}> : () -> ()
    %cst_26 = arith.constant dense<0.000000e+00> : vector<4x8x8xf32>
    %86 = tpu.matmul %85, %71, %cst_26 {dimension_numbers = #tpu.dot_dimension_numbers<[2], [1], [1], [2], [0, 0, 0, 1, 1, 2], [0], [0]>} : vector<4x8x8xbf16>, vector<4x8x8xbf16>, vector<4x8x8xf32> -> vector<4x8x8xf32>
    "tpu.trace_stop"() : () -> ()
    %87 = tpu.concatenate %23, %44, %65, %86 in 2 : vector<4x8x8xf32>, vector<4x8x8xf32>, vector<4x8x8xf32>, vector<4x8x8xf32> -> vector<4x8x32xf32>
    %c0_27 = arith.constant 0 : index
    %c0_28 = arith.constant 0 : index
    %c0_29 = arith.constant 0 : index
    %88 = vector.load %arg4[%c0_27, %c0_28, %c0_29] : memref<4x8x32xf32, #tpu.memory_space<vmem>>, vector<4x8x32xf32>
    tpu.vector_store %arg4[%c0_27, %c0_28, %c0_29], %87 {strides = array<i32>} : memref<4x8x32xf32, #tpu.memory_space<vmem>>, vector<4x8x32xf32>,
    return
  }
  func.func @transform_0(%arg0: i32) -> (i32, i32, i32) {
    %c0_i32 = arith.constant 0 : i32
    %c0_i32_0 = arith.constant 0 : i32
    %c0_i32_1 = arith.constant 0 : i32
    return %arg0, %c0_i32, %c0_i32_0 : i32, i32, i32
  }
  func.func @transform_1(%arg0: i32) -> (i32, i32, i32) {
    %c0_i32 = arith.constant 0 : i32
    %c0_i32_0 = arith.constant 0 : i32
    %c0_i32_1 = arith.constant 0 : i32
    return %arg0, %c0_i32, %c0_i32_0 : i32, i32, i32
  }
  func.func @transform_2(%arg0: i32) -> (i32, i32, i32) {
    %c0_i32 = arith.constant 0 : i32
    %c0_i32_0 = arith.constant 0 : i32
    %c0_i32_1 = arith.constant 0 : i32
    return %arg0, %c0_i32, %c0_i32_0 : i32, i32, i32
  }
  func.func @transform_3(%arg0: i32) -> (i32, i32, i32) {
    %c0_i32 = arith.constant 0 : i32
    %c0_i32_0 = arith.constant 0 : i32
    %c0_i32_1 = arith.constant 0 : i32
    return %arg0, %c0_i32, %c0_i32_0 : i32, i32, i32
  }
}

module attributes {stable_mosaic.version = 11 : i64} {
  func.func @_matmul_resid_kernel(%arg0: i32, %arg1: i32, %arg2: i32, %arg3: memref<32x32xf32, #tpu.memory_space<vmem>>, %arg4: memref<32x32xbf16, #tpu.memory_space<vmem>>, %arg5: memref<1x32xf32, #tpu.memory_space<vmem>>, %arg6: memref<32x32xf32, #tpu.memory_space<vmem>>, %arg7: memref<32x32xf32, #tpu.memory_space<vmem>>, %arg8: memref<32x32xf32, #tpu.memory_space<vmem>>) attributes {dimension_semantics = [#tpu.dimension_semantics<parallel>, #tpu.dimension_semantics<parallel>, #tpu.dimension_semantics<arbitrary>], iteration_bounds = array<i64: 1, 1, 1>, scalar_prefetch = 0 : i64, scratch_operands = 1 : i64, tpu.core_type = #tpu.core_type<tc>, window_params = [{transform_indices = @transform_0, window_bounds = array<i64: 32, 32>}, {transform_indices = @transform_1, window_bounds = array<i64: 32, 32>}, {transform_indices = @transform_2, window_bounds = array<i64: 1, 32>}, {transform_indices = @transform_3, window_bounds = array<i64: 32, 32>}, {transform_indices = @transform_4, window_bounds = array<i64: 32, 32>}]} {
    %c0_i32 = arith.constant 0 : i32
    %0 = arith.cmpi eq, %arg2, %c0_i32 : i32
    %1 = arith.extui %0 : i1 to i32
    %c0_i32_0 = arith.constant 0 : i32
    %2 = arith.cmpi ne, %1, %c0_i32_0 : i32
    scf.if %2 {
      %cst_10 = arith.constant 0.000000e+00 : f32
      %13 = vector.broadcast %cst_10 : f32 to vector<32x32xf32>
      %c0_11 = arith.constant 0 : index
      %c0_12 = arith.constant 0 : index
      %14 = vector.load %arg8[%c0_11, %c0_12] : memref<32x32xf32, #tpu.memory_space<vmem>>, vector<32x32xf32>
      tpu.vector_store %arg8[%c0_11, %c0_12], %13 {strides = array<i32>} : memref<32x32xf32, #tpu.memory_space<vmem>>, vector<32x32xf32>,
    } else {
    }
    %c0 = arith.constant 0 : index
    %c0_1 = arith.constant 0 : index
    %3 = vector.load %arg8[%c0, %c0_1] : memref<32x32xf32, #tpu.memory_space<vmem>>, vector<32x32xf32>
    %c0_2 = arith.constant 0 : index
    %c0_3 = arith.constant 0 : index
    %4 = vector.load %arg3[%c0_2, %c0_3] : memref<32x32xf32, #tpu.memory_space<vmem>>, vector<32x32xf32>
    %5 = arith.truncf %4 : vector<32x32xf32> to vector<32x32xbf16>
    %c0_4 = arith.constant 0 : index
    %c0_5 = arith.constant 0 : index
    %6 = vector.load %arg4[%c0_4, %c0_5] : memref<32x32xbf16, #tpu.memory_space<vmem>>, vector<32x32xbf16>
    %cst = arith.constant dense<0.000000e+00> : vector<32x32xf32>
    %7 = tpu.matmul %5, %6, %cst {dimension_numbers = #tpu.dot_dimension_numbers<[1], [0], [0], [1], [0, 0, 1, 1], [], []>} : vector<32x32xbf16>, vector<32x32xbf16>, vector<32x32xf32> -> vector<32x32xf32>
    %8 = arith.addf %3, %7 : vector<32x32xf32>
    %c0_6 = arith.constant 0 : index
    %c0_7 = arith.constant 0 : index
    %9 = vector.load %arg8[%c0_6, %c0_7] : memref<32x32xf32, #tpu.memory_space<vmem>>, vector<32x32xf32>
    tpu.vector_store %arg8[%c0_6, %c0_7], %8 {strides = array<i32>} : memref<32x32xf32, #tpu.memory_space<vmem>>, vector<32x32xf32>,
    %c0_i32_8 = arith.constant 0 : i32
    %10 = arith.cmpi eq, %arg2, %c0_i32_8 : i32
    %11 = arith.extui %10 : i1 to i32
    %c0_i32_9 = arith.constant 0 : i32
    %12 = arith.cmpi ne, %11, %c0_i32_9 : i32
    scf.if %12 {
      %c0_10 = arith.constant 0 : index
      %c0_11 = arith.constant 0 : index
      %13 = vector.load %arg8[%c0_10, %c0_11] : memref<32x32xf32, #tpu.memory_space<vmem>>, vector<32x32xf32>
      %c0_12 = arith.constant 0 : index
      %c0_13 = arith.constant 0 : index
      %14 = vector.load %arg5[%c0_12, %c0_13] : memref<1x32xf32, #tpu.memory_space<vmem>>, vector<1x32xf32>
      %15 = vector.broadcast %14 : vector<1x32xf32> to vector<32x32xf32>
      %16 = arith.addf %13, %15 : vector<32x32xf32>
      %c0_14 = arith.constant 0 : index
      %c0_15 = arith.constant 0 : index
      %17 = vector.load %arg6[%c0_14, %c0_15] : memref<32x32xf32, #tpu.memory_space<vmem>>, vector<32x32xf32>
      %18 = arith.addf %16, %17 : vector<32x32xf32>
      %c0_16 = arith.constant 0 : index
      %c0_17 = arith.constant 0 : index
      %19 = vector.load %arg7[%c0_16, %c0_17] : memref<32x32xf32, #tpu.memory_space<vmem>>, vector<32x32xf32>
      tpu.vector_store %arg7[%c0_16, %c0_17], %18 {strides = array<i32>} : memref<32x32xf32, #tpu.memory_space<vmem>>, vector<32x32xf32>,
    } else {
    }
    return
  }
  func.func @transform_0(%arg0: i32, %arg1: i32, %arg2: i32) -> (i32, i32) {
    %c0_i32 = arith.constant 0 : i32
    return %arg0, %arg2 : i32, i32
  }
  func.func @transform_1(%arg0: i32, %arg1: i32, %arg2: i32) -> (i32, i32) {
    %c0_i32 = arith.constant 0 : i32
    return %arg2, %arg1 : i32, i32
  }
  func.func @transform_2(%arg0: i32, %arg1: i32, %arg2: i32) -> (i32, i32) {
    %c0_i32 = arith.constant 0 : i32
    %c0_i32_0 = arith.constant 0 : i32
    return %c0_i32, %arg1 : i32, i32
  }
  func.func @transform_3(%arg0: i32, %arg1: i32, %arg2: i32) -> (i32, i32) {
    %c0_i32 = arith.constant 0 : i32
    return %arg0, %arg1 : i32, i32
  }
  func.func @transform_4(%arg0: i32, %arg1: i32, %arg2: i32) -> (i32, i32) {
    %c0_i32 = arith.constant 0 : i32
    return %arg0, %arg1 : i32, i32
  }
}

module attributes {stable_mosaic.version = 11 : i64} {
  func.func @_ln_matmul_kernel(%arg0: i32, %arg1: i32, %arg2: memref<32x32xf32, #tpu.memory_space<vmem>>, %arg3: memref<1x32xf32, #tpu.memory_space<vmem>>, %arg4: memref<1x32xf32, #tpu.memory_space<vmem>>, %arg5: memref<32x128xbf16, #tpu.memory_space<vmem>>, %arg6: memref<1x128xf32, #tpu.memory_space<vmem>>, %arg7: memref<32x128xf32, #tpu.memory_space<vmem>>) attributes {dimension_semantics = [#tpu.dimension_semantics<parallel>, #tpu.dimension_semantics<parallel>], iteration_bounds = array<i64: 1, 1>, scalar_prefetch = 0 : i64, scratch_operands = 0 : i64, tpu.core_type = #tpu.core_type<tc>, window_params = [{transform_indices = @transform_0, window_bounds = array<i64: 32, 32>}, {pipeline_mode = #tpu.pipeline_mode<synchronous>, transform_indices = @transform_1, window_bounds = array<i64: 1, 32>}, {pipeline_mode = #tpu.pipeline_mode<synchronous>, transform_indices = @transform_2, window_bounds = array<i64: 1, 32>}, {transform_indices = @transform_3, window_bounds = array<i64: 32, 128>}, {transform_indices = @transform_4, window_bounds = array<i64: 1, 128>}, {transform_indices = @transform_5, window_bounds = array<i64: 32, 128>}]} {
    %c0 = arith.constant 0 : index
    %c0_0 = arith.constant 0 : index
    %0 = vector.load %arg2[%c0, %c0_0] : memref<32x32xf32, #tpu.memory_space<vmem>>, vector<32x32xf32>
    %cst = arith.constant dense<0.000000e+00> : vector<32xf32>
    %1 = vector.multi_reduction <add>, %0, %cst [1] : vector<32x32xf32> to vector<32xf32>
    %2 = vector.shape_cast %1 : vector<32xf32> to vector<32x1xf32>
    %cst_1 = arith.constant 3.200000e+01 : f32
    %3 = vector.broadcast %cst_1 : f32 to vector<32x1xf32>
    %4 = arith.divf %2, %3 : vector<32x1xf32>
    %5 = vector.broadcast %4 : vector<32x1xf32> to vector<32x32xf32>
    %6 = arith.subf %0, %5 : vector<32x32xf32>
    %7 = arith.mulf %6, %6 : vector<32x32xf32>
    %cst_2 = arith.constant dense<0.000000e+00> : vector<32xf32>
    %8 = vector.multi_reduction <add>, %7, %cst_2 [1] : vector<32x32xf32> to vector<32xf32>
    %9 = vector.shape_cast %8 : vector<32xf32> to vector<32x1xf32>
    %cst_3 = arith.constant 3.200000e+01 : f32
    %10 = vector.broadcast %cst_3 : f32 to vector<32x1xf32>
    %11 = arith.divf %9, %10 : vector<32x1xf32>
    %12 = vector.broadcast %4 : vector<32x1xf32> to vector<32x32xf32>
    %13 = arith.subf %0, %12 : vector<32x32xf32>
    %cst_4 = arith.constant 9.99999974E-6 : f32
    %14 = vector.broadcast %cst_4 : f32 to vector<32x1xf32>
    %15 = arith.addf %11, %14 : vector<32x1xf32>
    %16 = math.rsqrt %15 : vector<32x1xf32>
    %17 = vector.broadcast %16 : vector<32x1xf32> to vector<32x32xf32>
    %18 = arith.mulf %13, %17 : vector<32x32xf32>
    %c0_5 = arith.constant 0 : index
    %c0_6 = arith.constant 0 : index
    %19 = vector.load %arg3[%c0_5, %c0_6] : memref<1x32xf32, #tpu.memory_space<vmem>>, vector<1x32xf32>
    %20 = vector.broadcast %19 : vector<1x32xf32> to vector<32x32xf32>
    %21 = arith.mulf %18, %20 : vector<32x32xf32>
    %c0_7 = arith.constant 0 : index
    %c0_8 = arith.constant 0 : index
    %22 = vector.load %arg4[%c0_7, %c0_8] : memref<1x32xf32, #tpu.memory_space<vmem>>, vector<1x32xf32>
    %23 = vector.broadcast %22 : vector<1x32xf32> to vector<32x32xf32>
    %24 = arith.addf %21, %23 : vector<32x32xf32>
    %25 = arith.truncf %24 : vector<32x32xf32> to vector<32x32xbf16>
    %c0_9 = arith.constant 0 : index
    %c0_10 = arith.constant 0 : index
    %26 = vector.load %arg5[%c0_9, %c0_10] : memref<32x128xbf16, #tpu.memory_space<vmem>>, vector<32x128xbf16>
    %cst_11 = arith.constant dense<0.000000e+00> : vector<32x128xf32>
    %27 = tpu.matmul %25, %26, %cst_11 {dimension_numbers = #tpu.dot_dimension_numbers<[1], [0], [0], [1], [0, 0, 1, 1], [], []>} : vector<32x32xbf16>, vector<32x128xbf16>, vector<32x128xf32> -> vector<32x128xf32>
    %c0_12 = arith.constant 0 : index
    %c0_13 = arith.constant 0 : index
    %28 = vector.load %arg6[%c0_12, %c0_13] : memref<1x128xf32, #tpu.memory_space<vmem>>, vector<1x128xf32>
    %29 = vector.broadcast %28 : vector<1x128xf32> to vector<32x128xf32>
    %30 = arith.addf %27, %29 : vector<32x128xf32>
    %cst_14 = arith.constant 5.000000e-01 : f32
    %31 = vector.broadcast %cst_14 : f32 to vector<32x128xf32>
    %32 = arith.mulf %31, %30 : vector<32x128xf32>
    %cst_15 = arith.constant 4.471500e-02 : f32
    %33 = vector.broadcast %cst_15 : f32 to vector<32x128xf32>
    %34 = arith.mulf %33, %30 : vector<32x128xf32>
    %35 = arith.mulf %34, %30 : vector<32x128xf32>
    %36 = arith.mulf %35, %30 : vector<32x128xf32>
    %37 = arith.addf %30, %36 : vector<32x128xf32>
    %cst_16 = arith.constant 0.797884583 : f32
    %38 = vector.broadcast %cst_16 : f32 to vector<32x128xf32>
    %39 = arith.mulf %38, %37 : vector<32x128xf32>
    %40 = math.tanh %39 : vector<32x128xf32>
    %cst_17 = arith.constant 1.000000e+00 : f32
    %41 = vector.broadcast %cst_17 : f32 to vector<32x128xf32>
    %42 = arith.addf %41, %40 : vector<32x128xf32>
    %43 = arith.mulf %32, %42 : vector<32x128xf32>
    %c0_18 = arith.constant 0 : index
    %c0_19 = arith.constant 0 : index
    %44 = vector.load %arg7[%c0_18, %c0_19] : memref<32x128xf32, #tpu.memory_space<vmem>>, vector<32x128xf32>
    tpu.vector_store %arg7[%c0_18, %c0_19], %43 {strides = array<i32>} : memref<32x128xf32, #tpu.memory_space<vmem>>, vector<32x128xf32>,
    return
  }
  func.func @transform_0(%arg0: i32, %arg1: i32) -> (i32, i32) {
    %c0_i32 = arith.constant 0 : i32
    %c0_i32_0 = arith.constant 0 : i32
    return %arg0, %c0_i32 : i32, i32
  }
  func.func @transform_1(%arg0: i32, %arg1: i32) -> (i32, i32) {
    %c0_i32 = arith.constant 0 : i32
    %c0_i32_0 = arith.constant 0 : i32
    %c0_i32_1 = arith.constant 0 : i32
    return %c0_i32, %c0_i32_0 : i32, i32
  }
  func.func @transform_2(%arg0: i32, %arg1: i32) -> (i32, i32) {
    %c0_i32 = arith.constant 0 : i32
    %c0_i32_0 = arith.constant 0 : i32
    %c0_i32_1 = arith.constant 0 : i32
    return %c0_i32, %c0_i32_0 : i32, i32
  }
  func.func @transform_3(%arg0: i32, %arg1: i32) -> (i32, i32) {
    %c0_i32 = arith.constant 0 : i32
    %c0_i32_0 = arith.constant 0 : i32
    return %c0_i32, %arg1 : i32, i32
  }
  func.func @transform_4(%arg0: i32, %arg1: i32) -> (i32, i32) {
    %c0_i32 = arith.constant 0 : i32
    %c0_i32_0 = arith.constant 0 : i32
    return %c0_i32, %arg1 : i32, i32
  }
  func.func @transform_5(%arg0: i32, %arg1: i32) -> (i32, i32) {
    %c0_i32 = arith.constant 0 : i32
    return %arg0, %arg1 : i32, i32
  }
}

module attributes {stable_mosaic.version = 11 : i64} {
  func.func @_matmul_resid_kernel(%arg0: i32, %arg1: i32, %arg2: i32, %arg3: memref<32x128xf32, #tpu.memory_space<vmem>>, %arg4: memref<128x32xbf16, #tpu.memory_space<vmem>>, %arg5: memref<1x32xf32, #tpu.memory_space<vmem>>, %arg6: memref<32x32xf32, #tpu.memory_space<vmem>>, %arg7: memref<32x32xf32, #tpu.memory_space<vmem>>, %arg8: memref<32x32xf32, #tpu.memory_space<vmem>>) attributes {dimension_semantics = [#tpu.dimension_semantics<parallel>, #tpu.dimension_semantics<parallel>, #tpu.dimension_semantics<arbitrary>], iteration_bounds = array<i64: 1, 1, 1>, scalar_prefetch = 0 : i64, scratch_operands = 1 : i64, tpu.core_type = #tpu.core_type<tc>, window_params = [{transform_indices = @transform_0, window_bounds = array<i64: 32, 128>}, {transform_indices = @transform_1, window_bounds = array<i64: 128, 32>}, {transform_indices = @transform_2, window_bounds = array<i64: 1, 32>}, {transform_indices = @transform_3, window_bounds = array<i64: 32, 32>}, {transform_indices = @transform_4, window_bounds = array<i64: 32, 32>}]} {
    %c0_i32 = arith.constant 0 : i32
    %0 = arith.cmpi eq, %arg2, %c0_i32 : i32
    %1 = arith.extui %0 : i1 to i32
    %c0_i32_0 = arith.constant 0 : i32
    %2 = arith.cmpi ne, %1, %c0_i32_0 : i32
    scf.if %2 {
      %cst_10 = arith.constant 0.000000e+00 : f32
      %13 = vector.broadcast %cst_10 : f32 to vector<32x32xf32>
      %c0_11 = arith.constant 0 : index
      %c0_12 = arith.constant 0 : index
      %14 = vector.load %arg8[%c0_11, %c0_12] : memref<32x32xf32, #tpu.memory_space<vmem>>, vector<32x32xf32>
      tpu.vector_store %arg8[%c0_11, %c0_12], %13 {strides = array<i32>} : memref<32x32xf32, #tpu.memory_space<vmem>>, vector<32x32xf32>,
    } else {
    }
    %c0 = arith.constant 0 : index
    %c0_1 = arith.constant 0 : index
    %3 = vector.load %arg8[%c0, %c0_1] : memref<32x32xf32, #tpu.memory_space<vmem>>, vector<32x32xf32>
    %c0_2 = arith.constant 0 : index
    %c0_3 = arith.constant 0 : index
    %4 = vector.load %arg3[%c0_2, %c0_3] : memref<32x128xf32, #tpu.memory_space<vmem>>, vector<32x128xf32>
    %5 = arith.truncf %4 : vector<32x128xf32> to vector<32x128xbf16>
    %c0_4 = arith.constant 0 : index
    %c0_5 = arith.constant 0 : index
    %6 = vector.load %arg4[%c0_4, %c0_5] : memref<128x32xbf16, #tpu.memory_space<vmem>>, vector<128x32xbf16>
    %cst = arith.constant dense<0.000000e+00> : vector<32x32xf32>
    %7 = tpu.matmul %5, %6, %cst {dimension_numbers = #tpu.dot_dimension_numbers<[1], [0], [0], [1], [0, 0, 1, 1], [], []>} : vector<32x128xbf16>, vector<128x32xbf16>, vector<32x32xf32> -> vector<32x32xf32>
    %8 = arith.addf %3, %7 : vector<32x32xf32>
    %c0_6 = arith.constant 0 : index
    %c0_7 = arith.constant 0 : index
    %9 = vector.load %arg8[%c0_6, %c0_7] : memref<32x32xf32, #tpu.memory_space<vmem>>, vector<32x32xf32>
    tpu.vector_store %arg8[%c0_6, %c0_7], %8 {strides = array<i32>} : memref<32x32xf32, #tpu.memory_space<vmem>>, vector<32x32xf32>,
    %c0_i32_8 = arith.constant 0 : i32
    %10 = arith.cmpi eq, %arg2, %c0_i32_8 : i32
    %11 = arith.extui %10 : i1 to i32
    %c0_i32_9 = arith.constant 0 : i32
    %12 = arith.cmpi ne, %11, %c0_i32_9 : i32
    scf.if %12 {
      %c0_10 = arith.constant 0 : index
      %c0_11 = arith.constant 0 : index
      %13 = vector.load %arg8[%c0_10, %c0_11] : memref<32x32xf32, #tpu.memory_space<vmem>>, vector<32x32xf32>
      %c0_12 = arith.constant 0 : index
      %c0_13 = arith.constant 0 : index
      %14 = vector.load %arg5[%c0_12, %c0_13] : memref<1x32xf32, #tpu.memory_space<vmem>>, vector<1x32xf32>
      %15 = vector.broadcast %14 : vector<1x32xf32> to vector<32x32xf32>
      %16 = arith.addf %13, %15 : vector<32x32xf32>
      %c0_14 = arith.constant 0 : index
      %c0_15 = arith.constant 0 : index
      %17 = vector.load %arg6[%c0_14, %c0_15] : memref<32x32xf32, #tpu.memory_space<vmem>>, vector<32x32xf32>
      %18 = arith.addf %16, %17 : vector<32x32xf32>
      %c0_16 = arith.constant 0 : index
      %c0_17 = arith.constant 0 : index
      %19 = vector.load %arg7[%c0_16, %c0_17] : memref<32x32xf32, #tpu.memory_space<vmem>>, vector<32x32xf32>
      tpu.vector_store %arg7[%c0_16, %c0_17], %18 {strides = array<i32>} : memref<32x32xf32, #tpu.memory_space<vmem>>, vector<32x32xf32>,
    } else {
    }
    return
  }
  func.func @transform_0(%arg0: i32, %arg1: i32, %arg2: i32) -> (i32, i32) {
    %c0_i32 = arith.constant 0 : i32
    return %arg0, %arg2 : i32, i32
  }
  func.func @transform_1(%arg0: i32, %arg1: i32, %arg2: i32) -> (i32, i32) {
    %c0_i32 = arith.constant 0 : i32
    return %arg2, %arg1 : i32, i32
  }
  func.func @transform_2(%arg0: i32, %arg1: i32, %arg2: i32) -> (i32, i32) {
    %c0_i32 = arith.constant 0 : i32
    %c0_i32_0 = arith.constant 0 : i32
    return %c0_i32, %arg1 : i32, i32
  }
  func.func @transform_3(%arg0: i32, %arg1: i32, %arg2: i32) -> (i32, i32) {
    %c0_i32 = arith.constant 0 : i32
    return %arg0, %arg1 : i32, i32
  }
  func.func @transform_4(%arg0: i32, %arg1: i32, %arg2: i32) -> (i32, i32) {
    %c0_i32 = arith.constant 0 : i32
    return %arg0, %arg1 : i32, i32
  }
}

module attributes {stable_mosaic.version = 11 : i64} {
  func.func @_layernorm_kernel(%arg0: i32, %arg1: memref<32x32xf32, #tpu.memory_space<vmem>>, %arg2: memref<1x32xf32, #tpu.memory_space<vmem>>, %arg3: memref<1x32xf32, #tpu.memory_space<vmem>>, %arg4: memref<32x32xf32, #tpu.memory_space<vmem>>) attributes {dimension_semantics = [#tpu.dimension_semantics<parallel>], iteration_bounds = array<i64: 1>, scalar_prefetch = 0 : i64, scratch_operands = 0 : i64, tpu.core_type = #tpu.core_type<tc>, window_params = [{transform_indices = @transform_0, window_bounds = array<i64: 32, 32>}, {pipeline_mode = #tpu.pipeline_mode<synchronous>, transform_indices = @transform_1, window_bounds = array<i64: 1, 32>}, {pipeline_mode = #tpu.pipeline_mode<synchronous>, transform_indices = @transform_2, window_bounds = array<i64: 1, 32>}, {transform_indices = @transform_3, window_bounds = array<i64: 32, 32>}]} {
    %c0 = arith.constant 0 : index
    %c0_0 = arith.constant 0 : index
    %0 = vector.load %arg1[%c0, %c0_0] : memref<32x32xf32, #tpu.memory_space<vmem>>, vector<32x32xf32>
    %cst = arith.constant dense<0.000000e+00> : vector<32xf32>
    %1 = vector.multi_reduction <add>, %0, %cst [1] : vector<32x32xf32> to vector<32xf32>
    %2 = vector.shape_cast %1 : vector<32xf32> to vector<32x1xf32>
    %cst_1 = arith.constant 3.200000e+01 : f32
    %3 = vector.broadcast %cst_1 : f32 to vector<32x1xf32>
    %4 = arith.divf %2, %3 : vector<32x1xf32>
    %5 = vector.broadcast %4 : vector<32x1xf32> to vector<32x32xf32>
    %6 = arith.subf %0, %5 : vector<32x32xf32>
    %7 = arith.mulf %6, %6 : vector<32x32xf32>
    %cst_2 = arith.constant dense<0.000000e+00> : vector<32xf32>
    %8 = vector.multi_reduction <add>, %7, %cst_2 [1] : vector<32x32xf32> to vector<32xf32>
    %9 = vector.shape_cast %8 : vector<32xf32> to vector<32x1xf32>
    %cst_3 = arith.constant 3.200000e+01 : f32
    %10 = vector.broadcast %cst_3 : f32 to vector<32x1xf32>
    %11 = arith.divf %9, %10 : vector<32x1xf32>
    %12 = vector.broadcast %4 : vector<32x1xf32> to vector<32x32xf32>
    %13 = arith.subf %0, %12 : vector<32x32xf32>
    %cst_4 = arith.constant 9.99999974E-6 : f32
    %14 = vector.broadcast %cst_4 : f32 to vector<32x1xf32>
    %15 = arith.addf %11, %14 : vector<32x1xf32>
    %16 = math.rsqrt %15 : vector<32x1xf32>
    %17 = vector.broadcast %16 : vector<32x1xf32> to vector<32x32xf32>
    %18 = arith.mulf %13, %17 : vector<32x32xf32>
    %c0_5 = arith.constant 0 : index
    %c0_6 = arith.constant 0 : index
    %19 = vector.load %arg2[%c0_5, %c0_6] : memref<1x32xf32, #tpu.memory_space<vmem>>, vector<1x32xf32>
    %20 = vector.broadcast %19 : vector<1x32xf32> to vector<32x32xf32>
    %21 = arith.mulf %18, %20 : vector<32x32xf32>
    %c0_7 = arith.constant 0 : index
    %c0_8 = arith.constant 0 : index
    %22 = vector.load %arg3[%c0_7, %c0_8] : memref<1x32xf32, #tpu.memory_space<vmem>>, vector<1x32xf32>
    %23 = vector.broadcast %22 : vector<1x32xf32> to vector<32x32xf32>
    %24 = arith.addf %21, %23 : vector<32x32xf32>
    %c0_9 = arith.constant 0 : index
    %c0_10 = arith.constant 0 : index
    %25 = vector.load %arg4[%c0_9, %c0_10] : memref<32x32xf32, #tpu.memory_space<vmem>>, vector<32x32xf32>
    tpu.vector_store %arg4[%c0_9, %c0_10], %24 {strides = array<i32>} : memref<32x32xf32, #tpu.memory_space<vmem>>, vector<32x32xf32>,
    return
  }
  func.func @transform_0(%arg0: i32) -> (i32, i32) {
    %c0_i32 = arith.constant 0 : i32
    %c0_i32_0 = arith.constant 0 : i32
    return %arg0, %c0_i32 : i32, i32
  }
  func.func @transform_1(%arg0: i32) -> (i32, i32) {
    %c0_i32 = arith.constant 0 : i32
    %c0_i32_0 = arith.constant 0 : i32
    %c0_i32_1 = arith.constant 0 : i32
    return %c0_i32, %c0_i32_0 : i32, i32
  }
  func.func @transform_2(%arg0: i32) -> (i32, i32) {
    %c0_i32 = arith.constant 0 : i32
    %c0_i32_0 = arith.constant 0 : i32
    %c0_i32_1 = arith.constant 0 : i32
    return %c0_i32, %c0_i32_0 : i32, i32
  }
  func.func @transform_3(%arg0: i32) -> (i32, i32) {
    %c0_i32 = arith.constant 0 : i32
    %c0_i32_0 = arith.constant 0 : i32
    return %arg0, %c0_i32 : i32, i32
  }
}

</mosaic_0001>

<llo_original>
// kernel: ijepa_forward.13
$region0: #{ijepa_forward.13}
  #allocation0 [shape = 'u32[]', space=smem, size = 0x4, offset = 0x4, fixed_abs, tag = 'smem constant byte address 0x4 - core index']
  #allocation1 [shape = 'u32[144,128]{1,0:T(1,128)}', space=vmem, size = 0x12000, scoped, tag = 'internal scratch']
  #allocation2 [shape = 'f32[4,256]{1,0:T(4,128)}', space=vmem, size = 0x1000, scoped, tag = 'scratch operand']
  %s0 = inlined_call_operand.vmem [shape: f32[4,32], index: 0, kind: input, shape index: {}]
  %s1 = inlined_call_operand.vmem [shape: bf16[32,256], index: 1, kind: input, shape index: {}]
  %s2 = inlined_call_operand.vmem [shape: f32[1,256], index: 2, kind: input, shape index: {}]
  %s3 = inlined_call_operand.vmem [shape: f32[4,256], index: 3, kind: output, shape index: {}]
  %s4 = sld [smem:[#allocation0]]
  $region30: #{ijepa_forward.13} parent=0
    _
  %s6 = ssub.s32 1, %s4
  %s7 = scalar_select 0, %s6, %s4
  // Predicated region
  $region2: #{ijepa_forward.13} parent=0 // pred_check
    _
  $region3: #{ijepa_forward.13} parent=0 // pred_check_branch
    %9 = sbr.rel (0) target = $region5
  $region4: #{ijepa_forward.13} parent=0 // pred_region
    _
  $region5: #{ijepa_forward.13} parent=0 // pred_fallthru
    _
  // Predicated region
  $region6: #{ijepa_forward.13} parent=0 // pred_check
    _
  $region7: #{ijepa_forward.13} parent=0 // pred_check_branch
    %11 = sbr.rel (0) target = $region9
  $region8: #{ijepa_forward.13} parent=0 // pred_region
    _
  $region9: #{ijepa_forward.13} parent=0 // pred_fallthru
    _
  // Predicated region
  $region10: #{ijepa_forward.13} parent=0 // pred_check
    _
  $region11: #{ijepa_forward.13} parent=0 // pred_check_branch
    %13 = sbr.rel (0) target = $region13
  $region12: #{ijepa_forward.13} parent=0 // pred_region
    _
  $region13: #{ijepa_forward.13} parent=0 // pred_fallthru
    _
  %p15 = scmp.eq.s32.totalorder 0, 0
  // Predicated region
  $region14: #{ijepa_forward.13} parent=0 // pred_check
    %p16 = pneg %p15
  $region15: #{ijepa_forward.13} parent=0 // pred_check_branch
    %18 = sbr.rel (%p16) target = $region17
  $region16: #{ijepa_forward.13} parent=0 // pred_region
    %19 = vst [vmem:[#allocation2] sm:$0xff] 0.0
  $region17: #{ijepa_forward.13} parent=0 // pred_fallthru
    _
  %v20 = vld [vmem:[#allocation2] sm:$0xff]
  %v21 = vld [vmem:[%s0] sm:$0xf]
  %v22 = vpack.c.bf16 %v21, %v21
  %v23 = vld [vmem:[%s1] sm:$0xff]
  %v24 = vld [vmem:[%s1 + $0x8] sm:$0xff]
  %v25 = vld [vmem:[%s1 + $0x10] sm:$0xff]
  %v26 = vld [vmem:[%s1 + $0x18] sm:$0xff]
  %v31 = vunpack.c.l.b16 %v23
  %v32 = vunpack.c.h.b16 %v23
  %v33 = vunpack.c.l.b16 %v24
  %v34 = vunpack.c.h.b16 %v24
  %v35 = vunpack.c.l.b16 %v25
  %v36 = vunpack.c.h.b16 %v25
  %v37 = vunpack.c.l.b16 %v26
  %v38 = vunpack.c.h.b16 %v26
  %v39 = vpack.c.b16 %v33, %v31
  %v40 = vpack.c.b16 %v34, %v32
  %v41 = vpack.c.b16 %v37, %v35
  %v42 = vpack.c.b16 %v38, %v36
  %vm47 = vcmask 261120
  %v49 = vsel %vm47, %v22, 0
  %51 = vmatprep.subr.bf16.mxu0 0
  %52 = vmatpush1.bf16.msra.mxu0 0
  %53 = vmatprep.subr.bf16.mxu0 0
  %54 = vmatpush1.bf16.msra.mxu0 0
  %55 = vmatprep.subr.bf16.mxu0 0
  %56 = vmatpush1.bf16.msra.mxu0 0
  %57 = vmatprep.subr.bf16.mxu0 0
  %58 = vmatpush1.bf16.msra.mxu0 0
  %59 = vmatprep.subr.bf16.mxu0 0
  %60 = vmatpush1.bf16.msra.mxu0 0
  %61 = vmatprep.subr.bf16.mxu0 0
  %62 = vmatpush1.bf16.msra.mxu0 0
  %63 = vmatprep.subr.bf16.mxu0 %v42
  %64 = vmatpush1.bf16.msra.mxu0 %v41
  %65 = vmatprep.subr.bf16.mxu0 %v40
  %66 = vmatpush1.bf16.msra.mxu0 %v39
  %67 = vmatprep.subr.bf16.mxu0 0
  %68 = vmatpush2.bf16.msra.mxu0 0
  %69 = vmatprep.subr.bf16.mxu0 0
  %70 = vmatpush2.bf16.msra.mxu0 0
  %71 = vmatprep.subr.bf16.mxu0 0
  %72 = vmatpush2.bf16.msra.mxu0 0
  %73 = vmatprep.subr.bf16.mxu0 0
  %74 = vmatpush2.bf16.msra.mxu0 0
  %75 = vmatprep.subr.bf16.mxu0 0
  %76 = vmatpush2.bf16.msra.mxu0 0
  %77 = vmatprep.subr.bf16.mxu0 0
  %78 = vmatpush2.bf16.msra.mxu0 0
  %79 = vmatprep.subr.bf16.mxu0 0
  %80 = vmatpush2.bf16.msra.mxu0 0
  %81 = vmatprep.subr.bf16.mxu0 0
  %82 = vmatpush2.bf16.msra.mxu0 0
  %83 = vmatprep.mubr.bf16.mxu0 0
  %84 = vmatmul.mubr.bf16.gmra.mxu0 %v49
  %v85 = vpop.f32.mrf.mxu0
  %v86 = vadd.f32 0.0, %v85
  %v87 = vpop.f32.mrf.mxu0
  %v88 = vadd.f32 0.0, %v87
  %v89 = vpop.f32.mrf.mxu0
  %v90 = vpop.f32.mrf.mxu0
  %91 = vdwg.mxu0
  %v94 = vcombine.low %v86, %v88
  %v96 = vadd.f32 %v20, %v94
  %97 = vst [vmem:[#allocation2] sm:$0xff] %v96
  // Predicated region
  $region18: #{ijepa_forward.13} parent=0 // pred_check
    %p98 = pneg %p15
  $region19: #{ijepa_forward.13} parent=0 // pred_check_branch
    %100 = sbr.rel (%p98) target = $region21
  $region20: #{ijepa_forward.13} parent=0 // pred_region
    %v101 = vld [vmem:[#allocation2] sm:$0xff]
    %v102 = vld [vmem:[%s2] sm:$0x3]
    %v104 = vlaneseq
    %v105 = vshrl.u32 %v104, 7
    %v106 = vsub.s32 0, %v105
    %v107 = vrot.slane %v102, %v106
    %v108 = vlaneseq
    %v109 = vshrl.u32 %v108, 7
    %v110 = vsub.s32 1, %v109
    %v111 = vrot.slane %v102, %v110
    %v112 = vcombine.low %v107, %v111
    %v114 = vadd.f32 %v101, %v112
    %115 = vst [vmem:[%s3] sm:$0xff] %v114
  $region21: #{ijepa_forward.13} parent=0 // pred_fallthru
    _
  // Predicated region
  $region22: #{ijepa_forward.13} parent=0 // pred_check
    _
  $region23: #{ijepa_forward.13} parent=0 // pred_check_branch
    %117 = sbr.rel (0) target = $region25
  $region24: #{ijepa_forward.13} parent=0 // pred_region
    _
  $region25: #{ijepa_forward.13} parent=0 // pred_fallthru
    _
  // Predicated region
  $region26: #{ijepa_forward.13} parent=0 // pred_check
    _
  $region27: #{ijepa_forward.13} parent=0 // pred_check_branch
    %119 = sbr.rel (0) target = $region29
  $region28: #{ijepa_forward.13} parent=0 // pred_region
    _
  $region29: #{ijepa_forward.13} parent=0 // pred_fallthru
    _

// kernel: ijepa_forward.14
$region0: #{ijepa_forward.14}
  #allocation0 [shape = 'u32[]', space=smem, size = 0x4, offset = 0x4, fixed_abs, tag = 'smem constant byte address 0x4 - core index']
  #allocation1 [shape = 'u32[144,128]{1,0:T(1,128)}', space=vmem, size = 0x12000, scoped, tag = 'internal scratch']
  %s0 = inlined_call_operand.vmem [shape: f32[4,8,32], index: 0, kind: input, shape index: {}]
  %s1 = inlined_call_operand.vmem [shape: f32[1,8,32], index: 1, kind: input, shape index: {}]
  %s2 = inlined_call_operand.vmem [shape: f32[1,1,32], index: 2, kind: input, shape index: {}]
  %s3 = inlined_call_operand.vmem [shape: f32[1,1,32], index: 3, kind: input, shape index: {}]
  %s4 = inlined_call_operand.vmem [shape: f32[4,8,32], index: 4, kind: output, shape index: {}]
  %s5 = sld [smem:[#allocation0]]
  $region26: #{ijepa_forward.14} parent=0
    _
  %s7 = ssub.s32 1, %s5
  %s8 = scalar_select 0, %s7, %s5
  // Predicated region
  $region2: #{ijepa_forward.14} parent=0 // pred_check
    _
  $region3: #{ijepa_forward.14} parent=0 // pred_check_branch
    %10 = sbr.rel (0) target = $region5
  $region4: #{ijepa_forward.14} parent=0 // pred_region
    _
  $region5: #{ijepa_forward.14} parent=0 // pred_fallthru
    _
  // Predicated region
  $region6: #{ijepa_forward.14} parent=0 // pred_check
    _
  $region7: #{ijepa_forward.14} parent=0 // pred_check_branch
    %12 = sbr.rel (0) target = $region9
  $region8: #{ijepa_forward.14} parent=0 // pred_region
    _
  $region9: #{ijepa_forward.14} parent=0 // pred_fallthru
    _
  // Predicated region
  $region10: #{ijepa_forward.14} parent=0 // pred_check
    _
  $region11: #{ijepa_forward.14} parent=0 // pred_check_branch
    %14 = sbr.rel (0) target = $region13
  $region12: #{ijepa_forward.14} parent=0 // pred_region
    _
  $region13: #{ijepa_forward.14} parent=0 // pred_fallthru
    _
  // Predicated region
  $region14: #{ijepa_forward.14} parent=0 // pred_check
    _
  $region15: #{ijepa_forward.14} parent=0 // pred_check_branch
    %16 = sbr.rel (0) target = $region17
  $region16: #{ijepa_forward.14} parent=0 // pred_region
    _
  $region17: #{ijepa_forward.14} parent=0 // pred_fallthru
    _
  %v17 = vld [vmem:[%s0] sm:$0xff]
  %v18 = vld [vmem:[%s0 + $0x8] sm:$0xff]
  %v19 = vld [vmem:[%s0 + $0x10] sm:$0xff]
  %v20 = vld [vmem:[%s0 + $0x18] sm:$0xff]
  %v21 = vld [vmem:[%s1] sm:$0xff]
  %v22 = vadd.f32 %v17, %v21
  %v23 = vadd.f32 %v18, %v21
  %v24 = vadd.f32 %v19, %v21
  %v25 = vadd.f32 %v20, %v21
  %vm26 = vcmask 261120
  %v27 = vsel %vm26, %v22, 0.0
  %28 = vadd.xlane.f32.xlu0 %v27
  %v29 = vpop.xlane.xlu0 %28
  %v30 = vsel %vm26, %v23, 0.0
  %31 = vadd.xlane.f32.xlu0 %v30
  %v32 = vpop.xlane.xlu0 %31
  %v33 = vsel %vm26, %v24, 0.0
  %34 = vadd.xlane.f32.xlu0 %v33
  %v35 = vpop.xlane.xlu0 %34
  %v36 = vsel %vm26, %v25, 0.0
  %37 = vadd.xlane.f32.xlu0 %v36
  %v38 = vpop.xlane.xlu0 %37
  %v39 = vrcp.pop 32.0
  %v40 = vmul.f32 %v29, %v39
  %v41 = vmul.f32 %v32, %v39
  %v42 = vmul.f32 %v35, %v39
  %v43 = vmul.f32 %v38, %v39
  %v44 = vsub.f32 %v22, %v40
  %v45 = vsub.f32 %v23, %v41
  %v46 = vsub.f32 %v24, %v42
  %v47 = vsub.f32 %v25, %v43
  %v48 = vmul.f32 %v44, %v44
  %v49 = vmul.f32 %v45, %v45
  %v50 = vmul.f32 %v46, %v46
  %v51 = vmul.f32 %v47, %v47
  %v52 = vsel %vm26, %v48, 0.0
  %53 = vadd.xlane.f32.xlu0 %v52
  %v54 = vpop.xlane.xlu0 %53
  %v55 = vsel %vm26, %v49, 0.0
  %56 = vadd.xlane.f32.xlu0 %v55
  %v57 = vpop.xlane.xlu0 %56
  %v58 = vsel %vm26, %v50, 0.0
  %59 = vadd.xlane.f32.xlu0 %v58
  %v60 = vpop.xlane.xlu0 %59
  %v61 = vsel %vm26, %v51, 0.0
  %62 = vadd.xlane.f32.xlu0 %v61
  %v63 = vpop.xlane.xlu0 %62
  %v64 = vmul.f32 %v54, %v39
  %v65 = vmul.f32 %v57, %v39
  %v66 = vmul.f32 %v60, %v39
  %v67 = vmul.f32 %v63, %v39
  %v68 = vadd.f32 %v64, 1e-05
  %v69 = vadd.f32 %v65, 1e-05
  %v70 = vadd.f32 %v66, 1e-05
  %v71 = vadd.f32 %v67, 1e-05
  %v72 = vrsqrt.pop %v68
  %v73 = vrsqrt.pop %v69
  %v74 = vrsqrt.pop %v70
  %v75 = vrsqrt.pop %v71
  %v76 = vmul.f32 %v44, %v72
  %v77 = vmul.f32 %v45, %v73
  %v78 = vmul.f32 %v46, %v74
  %v79 = vmul.f32 %v47, %v75
  %v80 = vld [vmem:[%s2] sm:$0x1]
  %v82 = vlaneseq
  %v83 = vshrl.u32 %v82, 7
  %v84 = vsub.s32 0, %v83
  %v85 = vrot.slane %v80, %v84
  %v87 = vmul.f32 %v76, %v85
  %v88 = vmul.f32 %v77, %v85
  %v89 = vmul.f32 %v78, %v85
  %v90 = vmul.f32 %v79, %v85
  %v91 = vld [vmem:[%s3] sm:$0x1]
  %v93 = vlaneseq
  %v94 = vshrl.u32 %v93, 7
  %v95 = vsub.s32 0, %v94
  %v96 = vrot.slane %v91, %v95
  %v98 = vadd.f32 %v87, %v96
  %v99 = vadd.f32 %v88, %v96
  %v100 = vadd.f32 %v89, %v96
  %v101 = vadd.f32 %v90, %v96
  %102 = vst.msk [vmem:[%s4] sm:$0xff] %vm26, %v98
  %103 = vst.msk [vmem:[%s4 + $0x8] sm:$0xff] %vm26, %v99
  %104 = vst.msk [vmem:[%s4 + $0x10] sm:$0xff] %vm26, %v100
  %105 = vst.msk [vmem:[%s4 + $0x18] sm:$0xff] %vm26, %v101
  // Predicated region
  $region18: #{ijepa_forward.14} parent=0 // pred_check
    _
  $region19: #{ijepa_forward.14} parent=0 // pred_check_branch
    %107 = sbr.rel (0) target = $region21
  $region20: #{ijepa_forward.14} parent=0 // pred_region
    _
  $region21: #{ijepa_forward.14} parent=0 // pred_fallthru
    _
  // Predicated region
  $region22: #{ijepa_forward.14} parent=0 // pred_check
    _
  $region23: #{ijepa_forward.14} parent=0 // pred_check_branch
    %109 = sbr.rel (0) target = $region25
  $region24: #{ijepa_forward.14} parent=0 // pred_region
    _
  $region25: #{ijepa_forward.14} parent=0 // pred_fallthru
    _

// kernel: ijepa_forward.15
$region0: #{ijepa_forward.15}
  #allocation0 [shape = 'u32[]', space=smem, size = 0x4, offset = 0x4, fixed_abs, tag = 'smem constant byte address 0x4 - core index']
  #allocation1 [shape = 'u32[144,128]{1,0:T(1,128)}', space=vmem, size = 0x12000, scoped, tag = 'internal scratch']
  %s0 = inlined_call_operand.vmem [shape: f32[32,32], index: 0, kind: input, shape index: {}]
  %s1 = inlined_call_operand.vmem [shape: f32[1,32], index: 1, kind: input, shape index: {}]
  %s2 = inlined_call_operand.vmem [shape: f32[1,32], index: 2, kind: input, shape index: {}]
  %s3 = inlined_call_operand.vmem [shape: bf16[32,32], index: 3, kind: input, shape index: {}]
  %s4 = inlined_call_operand.vmem [shape: bf16[32,32], index: 4, kind: input, shape index: {}]
  %s5 = inlined_call_operand.vmem [shape: bf16[32,32], index: 5, kind: input, shape index: {}]
  %s6 = inlined_call_operand.vmem [shape: f32[1,32], index: 6, kind: input, shape index: {}]
  %s7 = inlined_call_operand.vmem [shape: f32[1,32], index: 7, kind: input, shape index: {}]
  %s8 = inlined_call_operand.vmem [shape: f32[1,32], index: 8, kind: input, shape index: {}]
  %s9 = inlined_call_operand.vmem [shape: f32[32,32], index: 9, kind: output, shape index: {0}]
  %s10 = inlined_call_operand.vmem [shape: f32[32,32], index: 10, kind: output, shape index: {1}]
  %s11 = inlined_call_operand.vmem [shape: f32[32,32], index: 11, kind: output, shape index: {2}]
  %12 = xla_tuple %s9, %s10, %s11
  %s13 = sld [smem:[#allocation0]]
  $region62: #{ijepa_forward.15} parent=0
    _
  %s15 = ssub.s32 1, %s13
  %s16 = scalar_select 0, %s15, %s13
  // Predicated region
  $region2: #{ijepa_forward.15} parent=0 // pred_check
    _
  $region3: #{ijepa_forward.15} parent=0 // pred_check_branch
    %18 = sbr.rel (0) target = $region5
  $region4: #{ijepa_forward.15} parent=0 // pred_region
    _
  $region5: #{ijepa_forward.15} parent=0 // pred_fallthru
    _
  // Predicated region
  $region6: #{ijepa_forward.15} parent=0 // pred_check
    _
  $region7: #{ijepa_forward.15} parent=0 // pred_check_branch
    %20 = sbr.rel (0) target = $region9
  $region8: #{ijepa_forward.15} parent=0 // pred_region
    _
  $region9: #{ijepa_forward.15} parent=0 // pred_fallthru
    _
  // Predicated region
  $region10: #{ijepa_forward.15} parent=0 // pred_check
    _
  $region11: #{ijepa_forward.15} parent=0 // pred_check_branch
    %22 = sbr.rel (0) target = $region13
  $region12: #{ijepa_forward.15} parent=0 // pred_region
    _
  $region13: #{ijepa_forward.15} parent=0 // pred_fallthru
    _
  // Predicated region
  $region14: #{ijepa_forward.15} parent=0 // pred_check
    _
  $region15: #{ijepa_forward.15} parent=0 // pred_check_branch
    %24 = sbr.rel (0) target = $region17
  $region16: #{ijepa_forward.15} parent=0 // pred_region
    _
  $region17: #{ijepa_forward.15} parent=0 // pred_fallthru
    _
  // Predicated region
  $region18: #{ijepa_forward.15} parent=0 // pred_check
    _
  $region19: #{ijepa_forward.15} parent=0 // pred_check_branch
    %26 = sbr.rel (0) target = $region21
  $region20: #{ijepa_forward.15} parent=0 // pred_region
    _
  $region21: #{ijepa_forward.15} parent=0 // pred_fallthru
    _
  // Predicated region
  $region22: #{ijepa_forward.15} parent=0 // pred_check
    _
  $region23: #{ijepa_forward.15} parent=0 // pred_check_branch
    %28 = sbr.rel (0) target = $region25
  $region24: #{ijepa_forward.15} parent=0 // pred_region
    _
  $region25: #{ijepa_forward.15} parent=0 // pred_fallthru
    _
  // Predicated region
  $region26: #{ijepa_forward.15} parent=0 // pred_check
    _
  $region27: #{ijepa_forward.15} parent=0 // pred_check_branch
    %30 = sbr.rel (0) target = $region29
  $region28: #{ijepa_forward.15} parent=0 // pred_region
    _
  $region29: #{ijepa_forward.15} parent=0 // pred_fallthru
    _
  // Predicated region
  $region30: #{ijepa_forward.15} parent=0 // pred_check
    _
  $region31: #{ijepa_forward.15} parent=0 // pred_check_branch
    %32 = sbr.rel (0) target = $region33
  $region32: #{ijepa_forward.15} parent=0 // pred_region
    _
  $region33: #{ijepa_forward.15} parent=0 // pred_fallthru
    _
  // Predicated region
  $region34: #{ijepa_forward.15} parent=0 // pred_check
    _
  $region35: #{ijepa_forward.15} parent=0 // pred_check_branch
    %34 = sbr.rel (0) target = $region37
  $region36: #{ijepa_forward.15} parent=0 // pred_region
    _
  $region37: #{ijepa_forward.15} parent=0 // pred_fallthru
    _
  %v36 = vld [vmem:[%s0] sm:$0xff]
  %v37 = vld [vmem:[%s0 + $0x8] sm:$0xff]
  %v38 = vld [vmem:[%s0 + $0x10] sm:$0xff]
  %v39 = vld [vmem:[%s0 + $0x18] sm:$0xff]
  %vm40 = vcmask 261120
  %v41 = vsel %vm40, %v36, 0.0
  %42 = vadd.xlane.f32.xlu0 %v41
  %v43 = vpop.xlane.xlu0 %42
  %v44 = vsel %vm40, %v37, 0.0
  %45 = vadd.xlane.f32.xlu0 %v44
  %v46 = vpop.xlane.xlu0 %45
  %v47 = vsel %vm40, %v38, 0.0
  %48 = vadd.xlane.f32.xlu0 %v47
  %v49 = vpop.xlane.xlu0 %48
  %v50 = vsel %vm40, %v39, 0.0
  %51 = vadd.xlane.f32.xlu0 %v50
  %v52 = vpop.xlane.xlu0 %51
  %v53 = vrcp.pop 32.0
  %v54 = vmul.f32 %v43, %v53
  %v55 = vmul.f32 %v46, %v53
  %v56 = vmul.f32 %v49, %v53
  %v57 = vmul.f32 %v52, %v53
  %v58 = vsub.f32 %v36, %v54
  %v59 = vsub.f32 %v37, %v55
  %v60 = vsub.f32 %v38, %v56
  %v61 = vsub.f32 %v39, %v57
  %v62 = vmul.f32 %v58, %v58
  %v63 = vmul.f32 %v59, %v59
  %v64 = vmul.f32 %v60, %v60
  %v65 = vmul.f32 %v61, %v61
  %v66 = vsel %vm40, %v62, 0.0
  %67 = vadd.xlane.f32.xlu0 %v66
  %v68 = vpop.xlane.xlu0 %67
  %v69 = vsel %vm40, %v63, 0.0
  %70 = vadd.xlane.f32.xlu0 %v69
  %v71 = vpop.xlane.xlu0 %70
  %v72 = vsel %vm40, %v64, 0.0
  %73 = vadd.xlane.f32.xlu0 %v72
  %v74 = vpop.xlane.xlu0 %73
  %v75 = vsel %vm40, %v65, 0.0
  %76 = vadd.xlane.f32.xlu0 %v75
  %v77 = vpop.xlane.xlu0 %76
  %v78 = vmul.f32 %v68, %v53
  %v79 = vmul.f32 %v71, %v53
  %v80 = vmul.f32 %v74, %v53
  %v81 = vmul.f32 %v77, %v53
  %v82 = vadd.f32 %v78, 1e-05
  %v83 = vadd.f32 %v79, 1e-05
  %v84 = vadd.f32 %v80, 1e-05
  %v85 = vadd.f32 %v81, 1e-05
  %v86 = vrsqrt.pop %v82
  %v87 = vrsqrt.pop %v83
  %v88 = vrsqrt.pop %v84
  %v89 = vrsqrt.pop %v85
  %v90 = vmul.f32 %v58, %v86
  %v91 = vmul.f32 %v59, %v87
  %v92 = vmul.f32 %v60, %v88
  %v93 = vmul.f32 %v61, %v89
  %v94 = vld [vmem:[%s1] sm:$0x1]
  %v96 = vlaneseq
  %v97 = vshrl.u32 %v96, 7
  %v98 = vsub.s32 0, %v97
  %v99 = vrot.slane %v94, %v98
  %v101 = vmul.f32 %v90, %v99
  %v102 = vmul.f32 %v91, %v99
  %v103 = vmul.f32 %v92, %v99
  %v104 = vmul.f32 %v93, %v99
  %v105 = vld [vmem:[%s2] sm:$0x1]
  %v107 = vlaneseq
  %v108 = vshrl.u32 %v107, 7
  %v109 = vsub.s32 0, %v108
  %v110 = vrot.slane %v105, %v109
  %v112 = vadd.f32 %v101, %v110
  %v113 = vadd.f32 %v102, %v110
  %v114 = vadd.f32 %v103, %v110
  %v115 = vadd.f32 %v104, %v110
  %v116 = vpack.c.bf16 %v113, %v112
  %v117 = vpack.c.bf16 %v115, %v114
  %v118 = vld [vmem:[%s3] sm:$0xf]
  %v119 = vld [vmem:[%s3 + $0x4] sm:$0xf]
  %v120 = vld [vmem:[%s3 + $0x8] sm:$0xf]
  %v121 = vld [vmem:[%s3 + $0xc] sm:$0xf]
  %v122 = vld [vmem:[%s6] sm:$0x1]
  %v124 = vlaneseq
  %v125 = vshrl.u32 %v124, 7
  %v126 = vsub.s32 0, %v125
  %v127 = vrot.slane %v122, %v126
  %v133 = vunpack.c.l.b16 %v118
  %v134 = vunpack.c.l.b16 %v119
  %v135 = vunpack.c.l.b16 %v120
  %v136 = vunpack.c.l.b16 %v121
  %v137 = vpack.c.b16 %v134, %v133
  %v138 = vpack.c.b16 %v136, %v135
  %v142 = vsel %vm40, %v116, 0
  %v145 = vsel %vm40, %v117, 0
  %147 = vmatprep.subr.bf16.mxu0 0
  %148 = vmatpush1.bf16.msra.mxu0 0
  %149 = vmatprep.subr.bf16.mxu0 0
  %150 = vmatpush1.bf16.msra.mxu0 0
  %151 = vmatprep.subr.bf16.mxu0 0
  %152 = vmatpush1.bf16.msra.mxu0 0
  %153 = vmatprep.subr.bf16.mxu0 0
  %154 = vmatpush1.bf16.msra.mxu0 0
  %155 = vmatprep.subr.bf16.mxu0 0
  %156 = vmatpush1.bf16.msra.mxu0 0
  %157 = vmatprep.subr.bf16.mxu0 0
  %158 = vmatpush1.bf16.msra.mxu0 0
  %159 = vmatprep.subr.bf16.mxu0 0
  %160 = vmatpush1.bf16.msra.mxu0 %v138
  %161 = vmatprep.subr.bf16.mxu0 0
  %162 = vmatpush1.bf16.msra.mxu0 %v137
  %163 = vmatprep.subr.bf16.mxu0 0
  %164 = vmatpush2.bf16.msra.mxu0 0
  %165 = vmatprep.subr.bf16.mxu0 0
  %166 = vmatpush2.bf16.msra.mxu0 0
  %167 = vmatprep.subr.bf16.mxu0 0
  %168 = vmatpush2.bf16.msra.mxu0 0
  %169 = vmatprep.subr.bf16.mxu0 0
  %170 = vmatpush2.bf16.msra.mxu0 0
  %171 = vmatprep.subr.bf16.mxu0 0
  %172 = vmatpush2.bf16.msra.mxu0 0
  %173 = vmatprep.subr.bf16.mxu0 0
  %174 = vmatpush2.bf16.msra.mxu0 0
  %175 = vmatprep.subr.bf16.mxu0 0
  %176 = vmatpush2.bf16.msra.mxu0 0
  %177 = vmatprep.subr.bf16.mxu0 0
  %178 = vmatpush2.bf16.msra.mxu0 0
  %179 = vmatprep.mubr.bf16.mxu0 0
  %180 = vmatmul.mubr.bf16.gmra.mxu0 %v142
  %v181 = vpop.f32.mrf.mxu0
  %v182 = vadd.f32 %v127, %v181
  %v183 = vpop.f32.mrf.mxu0
  %v184 = vpop.f32.mrf.mxu0
  %v185 = vadd.f32 %v127, %v184
  %v186 = vpop.f32.mrf.mxu0
  %187 = vmatprep.mubr.bf16.mxu0 0
  %188 = vmatmul.mubr.bf16.gmra.mxu0 %v145
  %v189 = vpop.f32.mrf.mxu0
  %v190 = vadd.f32 %v127, %v189
  %v191 = vpop.f32.mrf.mxu0
  %v192 = vpop.f32.mrf.mxu0
  %v193 = vadd.f32 %v127, %v192
  %v194 = vpop.f32.mrf.mxu0
  %195 = vdwg.mxu0
  %196 = vst.msk [vmem:[%s9] sm:$0xff] %vm40, %v182
  %197 = vst.msk [vmem:[%s9 + $0x8] sm:$0xff] %vm40, %v185
  %198 = vst.msk [vmem:[%s9 + $0x10] sm:$0xff] %vm40, %v190
  %199 = vst.msk [vmem:[%s9 + $0x18] sm:$0xff] %vm40, %v193
  %v200 = vld [vmem:[%s4] sm:$0xf]
  %v201 = vld [vmem:[%s4 + $0x4] sm:$0xf]
  %v202 = vld [vmem:[%s4 + $0x8] sm:$0xf]
  %v203 = vld [vmem:[%s4 + $0xc] sm:$0xf]
  %v204 = vld [vmem:[%s7] sm:$0x1]
  %v206 = vlaneseq
  %v207 = vshrl.u32 %v206, 7
  %v208 = vsub.s32 0, %v207
  %v209 = vrot.slane %v204, %v208
  %v215 = vunpack.c.l.b16 %v200
  %v216 = vunpack.c.l.b16 %v201
  %v217 = vunpack.c.l.b16 %v202
  %v218 = vunpack.c.l.b16 %v203
  %v219 = vpack.c.b16 %v216, %v215
  %v220 = vpack.c.b16 %v218, %v217
  %223 = vmatprep.subr.bf16.mxu0 0
  %224 = vmatpush1.bf16.msra.mxu0 0
  %225 = vmatprep.subr.bf16.mxu0 0
  %226 = vmatpush1.bf16.msra.mxu0 0
  %227 = vmatprep.subr.bf16.mxu0 0
  %228 = vmatpush1.bf16.msra.mxu0 0
  %229 = vmatprep.subr.bf16.mxu0 0
  %230 = vmatpush1.bf16.msra.mxu0 0
  %231 = vmatprep.subr.bf16.mxu0 0
  %232 = vmatpush1.bf16.msra.mxu0 0
  %233 = vmatprep.subr.bf16.mxu0 0
  %234 = vmatpush1.bf16.msra.mxu0 0
  %235 = vmatprep.subr.bf16.mxu0 0
  %236 = vmatpush1.bf16.msra.mxu0 %v220
  %237 = vmatprep.subr.bf16.mxu0 0
  %238 = vmatpush1.bf16.msra.mxu0 %v219
  %239 = vmatprep.subr.bf16.mxu0 0
  %240 = vmatpush2.bf16.msra.mxu0 0
  %241 = vmatprep.subr.bf16.mxu0 0
  %242 = vmatpush2.bf16.msra.mxu0 0
  %243 = vmatprep.subr.bf16.mxu0 0
  %244 = vmatpush2.bf16.msra.mxu0 0
  %245 = vmatprep.subr.bf16.mxu0 0
  %246 = vmatpush2.bf16.msra.mxu0 0
  %247 = vmatprep.subr.bf16.mxu0 0
  %248 = vmatpush2.bf16.msra.mxu0 0
  %249 = vmatprep.subr.bf16.mxu0 0
  %250 = vmatpush2.bf16.msra.mxu0 0
  %251 = vmatprep.subr.bf16.mxu0 0
  %252 = vmatpush2.bf16.msra.mxu0 0
  %253 = vmatprep.subr.bf16.mxu0 0
  %254 = vmatpush2.bf16.msra.mxu0 0
  %255 = vmatprep.mubr.bf16.mxu0 0
  %256 = vmatmul.mubr.bf16.gmra.mxu0 %v142
  %v257 = vpop.f32.mrf.mxu0
  %v258 = vadd.f32 %v209, %v257
  %v259 = vpop.f32.mrf.mxu0
  %v260 = vpop.f32.mrf.mxu0
  %v261 = vadd.f32 %v209, %v260
  %v262 = vpop.f32.mrf.mxu0
  %263 = vmatprep.mubr.bf16.mxu0 0
  %264 = vmatmul.mubr.bf16.gmra.mxu0 %v145
  %v265 = vpop.f32.mrf.mxu0
  %v266 = vadd.f32 %v209, %v265
  %v267 = vpop.f32.mrf.mxu0
  %v268 = vpop.f32.mrf.mxu0
  %v269 = vadd.f32 %v209, %v268
  %v270 = vpop.f32.mrf.mxu0
  %271 = vdwg.mxu0
  %272 = vst.msk [vmem:[%s10] sm:$0xff] %vm40, %v258
  %273 = vst.msk [vmem:[%s10 + $0x8] sm:$0xff] %vm40, %v261
  %274 = vst.msk [vmem:[%s10 + $0x10] sm:$0xff] %vm40, %v266
  %275 = vst.msk [vmem:[%s10 + $0x18] sm:$0xff] %vm40, %v269
  %v276 = vld [vmem:[%s5] sm:$0xf]
  %v277 = vld [vmem:[%s5 + $0x4] sm:$0xf]
  %v278 = vld [vmem:[%s5 + $0x8] sm:$0xf]
  %v279 = vld [vmem:[%s5 + $0xc] sm:$0xf]
  %v280 = vld [vmem:[%s8] sm:$0x1]
  %v282 = vlaneseq
  %v283 = vshrl.u32 %v282, 7
  %v284 = vsub.s32 0, %v283
  %v285 = vrot.slane %v280, %v284
  %v291 = vunpack.c.l.b16 %v276
  %v292 = vunpack.c.l.b16 %v277
  %v293 = vunpack.c.l.b16 %v278
  %v294 = vunpack.c.l.b16 %v279
  %v295 = vpack.c.b16 %v292, %v291
  %v296 = vpack.c.b16 %v294, %v293
  %299 = vmatprep.subr.bf16.mxu0 0
  %300 = vmatpush1.bf16.msra.mxu0 0
  %301 = vmatprep.subr.bf16.mxu0 0
  %302 = vmatpush1.bf16.msra.mxu0 0
  %303 = vmatprep.subr.bf16.mxu0 0
  %304 = vmatpush1.bf16.msra.mxu0 0
  %305 = vmatprep.subr.bf16.mxu0 0
  %306 = vmatpush1.bf16.msra.mxu0 0
  %307 = vmatprep.subr.bf16.mxu0 0
  %308 = vmatpush1.bf16.msra.mxu0 0
  %309 = vmatprep.subr.bf16.mxu0 0
  %310 = vmatpush1.bf16.msra.mxu0 0
  %311 = vmatprep.subr.bf16.mxu0 0
  %312 = vmatpush1.bf16.msra.mxu0 %v296
  %313 = vmatprep.subr.bf16.mxu0 0
  %314 = vmatpush1.bf16.msra.mxu0 %v295
  %315 = vmatprep.subr.bf16.mxu0 0
  %316 = vmatpush2.bf16.msra.mxu0 0
  %317 = vmatprep.subr.bf16.mxu0 0
  %318 = vmatpush2.bf16.msra.mxu0 0
  %319 = vmatprep.subr.bf16.mxu0 0
  %320 = vmatpush2.bf16.msra.mxu0 0
  %321 = vmatprep.subr.bf16.mxu0 0
  %322 = vmatpush2.bf16.msra.mxu0 0
  %323 = vmatprep.subr.bf16.mxu0 0
  %324 = vmatpush2.bf16.msra.mxu0 0
  %325 = vmatprep.subr.bf16.mxu0 0
  %326 = vmatpush2.bf16.msra.mxu0 0
  %327 = vmatprep.subr.bf16.mxu0 0
  %328 = vmatpush2.bf16.msra.mxu0 0
  %329 = vmatprep.subr.bf16.mxu0 0
  %330 = vmatpush2.bf16.msra.mxu0 0
  %331 = vmatprep.mubr.bf16.mxu0 0
  %332 = vmatmul.mubr.bf16.gmra.mxu0 %v142
  %v333 = vpop.f32.mrf.mxu0
  %v334 = vadd.f32 %v285, %v333
  %v335 = vpop.f32.mrf.mxu0
  %v336 = vpop.f32.mrf.mxu0
  %v337 = vadd.f32 %v285, %v336
  %v338 = vpop.f32.mrf.mxu0
  %339 = vmatprep.mubr.bf16.mxu0 0
  %340 = vmatmul.mubr.bf16.gmra.mxu0 %v145
  %v341 = vpop.f32.mrf.mxu0
  %v342 = vadd.f32 %v285, %v341
  %v343 = vpop.f32.mrf.mxu0
  %v344 = vpop.f32.mrf.mxu0
  %v345 = vadd.f32 %v285, %v344
  %v346 = vpop.f32.mrf.mxu0
  %347 = vdwg.mxu0
  %348 = vst.msk [vmem:[%s11] sm:$0xff] %vm40, %v334
  %349 = vst.msk [vmem:[%s11 + $0x8] sm:$0xff] %vm40, %v337
  %350 = vst.msk [vmem:[%s11 + $0x10] sm:$0xff] %vm40, %v342
  %351 = vst.msk [vmem:[%s11 + $0x18] sm:$0xff] %vm40, %v345
  // Predicated region
  $region38: #{ijepa_forward.15} parent=0 // pred_check
    _
  $region39: #{ijepa_forward.15} parent=0 // pred_check_branch
    %353 = sbr.rel (0) target = $region41
  $region40: #{ijepa_forward.15} parent=0 // pred_region
    _
  $region41: #{ijepa_forward.15} parent=0 // pred_fallthru
    _
  // Predicated region
  $region42: #{ijepa_forward.15} parent=0 // pred_check
    _
  $region43: #{ijepa_forward.15} parent=0 // pred_check_branch
    %355 = sbr.rel (0) target = $region45
  $region44: #{ijepa_forward.15} parent=0 // pred_region
    _
  $region45: #{ijepa_forward.15} parent=0 // pred_fallthru
    _
  // Predicated region
  $region46: #{ijepa_forward.15} parent=0 // pred_check
    _
  $region47: #{ijepa_forward.15} parent=0 // pred_check_branch
    %357 = sbr.rel (0) target = $region49
  $region48: #{ijepa_forward.15} parent=0 // pred_region
    _
  $region49: #{ijepa_forward.15} parent=0 // pred_fallthru
    _
  // Predicated region
  $region50: #{ijepa_forward.15} parent=0 // pred_check
    _
  $region51: #{ijepa_forward.15} parent=0 // pred_check_branch
    %359 = sbr.rel (0) target = $region53
  $region52: #{ijepa_forward.15} parent=0 // pred_region
    _
  $region53: #{ijepa_forward.15} parent=0 // pred_fallthru
    _
  // Predicated region
  $region54: #{ijepa_forward.15} parent=0 // pred_check
    _
  $region55: #{ijepa_forward.15} parent=0 // pred_check_branch
    %361 = sbr.rel (0) target = $region57
  $region56: #{ijepa_forward.15} parent=0 // pred_region
    _
  $region57: #{ijepa_forward.15} parent=0 // pred_fallthru
    _
  // Predicated region
  $region58: #{ijepa_forward.15} parent=0 // pred_check
    _
  $region59: #{ijepa_forward.15} parent=0 // pred_check_branch
    %363 = sbr.rel (0) target = $region61
  $region60: #{ijepa_forward.15} parent=0 // pred_region
    _
  $region61: #{ijepa_forward.15} parent=0 // pred_fallthru
    _

// kernel: ijepa_forward.17
$region0: #{ijepa_forward.17}
  #allocation0 [shape = 'u32[]', space=smem, size = 0x4, offset = 0x4, fixed_abs, tag = 'smem constant byte address 0x4 - core index']
  #allocation1 [shape = 'u32[144,128]{1,0:T(1,128)}', space=vmem, size = 0x12000, scoped, tag = 'internal scratch']
  #allocation2 [shape = 'f32[32,32]{1,0:T(8,128)}', space=vmem, size = 0x4000, scoped, tag = 'scratch operand']
  %s0 = inlined_call_operand.vmem [shape: f32[32,32], index: 0, kind: input, shape index: {}]
  %s1 = inlined_call_operand.vmem [shape: bf16[32,32], index: 1, kind: input, shape index: {}]
  %s2 = inlined_call_operand.vmem [shape: f32[1,32], index: 2, kind: input, shape index: {}]
  %s3 = inlined_call_operand.vmem [shape: f32[32,32], index: 3, kind: input, shape index: {}]
  %s4 = inlined_call_operand.vmem [shape: f32[32,32], index: 4, kind: output, shape index: {}]
  %s5 = sld [smem:[#allocation0]]
  $region34: #{ijepa_forward.17} parent=0
    _
  %s7 = ssub.s32 1, %s5
  %s8 = scalar_select 0, %s7, %s5
  // Predicated region
  $region2: #{ijepa_forward.17} parent=0 // pred_check
    _
  $region3: #{ijepa_forward.17} parent=0 // pred_check_branch
    %10 = sbr.rel (0) target = $region5
  $region4: #{ijepa_forward.17} parent=0 // pred_region
    _
  $region5: #{ijepa_forward.17} parent=0 // pred_fallthru
    _
  // Predicated region
  $region6: #{ijepa_forward.17} parent=0 // pred_check
    _
  $region7: #{ijepa_forward.17} parent=0 // pred_check_branch
    %12 = sbr.rel (0) target = $region9
  $region8: #{ijepa_forward.17} parent=0 // pred_region
    _
  $region9: #{ijepa_forward.17} parent=0 // pred_fallthru
    _
  // Predicated region
  $region10: #{ijepa_forward.17} parent=0 // pred_check
    _
  $region11: #{ijepa_forward.17} parent=0 // pred_check_branch
    %14 = sbr.rel (0) target = $region13
  $region12: #{ijepa_forward.17} parent=0 // pred_region
    _
  $region13: #{ijepa_forward.17} parent=0 // pred_fallthru
    _
  // Predicated region
  $region14: #{ijepa_forward.17} parent=0 // pred_check
    _
  $region15: #{ijepa_forward.17} parent=0 // pred_check_branch
    %16 = sbr.rel (0) target = $region17
  $region16: #{ijepa_forward.17} parent=0 // pred_region
    _
  $region17: #{ijepa_forward.17} parent=0 // pred_fallthru
    _
  %p18 = scmp.eq.s32.totalorder 0, 0
  // Predicated region
  $region18: #{ijepa_forward.17} parent=0 // pred_check
    %p19 = pneg %p18
  $region19: #{ijepa_forward.17} parent=0 // pred_check_branch
    %21 = sbr.rel (%p19) target = $region21
  $region20: #{ijepa_forward.17} parent=0 // pred_region
    %vm22 = vcmask 261120
    %23 = vst.msk [vmem:[#allocation2] sm:$0xff] %vm22, 0.0
    %24 = vst.msk [vmem:[#allocation2 + $0x8] sm:$0xff] %vm22, 0.0
    %25 = vst.msk [vmem:[#allocation2 + $0x10] sm:$0xff] %vm22, 0.0
    %26 = vst.msk [vmem:[#allocation2 + $0x18] sm:$0xff] %vm22, 0.0
  $region21: #{ijepa_forward.17} parent=0 // pred_fallthru
    _
  %v27 = vld [vmem:[#allocation2] sm:$0xff]
  %v28 = vld [vmem:[#allocation2 + $0x8] sm:$0xff]
  %v29 = vld [vmem:[#allocation2 + $0x10] sm:$0xff]
  %v30 = vld [vmem:[#allocation2 + $0x18] sm:$0xff]
  %v31 = vld [vmem:[%s0] sm:$0xff]
  %v32 = vld [vmem:[%s0 + $0x8] sm:$0xff]
  %v33 = vld [vmem:[%s0 + $0x10] sm:$0xff]
  %v34 = vld [vmem:[%s0 + $0x18] sm:$0xff]
  %v35 = vpack.c.bf16 %v32, %v31
  %v36 = vpack.c.bf16 %v34, %v33
  %v37 = vld [vmem:[%s1] sm:$0xf]
  %v38 = vld [vmem:[%s1 + $0x4] sm:$0xf]
  %v39 = vld [vmem:[%s1 + $0x8] sm:$0xf]
  %v40 = vld [vmem:[%s1 + $0xc] sm:$0xf]
  %v45 = vunpack.c.l.b16 %v37
  %v46 = vunpack.c.l.b16 %v38
  %v47 = vunpack.c.l.b16 %v39
  %v48 = vunpack.c.l.b16 %v40
  %v49 = vpack.c.b16 %v46, %v45
  %v50 = vpack.c.b16 %v48, %v47
  %vm53 = vcmask 261120
  %v55 = vsel %vm53, %v35, 0
  %v58 = vsel %vm53, %v36, 0
  %60 = vmatprep.subr.bf16.mxu0 0
  %61 = vmatpush1.bf16.msra.mxu0 0
  %62 = vmatprep.subr.bf16.mxu0 0
  %63 = vmatpush1.bf16.msra.mxu0 0
  %64 = vmatprep.subr.bf16.mxu0 0
  %65 = vmatpush1.bf16.msra.mxu0 0
  %66 = vmatprep.subr.bf16.mxu0 0
  %67 = vmatpush1.bf16.msra.mxu0 0
  %68 = vmatprep.subr.bf16.mxu0 0
  %69 = vmatpush1.bf16.msra.mxu0 0
  %70 = vmatprep.subr.bf16.mxu0 0
  %71 = vmatpush1.bf16.msra.mxu0 0
  %72 = vmatprep.subr.bf16.mxu0 0
  %73 = vmatpush1.bf16.msra.mxu0 %v50
  %74 = vmatprep.subr.bf16.mxu0 0
  %75 = vmatpush1.bf16.msra.mxu0 %v49
  %76 = vmatprep.subr.bf16.mxu0 0
  %77 = vmatpush2.bf16.msra.mxu0 0
  %78 = vmatprep.subr.bf16.mxu0 0
  %79 = vmatpush2.bf16.msra.mxu0 0
  %80 = vmatprep.subr.bf16.mxu0 0
  %81 = vmatpush2.bf16.msra.mxu0 0
  %82 = vmatprep.subr.bf16.mxu0 0
  %83 = vmatpush2.bf16.msra.mxu0 0
  %84 = vmatprep.subr.bf16.mxu0 0
  %85 = vmatpush2.bf16.msra.mxu0 0
  %86 = vmatprep.subr.bf16.mxu0 0
  %87 = vmatpush2.bf16.msra.mxu0 0
  %88 = vmatprep.subr.bf16.mxu0 0
  %89 = vmatpush2.bf16.msra.mxu0 0
  %90 = vmatprep.subr.bf16.mxu0 0
  %91 = vmatpush2.bf16.msra.mxu0 0
  %92 = vmatprep.mubr.bf16.mxu0 0
  %93 = vmatmul.mubr.bf16.gmra.mxu0 %v55
  %v94 = vpop.f32.mrf.mxu0
  %v95 = vadd.f32 0.0, %v94
  %v96 = vpop.f32.mrf.mxu0
  %v97 = vpop.f32.mrf.mxu0
  %v98 = vadd.f32 0.0, %v97
  %v99 = vpop.f32.mrf.mxu0
  %100 = vmatprep.mubr.bf16.mxu0 0
  %101 = vmatmul.mubr.bf16.gmra.mxu0 %v58
  %v102 = vpop.f32.mrf.mxu0
  %v103 = vadd.f32 0.0, %v102
  %v104 = vpop.f32.mrf.mxu0
  %v105 = vpop.f32.mrf.mxu0
  %v106 = vadd.f32 0.0, %v105
  %v107 = vpop.f32.mrf.mxu0
  %108 = vdwg.mxu0
  %v109 = vadd.f32 %v27, %v95
  %v110 = vadd.f32 %v28, %v98
  %v111 = vadd.f32 %v29, %v103
  %v112 = vadd.f32 %v30, %v106
  %113 = vst.msk [vmem:[#allocation2] sm:$0xff] %vm53, %v109
  %114 = vst.msk [vmem:[#allocation2 + $0x8] sm:$0xff] %vm53, %v110
  %115 = vst.msk [vmem:[#allocation2 + $0x10] sm:$0xff] %vm53, %v111
  %116 = vst.msk [vmem:[#allocation2 + $0x18] sm:$0xff] %vm53, %v112
  // Predicated region
  $region22: #{ijepa_forward.17} parent=0 // pred_check
    %p117 = pneg %p18
  $region23: #{ijepa_forward.17} parent=0 // pred_check_branch
    %119 = sbr.rel (%p117) target = $region25
  $region24: #{ijepa_forward.17} parent=0 // pred_region
    %v120 = vld [vmem:[#allocation2] sm:$0xff]
    %v121 = vld [vmem:[#allocation2 + $0x8] sm:$0xff]
    %v122 = vld [vmem:[#allocation2 + $0x10] sm:$0xff]
    %v123 = vld [vmem:[#allocation2 + $0x18] sm:$0xff]
    %v124 = vld [vmem:[%s2] sm:$0x1]
    %v126 = vlaneseq
    %v127 = vshrl.u32 %v126, 7
    %v128 = vsub.s32 0, %v127
    %v129 = vrot.slane %v124, %v128
    %v131 = vadd.f32 %v120, %v129
    %v132 = vadd.f32 %v121, %v129
    %v133 = vadd.f32 %v122, %v129
    %v134 = vadd.f32 %v123, %v129
    %v135 = vld [vmem:[%s3] sm:$0xff]
    %v136 = vld [vmem:[%s3 + $0x8] sm:$0xff]
    %v137 = vld [vmem:[%s3 + $0x10] sm:$0xff]
    %v138 = vld [vmem:[%s3 + $0x18] sm:$0xff]
    %v139 = vadd.f32 %v131, %v135
    %v140 = vadd.f32 %v132, %v136
    %v141 = vadd.f32 %v133, %v137
    %v142 = vadd.f32 %v134, %v138
    %143 = vst.msk [vmem:[%s4] sm:$0xff] %vm53, %v139
    %144 = vst.msk [vmem:[%s4 + $0x8] sm:$0xff] %vm53, %v140
    %145 = vst.msk [vmem:[%s4 + $0x10] sm:$0xff] %vm53, %v141
    %146 = vst.msk [vmem:[%s4 + $0x18] sm:$0xff] %vm53, %v142
  $region25: #{ijepa_forward.17} parent=0 // pred_fallthru
    _
  // Predicated region
  $region26: #{ijepa_forward.17} parent=0 // pred_check
    _
  $region27: #{ijepa_forward.17} parent=0 // pred_check_branch
    %148 = sbr.rel (0) target = $region29
  $region28: #{ijepa_forward.17} parent=0 // pred_region
    _
  $region29: #{ijepa_forward.17} parent=0 // pred_fallthru
    _
  // Predicated region
  $region30: #{ijepa_forward.17} parent=0 // pred_check
    _
  $region31: #{ijepa_forward.17} parent=0 // pred_check_branch
    %150 = sbr.rel (0) target = $region33
  $region32: #{ijepa_forward.17} parent=0 // pred_region
    _
  $region33: #{ijepa_forward.17} parent=0 // pred_fallthru
    _

// kernel: ijepa_forward.18
$region0: #{ijepa_forward.18}
  #allocation0 [shape = 'u32[]', space=smem, size = 0x4, offset = 0x4, fixed_abs, tag = 'smem constant byte address 0x4 - core index']
  #allocation1 [shape = 'u32[144,128]{1,0:T(1,128)}', space=vmem, size = 0x12000, scoped, tag = 'internal scratch']
  %s0 = inlined_call_operand.vmem [shape: f32[32,32], index: 0, kind: input, shape index: {}]
  %s1 = inlined_call_operand.vmem [shape: f32[1,32], index: 1, kind: input, shape index: {}]
  %s2 = inlined_call_operand.vmem [shape: f32[1,32], index: 2, kind: input, shape index: {}]
  %s3 = inlined_call_operand.vmem [shape: bf16[32,128], index: 3, kind: input, shape index: {}]
  %s4 = inlined_call_operand.vmem [shape: f32[1,128], index: 4, kind: input, shape index: {}]
  %s5 = inlined_call_operand.vmem [shape: f32[32,128], index: 5, kind: output, shape index: {}]
  %s6 = sld [smem:[#allocation0]]
  $region30: #{ijepa_forward.18} parent=0
    _
  %s8 = ssub.s32 1, %s6
  %s9 = scalar_select 0, %s8, %s6
  // Predicated region
  $region2: #{ijepa_forward.18} parent=0 // pred_check
    _
  $region3: #{ijepa_forward.18} parent=0 // pred_check_branch
    %11 = sbr.rel (0) target = $region5
  $region4: #{ijepa_forward.18} parent=0 // pred_region
    _
  $region5: #{ijepa_forward.18} parent=0 // pred_fallthru
    _
  // Predicated region
  $region6: #{ijepa_forward.18} parent=0 // pred_check
    _
  $region7: #{ijepa_forward.18} parent=0 // pred_check_branch
    %13 = sbr.rel (0) target = $region9
  $region8: #{ijepa_forward.18} parent=0 // pred_region
    _
  $region9: #{ijepa_forward.18} parent=0 // pred_fallthru
    _
  // Predicated region
  $region10: #{ijepa_forward.18} parent=0 // pred_check
    _
  $region11: #{ijepa_forward.18} parent=0 // pred_check_branch
    %15 = sbr.rel (0) target = $region13
  $region12: #{ijepa_forward.18} parent=0 // pred_region
    _
  $region13: #{ijepa_forward.18} parent=0 // pred_fallthru
    _
  // Predicated region
  $region14: #{ijepa_forward.18} parent=0 // pred_check
    _
  $region15: #{ijepa_forward.18} parent=0 // pred_check_branch
    %17 = sbr.rel (0) target = $region17
  $region16: #{ijepa_forward.18} parent=0 // pred_region
    _
  $region17: #{ijepa_forward.18} parent=0 // pred_fallthru
    _
  // Predicated region
  $region18: #{ijepa_forward.18} parent=0 // pred_check
    _
  $region19: #{ijepa_forward.18} parent=0 // pred_check_branch
    %19 = sbr.rel (0) target = $region21
  $region20: #{ijepa_forward.18} parent=0 // pred_region
    _
  $region21: #{ijepa_forward.18} parent=0 // pred_fallthru
    _
  %v21 = vld [vmem:[%s0] sm:$0xff]
  %v22 = vld [vmem:[%s0 + $0x8] sm:$0xff]
  %v23 = vld [vmem:[%s0 + $0x10] sm:$0xff]
  %v24 = vld [vmem:[%s0 + $0x18] sm:$0xff]
  %vm25 = vcmask 261120
  %v26 = vsel %vm25, %v21, 0.0
  %27 = vadd.xlane.f32.xlu0 %v26
  %v28 = vpop.xlane.xlu0 %27
  %v29 = vsel %vm25, %v22, 0.0
  %30 = vadd.xlane.f32.xlu0 %v29
  %v31 = vpop.xlane.xlu0 %30
  %v32 = vsel %vm25, %v23, 0.0
  %33 = vadd.xlane.f32.xlu0 %v32
  %v34 = vpop.xlane.xlu0 %33
  %v35 = vsel %vm25, %v24, 0.0
  %36 = vadd.xlane.f32.xlu0 %v35
  %v37 = vpop.xlane.xlu0 %36
  %v38 = vrcp.pop 32.0
  %v39 = vmul.f32 %v28, %v38
  %v40 = vmul.f32 %v31, %v38
  %v41 = vmul.f32 %v34, %v38
  %v42 = vmul.f32 %v37, %v38
  %v43 = vsub.f32 %v21, %v39
  %v44 = vsub.f32 %v22, %v40
  %v45 = vsub.f32 %v23, %v41
  %v46 = vsub.f32 %v24, %v42
  %v47 = vmul.f32 %v43, %v43
  %v48 = vmul.f32 %v44, %v44
  %v49 = vmul.f32 %v45, %v45
  %v50 = vmul.f32 %v46, %v46
  %v51 = vsel %vm25, %v47, 0.0
  %52 = vadd.xlane.f32.xlu0 %v51
  %v53 = vpop.xlane.xlu0 %52
  %v54 = vsel %vm25, %v48, 0.0
  %55 = vadd.xlane.f32.xlu0 %v54
  %v56 = vpop.xlane.xlu0 %55
  %v57 = vsel %vm25, %v49, 0.0
  %58 = vadd.xlane.f32.xlu0 %v57
  %v59 = vpop.xlane.xlu0 %58
  %v60 = vsel %vm25, %v50, 0.0
  %61 = vadd.xlane.f32.xlu0 %v60
  %v62 = vpop.xlane.xlu0 %61
  %v63 = vmul.f32 %v53, %v38
  %v64 = vmul.f32 %v56, %v38
  %v65 = vmul.f32 %v59, %v38
  %v66 = vmul.f32 %v62, %v38
  %v67 = vadd.f32 %v63, 1e-05
  %v68 = vadd.f32 %v64, 1e-05
  %v69 = vadd.f32 %v65, 1e-05
  %v70 = vadd.f32 %v66, 1e-05
  %v71 = vrsqrt.pop %v67
  %v72 = vrsqrt.pop %v68
  %v73 = vrsqrt.pop %v69
  %v74 = vrsqrt.pop %v70
  %v75 = vmul.f32 %v43, %v71
  %v76 = vmul.f32 %v44, %v72
  %v77 = vmul.f32 %v45, %v73
  %v78 = vmul.f32 %v46, %v74
  %v79 = vld [vmem:[%s1] sm:$0x1]
  %v81 = vlaneseq
  %v82 = vshrl.u32 %v81, 7
  %v83 = vsub.s32 0, %v82
  %v84 = vrot.slane %v79, %v83
  %v86 = vmul.f32 %v75, %v84
  %v87 = vmul.f32 %v76, %v84
  %v88 = vmul.f32 %v77, %v84
  %v89 = vmul.f32 %v78, %v84
  %v90 = vld [vmem:[%s2] sm:$0x1]
  %v92 = vlaneseq
  %v93 = vshrl.u32 %v92, 7
  %v94 = vsub.s32 0, %v93
  %v95 = vrot.slane %v90, %v94
  %v97 = vadd.f32 %v86, %v95
  %v98 = vadd.f32 %v87, %v95
  %v99 = vadd.f32 %v88, %v95
  %v100 = vadd.f32 %v89, %v95
  %v101 = vpack.c.bf16 %v98, %v97
  %v102 = vpack.c.bf16 %v100, %v99
  %v103 = vld [vmem:[%s3] sm:$0xf]
  %v104 = vld [vmem:[%s3 + $0x4] sm:$0xf]
  %v105 = vld [vmem:[%s3 + $0x8] sm:$0xf]
  %v106 = vld [vmem:[%s3 + $0xc] sm:$0xf]
  %v107 = vld [vmem:[%s4] sm:$0x1]
  %v109 = vlaneseq
  %v110 = vshrl.u32 %v109, 7
  %v111 = vsub.s32 0, %v110
  %v112 = vrot.slane %v107, %v111
  %v118 = vunpack.c.l.b16 %v103
  %v119 = vunpack.c.l.b16 %v104
  %v120 = vunpack.c.l.b16 %v105
  %v121 = vunpack.c.l.b16 %v106
  %v122 = vpack.c.b16 %v119, %v118
  %v123 = vpack.c.b16 %v121, %v120
  %v127 = vsel %vm25, %v101, 0
  %v130 = vsel %vm25, %v102, 0
  %132 = vmatprep.subr.bf16.mxu0 0
  %133 = vmatpush1.bf16.msra.mxu0 0
  %134 = vmatprep.subr.bf16.mxu0 0
  %135 = vmatpush1.bf16.msra.mxu0 0
  %136 = vmatprep.subr.bf16.mxu0 0
  %137 = vmatpush1.bf16.msra.mxu0 0
  %138 = vmatprep.subr.bf16.mxu0 0
  %139 = vmatpush1.bf16.msra.mxu0 0
  %140 = vmatprep.subr.bf16.mxu0 0
  %141 = vmatpush1.bf16.msra.mxu0 0
  %142 = vmatprep.subr.bf16.mxu0 0
  %143 = vmatpush1.bf16.msra.mxu0 0
  %144 = vmatprep.subr.bf16.mxu0 0
  %145 = vmatpush1.bf16.msra.mxu0 %v123
  %146 = vmatprep.subr.bf16.mxu0 0
  %147 = vmatpush1.bf16.msra.mxu0 %v122
  %148 = vmatprep.subr.bf16.mxu0 0
  %149 = vmatpush2.bf16.msra.mxu0 0
  %150 = vmatprep.subr.bf16.mxu0 0
  %151 = vmatpush2.bf16.msra.mxu0 0
  %152 = vmatprep.subr.bf16.mxu0 0
  %153 = vmatpush2.bf16.msra.mxu0 0
  %154 = vmatprep.subr.bf16.mxu0 0
  %155 = vmatpush2.bf16.msra.mxu0 0
  %156 = vmatprep.subr.bf16.mxu0 0
  %157 = vmatpush2.bf16.msra.mxu0 0
  %158 = vmatprep.subr.bf16.mxu0 0
  %159 = vmatpush2.bf16.msra.mxu0 0
  %160 = vmatprep.subr.bf16.mxu0 0
  %161 = vmatpush2.bf16.msra.mxu0 0
  %162 = vmatprep.subr.bf16.mxu0 0
  %163 = vmatpush2.bf16.msra.mxu0 0
  %164 = vmatprep.mubr.bf16.mxu0 0
  %165 = vmatmul.mubr.bf16.gmra.mxu0 %v127
  %v166 = vpop.f32.mrf.mxu0
  %v167 = vadd.f32 %v112, %v166
  %v168 = vpop.f32.mrf.mxu0
  %v169 = vpop.f32.mrf.mxu0
  %v170 = vadd.f32 %v112, %v169
  %v171 = vpop.f32.mrf.mxu0
  %172 = vmatprep.mubr.bf16.mxu0 0
  %173 = vmatmul.mubr.bf16.gmra.mxu0 %v130
  %v174 = vpop.f32.mrf.mxu0
  %v175 = vadd.f32 %v112, %v174
  %v176 = vpop.f32.mrf.mxu0
  %v177 = vpop.f32.mrf.mxu0
  %v178 = vadd.f32 %v112, %v177
  %v179 = vpop.f32.mrf.mxu0
  %180 = vdwg.mxu0
  %v181 = vmul.f32 %v167, 0.5
  %v182 = vmul.f32 %v170, 0.5
  %v183 = vmul.f32 %v175, 0.5
  %v184 = vmul.f32 %v178, 0.5
  %v185 = vmul.f32 %v167, 0.044715
  %v186 = vmul.f32 %v170, 0.044715
  %v187 = vmul.f32 %v175, 0.044715
  %v188 = vmul.f32 %v178, 0.044715
  %v189 = vmul.f32 %v185, %v167
  %v190 = vmul.f32 %v186, %v170
  %v191 = vmul.f32 %v187, %v175
  %v192 = vmul.f32 %v188, %v178
  %v193 = vmul.f32 %v189, %v167
  %v194 = vmul.f32 %v190, %v170
  %v195 = vmul.f32 %v191, %v175
  %v196 = vmul.f32 %v192, %v178
  %v197 = vadd.f32 %v167, %v193
  %v198 = vadd.f32 %v170, %v194
  %v199 = vadd.f32 %v175, %v195
  %v200 = vadd.f32 %v178, %v196
  %v201 = vmul.f32 %v197, 0.7978846
  %v202 = vmul.f32 %v198, 0.7978846
  %v203 = vmul.f32 %v199, 0.7978846
  %v204 = vmul.f32 %v200, 0.7978846
  %v205 = vtanh.pop %v201
  %v206 = vtanh.pop %v202
  %v207 = vtanh.pop %v203
  %v208 = vtanh.pop %v204
  %v209 = vadd.f32 %v205, 1.0
  %v210 = vadd.f32 %v206, 1.0
  %v211 = vadd.f32 %v207, 1.0
  %v212 = vadd.f32 %v208, 1.0
  %v213 = vmul.f32 %v181, %v209
  %v214 = vmul.f32 %v182, %v210
  %v215 = vmul.f32 %v183, %v211
  %v216 = vmul.f32 %v184, %v212
  %217 = vst [vmem:[%s5] sm:$0xff] %v213
  %218 = vst [vmem:[%s5 + $0x8] sm:$0xff] %v214
  %219 = vst [vmem:[%s5 + $0x10] sm:$0xff] %v215
  %220 = vst [vmem:[%s5 + $0x18] sm:$0xff] %v216
  // Predicated region
  $region22: #{ijepa_forward.18} parent=0 // pred_check
    _
  $region23: #{ijepa_forward.18} parent=0 // pred_check_branch
    %222 = sbr.rel (0) target = $region25
  $region24: #{ijepa_forward.18} parent=0 // pred_region
    _
  $region25: #{ijepa_forward.18} parent=0 // pred_fallthru
    _
  // Predicated region
  $region26: #{ijepa_forward.18} parent=0 // pred_check
    _
  $region27: #{ijepa_forward.18} parent=0 // pred_check_branch
    %224 = sbr.rel (0) target = $region29
  $region28: #{ijepa_forward.18} parent=0 // pred_region
    _
  $region29: #{ijepa_forward.18} parent=0 // pred_fallthru
    _

// kernel: ijepa_forward.19
$region0: #{ijepa_forward.19}
  #allocation0 [shape = 'u32[]', space=smem, size = 0x4, offset = 0x4, fixed_abs, tag = 'smem constant byte address 0x4 - core index']
  #allocation1 [shape = 'u32[144,128]{1,0:T(1,128)}', space=vmem, size = 0x12000, scoped, tag = 'internal scratch']
  #allocation2 [shape = 'f32[32,32]{1,0:T(8,128)}', space=vmem, size = 0x4000, scoped, tag = 'scratch operand']
  %s0 = inlined_call_operand.vmem [shape: f32[32,128], index: 0, kind: input, shape index: {}]
  %s1 = inlined_call_operand.vmem [shape: bf16[128,32], index: 1, kind: input, shape index: {}]
  %s2 = inlined_call_operand.vmem [shape: f32[1,32], index: 2, kind: input, shape index: {}]
  %s3 = inlined_call_operand.vmem [shape: f32[32,32], index: 3, kind: input, shape index: {}]
  %s4 = inlined_call_operand.vmem [shape: f32[32,32], index: 4, kind: output, shape index: {}]
  %s5 = sld [smem:[#allocation0]]
  $region34: #{ijepa_forward.19} parent=0
    _
  %s7 = ssub.s32 1, %s5
  %s8 = scalar_select 0, %s7, %s5
  // Predicated region
  $region2: #{ijepa_forward.19} parent=0 // pred_check
    _
  $region3: #{ijepa_forward.19} parent=0 // pred_check_branch
    %10 = sbr.rel (0) target = $region5
  $region4: #{ijepa_forward.19} parent=0 // pred_region
    _
  $region5: #{ijepa_forward.19} parent=0 // pred_fallthru
    _
  // Predicated region
  $region6: #{ijepa_forward.19} parent=0 // pred_check
    _
  $region7: #{ijepa_forward.19} parent=0 // pred_check_branch
    %12 = sbr.rel (0) target = $region9
  $region8: #{ijepa_forward.19} parent=0 // pred_region
    _
  $region9: #{ijepa_forward.19} parent=0 // pred_fallthru
    _
  // Predicated region
  $region10: #{ijepa_forward.19} parent=0 // pred_check
    _
  $region11: #{ijepa_forward.19} parent=0 // pred_check_branch
    %14 = sbr.rel (0) target = $region13
  $region12: #{ijepa_forward.19} parent=0 // pred_region
    _
  $region13: #{ijepa_forward.19} parent=0 // pred_fallthru
    _
  // Predicated region
  $region14: #{ijepa_forward.19} parent=0 // pred_check
    _
  $region15: #{ijepa_forward.19} parent=0 // pred_check_branch
    %16 = sbr.rel (0) target = $region17
  $region16: #{ijepa_forward.19} parent=0 // pred_region
    _
  $region17: #{ijepa_forward.19} parent=0 // pred_fallthru
    _
  %p18 = scmp.eq.s32.totalorder 0, 0
  // Predicated region
  $region18: #{ijepa_forward.19} parent=0 // pred_check
    %p19 = pneg %p18
  $region19: #{ijepa_forward.19} parent=0 // pred_check_branch
    %21 = sbr.rel (%p19) target = $region21
  $region20: #{ijepa_forward.19} parent=0 // pred_region
    %vm22 = vcmask 261120
    %23 = vst.msk [vmem:[#allocation2] sm:$0xff] %vm22, 0.0
    %24 = vst.msk [vmem:[#allocation2 + $0x8] sm:$0xff] %vm22, 0.0
    %25 = vst.msk [vmem:[#allocation2 + $0x10] sm:$0xff] %vm22, 0.0
    %26 = vst.msk [vmem:[#allocation2 + $0x18] sm:$0xff] %vm22, 0.0
  $region21: #{ijepa_forward.19} parent=0 // pred_fallthru
    _
  %v27 = vld [vmem:[#allocation2] sm:$0xff]
  %v28 = vld [vmem:[#allocation2 + $0x8] sm:$0xff]
  %v29 = vld [vmem:[#allocation2 + $0x10] sm:$0xff]
  %v30 = vld [vmem:[#allocation2 + $0x18] sm:$0xff]
  %v31 = vld [vmem:[%s0] sm:$0xff]
  %v32 = vld [vmem:[%s0 + $0x8] sm:$0xff]
  %v33 = vld [vmem:[%s0 + $0x10] sm:$0xff]
  %v34 = vld [vmem:[%s0 + $0x18] sm:$0xff]
  %v35 = vpack.c.bf16 %v32, %v31
  %v36 = vpack.c.bf16 %v34, %v33
  %v37 = vld [vmem:[%s1] sm:$0xf]
  %v38 = vld [vmem:[%s1 + $0x4] sm:$0xf]
  %v39 = vld [vmem:[%s1 + $0x8] sm:$0xf]
  %v40 = vld [vmem:[%s1 + $0xc] sm:$0xf]
  %v41 = vld [vmem:[%s1 + $0x10] sm:$0xf]
  %v42 = vld [vmem:[%s1 + $0x14] sm:$0xf]
  %v43 = vld [vmem:[%s1 + $0x18] sm:$0xf]
  %v44 = vld [vmem:[%s1 + $0x1c] sm:$0xf]
  %v45 = vld [vmem:[%s1 + $0x20] sm:$0xf]
  %v46 = vld [vmem:[%s1 + $0x24] sm:$0xf]
  %v47 = vld [vmem:[%s1 + $0x28] sm:$0xf]
  %v48 = vld [vmem:[%s1 + $0x2c] sm:$0xf]
  %v49 = vld [vmem:[%s1 + $0x30] sm:$0xf]
  %v50 = vld [vmem:[%s1 + $0x34] sm:$0xf]
  %v51 = vld [vmem:[%s1 + $0x38] sm:$0xf]
  %v52 = vld [vmem:[%s1 + $0x3c] sm:$0xf]
  %v69 = vunpack.c.l.b16 %v37
  %v70 = vunpack.c.l.b16 %v38
  %v71 = vunpack.c.l.b16 %v39
  %v72 = vunpack.c.l.b16 %v40
  %v73 = vunpack.c.l.b16 %v41
  %v74 = vunpack.c.l.b16 %v42
  %v75 = vunpack.c.l.b16 %v43
  %v76 = vunpack.c.l.b16 %v44
  %v77 = vunpack.c.l.b16 %v45
  %v78 = vunpack.c.l.b16 %v46
  %v79 = vunpack.c.l.b16 %v47
  %v80 = vunpack.c.l.b16 %v48
  %v81 = vunpack.c.l.b16 %v49
  %v82 = vunpack.c.l.b16 %v50
  %v83 = vunpack.c.l.b16 %v51
  %v84 = vunpack.c.l.b16 %v52
  %v85 = vpack.c.b16 %v70, %v69
  %v86 = vpack.c.b16 %v72, %v71
  %v87 = vpack.c.b16 %v74, %v73
  %v88 = vpack.c.b16 %v76, %v75
  %v89 = vpack.c.b16 %v78, %v77
  %v90 = vpack.c.b16 %v80, %v79
  %v91 = vpack.c.b16 %v82, %v81
  %v92 = vpack.c.b16 %v84, %v83
  %101 = vmatprep.subr.bf16.mxu0 0
  %102 = vmatpush1.bf16.msra.mxu0 %v92
  %103 = vmatprep.subr.bf16.mxu0 0
  %104 = vmatpush1.bf16.msra.mxu0 %v91
  %105 = vmatprep.subr.bf16.mxu0 0
  %106 = vmatpush1.bf16.msra.mxu0 %v90
  %107 = vmatprep.subr.bf16.mxu0 0
  %108 = vmatpush1.bf16.msra.mxu0 %v89
  %109 = vmatprep.subr.bf16.mxu0 0
  %110 = vmatpush1.bf16.msra.mxu0 %v88
  %111 = vmatprep.subr.bf16.mxu0 0
  %112 = vmatpush1.bf16.msra.mxu0 %v87
  %113 = vmatprep.subr.bf16.mxu0 0
  %114 = vmatpush1.bf16.msra.mxu0 %v86
  %115 = vmatprep.subr.bf16.mxu0 0
  %116 = vmatpush1.bf16.msra.mxu0 %v85
  %117 = vmatprep.subr.bf16.mxu0 0
  %118 = vmatpush2.bf16.msra.mxu0 0
  %119 = vmatprep.subr.bf16.mxu0 0
  %120 = vmatpush2.bf16.msra.mxu0 0
  %121 = vmatprep.subr.bf16.mxu0 0
  %122 = vmatpush2.bf16.msra.mxu0 0
  %123 = vmatprep.subr.bf16.mxu0 0
  %124 = vmatpush2.bf16.msra.mxu0 0
  %125 = vmatprep.subr.bf16.mxu0 0
  %126 = vmatpush2.bf16.msra.mxu0 0
  %127 = vmatprep.subr.bf16.mxu0 0
  %128 = vmatpush2.bf16.msra.mxu0 0
  %129 = vmatprep.subr.bf16.mxu0 0
  %130 = vmatpush2.bf16.msra.mxu0 0
  %131 = vmatprep.subr.bf16.mxu0 0
  %132 = vmatpush2.bf16.msra.mxu0 0
  %133 = vmatprep.mubr.bf16.mxu0 0
  %134 = vmatmul.mubr.bf16.gmra.mxu0 %v35
  %v135 = vpop.f32.mrf.mxu0
  %v136 = vadd.f32 0.0, %v135
  %v137 = vpop.f32.mrf.mxu0
  %v138 = vpop.f32.mrf.mxu0
  %v139 = vadd.f32 0.0, %v138
  %v140 = vpop.f32.mrf.mxu0
  %141 = vmatprep.mubr.bf16.mxu0 0
  %142 = vmatmul.mubr.bf16.gmra.mxu0 %v36
  %v143 = vpop.f32.mrf.mxu0
  %v144 = vadd.f32 0.0, %v143
  %v145 = vpop.f32.mrf.mxu0
  %v146 = vpop.f32.mrf.mxu0
  %v147 = vadd.f32 0.0, %v146
  %v148 = vpop.f32.mrf.mxu0
  %149 = vdwg.mxu0
  %v150 = vadd.f32 %v27, %v136
  %v151 = vadd.f32 %v28, %v139
  %v152 = vadd.f32 %v29, %v144
  %v153 = vadd.f32 %v30, %v147
  %vm154 = vcmask 261120
  %155 = vst.msk [vmem:[#allocation2] sm:$0xff] %vm154, %v150
  %156 = vst.msk [vmem:[#allocation2 + $0x8] sm:$0xff] %vm154, %v151
  %157 = vst.msk [vmem:[#allocation2 + $0x10] sm:$0xff] %vm154, %v152
  %158 = vst.msk [vmem:[#allocation2 + $0x18] sm:$0xff] %vm154, %v153
  // Predicated region
  $region22: #{ijepa_forward.19} parent=0 // pred_check
    %p159 = pneg %p18
  $region23: #{ijepa_forward.19} parent=0 // pred_check_branch
    %161 = sbr.rel (%p159) target = $region25
  $region24: #{ijepa_forward.19} parent=0 // pred_region
    %v162 = vld [vmem:[#allocation2] sm:$0xff]
    %v163 = vld [vmem:[#allocation2 + $0x8] sm:$0xff]
    %v164 = vld [vmem:[#allocation2 + $0x10] sm:$0xff]
    %v165 = vld [vmem:[#allocation2 + $0x18] sm:$0xff]
    %v166 = vld [vmem:[%s2] sm:$0x1]
    %v168 = vlaneseq
    %v169 = vshrl.u32 %v168, 7
    %v170 = vsub.s32 0, %v169
    %v171 = vrot.slane %v166, %v170
    %v173 = vadd.f32 %v162, %v171
    %v174 = vadd.f32 %v163, %v171
    %v175 = vadd.f32 %v164, %v171
    %v176 = vadd.f32 %v165, %v171
    %v177 = vld [vmem:[%s3] sm:$0xff]
    %v178 = vld [vmem:[%s3 + $0x8] sm:$0xff]
    %v179 = vld [vmem:[%s3 + $0x10] sm:$0xff]
    %v180 = vld [vmem:[%s3 + $0x18] sm:$0xff]
    %v181 = vadd.f32 %v173, %v177
    %v182 = vadd.f32 %v174, %v178
    %v183 = vadd.f32 %v175, %v179
    %v184 = vadd.f32 %v176, %v180
    %185 = vst.msk [vmem:[%s4] sm:$0xff] %vm154, %v181
    %186 = vst.msk [vmem:[%s4 + $0x8] sm:$0xff] %vm154, %v182
    %187 = vst.msk [vmem:[%s4 + $0x10] sm:$0xff] %vm154, %v183
    %188 = vst.msk [vmem:[%s4 + $0x18] sm:$0xff] %vm154, %v184
  $region25: #{ijepa_forward.19} parent=0 // pred_fallthru
    _
  // Predicated region
  $region26: #{ijepa_forward.19} parent=0 // pred_check
    _
  $region27: #{ijepa_forward.19} parent=0 // pred_check_branch
    %190 = sbr.rel (0) target = $region29
  $region28: #{ijepa_forward.19} parent=0 // pred_region
    _
  $region29: #{ijepa_forward.19} parent=0 // pred_fallthru
    _
  // Predicated region
  $region30: #{ijepa_forward.19} parent=0 // pred_check
    _
  $region31: #{ijepa_forward.19} parent=0 // pred_check_branch
    %192 = sbr.rel (0) target = $region33
  $region32: #{ijepa_forward.19} parent=0 // pred_region
    _
  $region33: #{ijepa_forward.19} parent=0 // pred_fallthru
    _

// kernel: ijepa_forward.16
$region0: #{ijepa_forward.16}
  #allocation0 [shape = 'u32[]', space=smem, size = 0x4, offset = 0x4, fixed_abs, tag = 'smem constant byte address 0x4 - core index']
  #allocation1 [shape = 'u32[144,128]{1,0:T(1,128)}', space=vmem, size = 0x12000, scoped, tag = 'internal scratch']
  %s0 = inlined_call_operand.vmem [shape: f32[4,8,32], index: 0, kind: input, shape index: {}]
  %s1 = inlined_call_operand.vmem [shape: f32[4,8,32], index: 1, kind: input, shape index: {}]
  %s2 = inlined_call_operand.vmem [shape: f32[4,8,32], index: 2, kind: input, shape index: {}]
  %s3 = inlined_call_operand.vmem [shape: f32[4,8,32], index: 3, kind: output, shape index: {}]
  %s4 = sld [smem:[#allocation0]]
  $region22: #{ijepa_forward.16} parent=0
    _
  %s6 = ssub.s32 1, %s4
  %s7 = scalar_select 0, %s6, %s4
  // Predicated region
  $region2: #{ijepa_forward.16} parent=0 // pred_check
    _
  $region3: #{ijepa_forward.16} parent=0 // pred_check_branch
    %9 = sbr.rel (0) target = $region5
  $region4: #{ijepa_forward.16} parent=0 // pred_region
    _
  $region5: #{ijepa_forward.16} parent=0 // pred_fallthru
    _
  // Predicated region
  $region6: #{ijepa_forward.16} parent=0 // pred_check
    _
  $region7: #{ijepa_forward.16} parent=0 // pred_check_branch
    %11 = sbr.rel (0) target = $region9
  $region8: #{ijepa_forward.16} parent=0 // pred_region
    _
  $region9: #{ijepa_forward.16} parent=0 // pred_fallthru
    _
  // Predicated region
  $region10: #{ijepa_forward.16} parent=0 // pred_check
    _
  $region11: #{ijepa_forward.16} parent=0 // pred_check_branch
    %13 = sbr.rel (0) target = $region13
  $region12: #{ijepa_forward.16} parent=0 // pred_region
    _
  $region13: #{ijepa_forward.16} parent=0 // pred_fallthru
    _
  %v15 = vld [vmem:[%s0] sm:$0xff]
  %v16 = vld [vmem:[%s0 + $0x8] sm:$0xff]
  %v17 = vld [vmem:[%s0 + $0x10] sm:$0xff]
  %v18 = vld [vmem:[%s0 + $0x18] sm:$0xff]
  %v19 = vld [vmem:[%s1] sm:$0xff]
  %v20 = vld [vmem:[%s1 + $0x8] sm:$0xff]
  %v21 = vld [vmem:[%s1 + $0x10] sm:$0xff]
  %v22 = vld [vmem:[%s1 + $0x18] sm:$0xff]
  %v23 = vld [vmem:[%s2] sm:$0xff]
  %v24 = vld [vmem:[%s2 + $0x8] sm:$0xff]
  %v25 = vld [vmem:[%s2 + $0x10] sm:$0xff]
  %v26 = vld [vmem:[%s2 + $0x18] sm:$0xff]
  %v27 = vpack.c.bf16 %v15, %v15
  %v28 = vpack.c.bf16 %v16, %v16
  %v29 = vpack.c.bf16 %v17, %v17
  %v30 = vpack.c.bf16 %v18, %v18
  %v31 = vpack.c.bf16 %v19, %v19
  %v32 = vpack.c.bf16 %v20, %v20
  %v33 = vpack.c.bf16 %v21, %v21
  %v34 = vpack.c.bf16 %v22, %v22
  %v35 = vpack.c.bf16 %v23, %v23
  %v36 = vpack.c.bf16 %v24, %v24
  %v37 = vpack.c.bf16 %v25, %v25
  %v38 = vpack.c.bf16 %v26, %v26
  %vm39 = vcmask 64512
  %v41 = vsel %vm39, %v27, 0
  %v44 = vsel %vm39, %v31, 0
  %46 = vmatprep.subr.bf16.mxu0 0
  %47 = vmatpush1.bf16.xpose.msra.mxu0 0
  %48 = vmatprep.subr.bf16.mxu0 0
  %49 = vmatpush1.bf16.xpose.msra.mxu0 0
  %50 = vmatprep.subr.bf16.mxu0 0
  %51 = vmatpush1.bf16.xpose.msra.mxu0 0
  %52 = vmatprep.subr.bf16.mxu0 0
  %53 = vmatpush1.bf16.xpose.msra.mxu0 0
  %54 = vmatprep.subr.bf16.mxu0 0
  %55 = vmatpush1.bf16.xpose.msra.mxu0 0
  %56 = vmatprep.subr.bf16.mxu0 0
  %57 = vmatpush1.bf16.xpose.msra.mxu0 0
  %58 = vmatprep.subr.bf16.mxu0 0
  %59 = vmatpush1.bf16.xpose.msra.mxu0 0
  %60 = vmatprep.subr.bf16.mxu0 0
  %61 = vmatpush1.bf16.xpose.msra.mxu0 %v44
  %62 = vmatprep.subr.bf16.mxu0 0
  %63 = vmatpush2.bf16.xpose.msra.mxu0 0
  %64 = vmatprep.subr.bf16.mxu0 0
  %65 = vmatpush2.bf16.xpose.msra.mxu0 0
  %66 = vmatprep.subr.bf16.mxu0 0
  %67 = vmatpush2.bf16.xpose.msra.mxu0 0
  %68 = vmatprep.subr.bf16.mxu0 0
  %69 = vmatpush2.bf16.xpose.msra.mxu0 0
  %70 = vmatprep.subr.bf16.mxu0 0
  %71 = vmatpush2.bf16.xpose.msra.mxu0 0
  %72 = vmatprep.subr.bf16.mxu0 0
  %73 = vmatpush2.bf16.xpose.msra.mxu0 0
  %74 = vmatprep.subr.bf16.mxu0 0
  %75 = vmatpush2.bf16.xpose.msra.mxu0 0
  %76 = vmatprep.subr.bf16.mxu0 0
  %77 = vmatpush2.bf16.xpose.msra.mxu0 0
  %78 = vmatprep.mubr.bf16.mxu0 0
  %79 = vmatmul.mubr.bf16.gmra.mxu0 %v41
  %v80 = vpop.f32.mrf.mxu0
  %v81 = vadd.f32 0.0, %v80
  %v82 = vpop.f32.mrf.mxu0
  %v83 = vpop.f32.mrf.mxu0
  %v84 = vpop.f32.mrf.mxu0
  %85 = vdwg.mxu0
  %v87 = vsel %vm39, %v28, 0
  %v90 = vsel %vm39, %v32, 0
  %92 = vmatprep.subr.bf16.mxu0 0
  %93 = vmatpush1.bf16.xpose.msra.mxu0 0
  %94 = vmatprep.subr.bf16.mxu0 0
  %95 = vmatpush1.bf16.xpose.msra.mxu0 0
  %96 = vmatprep.subr.bf16.mxu0 0
  %97 = vmatpush1.bf16.xpose.msra.mxu0 0
  %98 = vmatprep.subr.bf16.mxu0 0
  %99 = vmatpush1.bf16.xpose.msra.mxu0 0
  %100 = vmatprep.subr.bf16.mxu0 0
  %101 = vmatpush1.bf16.xpose.msra.mxu0 0
  %102 = vmatprep.subr.bf16.mxu0 0
  %103 = vmatpush1.bf16.xpose.msra.mxu0 0
  %104 = vmatprep.subr.bf16.mxu0 0
  %105 = vmatpush1.bf16.xpose.msra.mxu0 0
  %106 = vmatprep.subr.bf16.mxu0 0
  %107 = vmatpush1.bf16.xpose.msra.mxu0 %v90
  %108 = vmatprep.subr.bf16.mxu0 0
  %109 = vmatpush2.bf16.xpose.msra.mxu0 0
  %110 = vmatprep.subr.bf16.mxu0 0
  %111 = vmatpush2.bf16.xpose.msra.mxu0 0
  %112 = vmatprep.subr.bf16.mxu0 0
  %113 = vmatpush2.bf16.xpose.msra.mxu0 0
  %114 = vmatprep.subr.bf16.mxu0 0
  %115 = vmatpush2.bf16.xpose.msra.mxu0 0
  %116 = vmatprep.subr.bf16.mxu0 0
  %117 = vmatpush2.bf16.xpose.msra.mxu0 0
  %118 = vmatprep.subr.bf16.mxu0 0
  %119 = vmatpush2.bf16.xpose.msra.mxu0 0
  %120 = vmatprep.subr.bf16.mxu0 0
  %121 = vmatpush2.bf16.xpose.msra.mxu0 0
  %122 = vmatprep.subr.bf16.mxu0 0
  %123 = vmatpush2.bf16.xpose.msra.mxu0 0
  %124 = vmatprep.mubr.bf16.mxu0 0
  %125 = vmatmul.mubr.bf16.gmra.mxu0 %v87
  %v126 = vpop.f32.mrf.mxu0
  %v127 = vadd.f32 0.0, %v126
  %v128 = vpop.f32.mrf.mxu0
  %v129 = vpop.f32.mrf.mxu0
  %v130 = vpop.f32.mrf.mxu0
  %131 = vdwg.mxu0
  %v133 = vsel %vm39, %v29, 0
  %v136 = vsel %vm39, %v33, 0
  %138 = vmatprep.subr.bf16.mxu0 0
  %139 = vmatpush1.bf16.xpose.msra.mxu0 0
  %140 = vmatprep.subr.bf16.mxu0 0
  %141 = vmatpush1.bf16.xpose.msra.mxu0 0
  %142 = vmatprep.subr.bf16.mxu0 0
  %143 = vmatpush1.bf16.xpose.msra.mxu0 0
  %144 = vmatprep.subr.bf16.mxu0 0
  %145 = vmatpush1.bf16.xpose.msra.mxu0 0
  %146 = vmatprep.subr.bf16.mxu0 0
  %147 = vmatpush1.bf16.xpose.msra.mxu0 0
  %148 = vmatprep.subr.bf16.mxu0 0
  %149 = vmatpush1.bf16.xpose.msra.mxu0 0
  %150 = vmatprep.subr.bf16.mxu0 0
  %151 = vmatpush1.bf16.xpose.msra.mxu0 0
  %152 = vmatprep.subr.bf16.mxu0 0
  %153 = vmatpush1.bf16.xpose.msra.mxu0 %v136
  %154 = vmatprep.subr.bf16.mxu0 0
  %155 = vmatpush2.bf16.xpose.msra.mxu0 0
  %156 = vmatprep.subr.bf16.mxu0 0
  %157 = vmatpush2.bf16.xpose.msra.mxu0 0
  %158 = vmatprep.subr.bf16.mxu0 0
  %159 = vmatpush2.bf16.xpose.msra.mxu0 0
  %160 = vmatprep.subr.bf16.mxu0 0
  %161 = vmatpush2.bf16.xpose.msra.mxu0 0
  %162 = vmatprep.subr.bf16.mxu0 0
  %163 = vmatpush2.bf16.xpose.msra.mxu0 0
  %164 = vmatprep.subr.bf16.mxu0 0
  %165 = vmatpush2.bf16.xpose.msra.mxu0 0
  %166 = vmatprep.subr.bf16.mxu0 0
  %167 = vmatpush2.bf16.xpose.msra.mxu0 0
  %168 = vmatprep.subr.bf16.mxu0 0
  %169 = vmatpush2.bf16.xpose.msra.mxu0 0
  %170 = vmatprep.mubr.bf16.mxu0 0
  %171 = vmatmul.mubr.bf16.gmra.mxu0 %v133
  %v172 = vpop.f32.mrf.mxu0
  %v173 = vadd.f32 0.0, %v172
  %v174 = vpop.f32.mrf.mxu0
  %v175 = vpop.f32.mrf.mxu0
  %v176 = vpop.f32.mrf.mxu0
  %177 = vdwg.mxu0
  %v179 = vsel %vm39, %v30, 0
  %v182 = vsel %vm39, %v34, 0
  %184 = vmatprep.subr.bf16.mxu0 0
  %185 = vmatpush1.bf16.xpose.msra.mxu0 0
  %186 = vmatprep.subr.bf16.mxu0 0
  %187 = vmatpush1.bf16.xpose.msra.mxu0 0
  %188 = vmatprep.subr.bf16.mxu0 0
  %189 = vmatpush1.bf16.xpose.msra.mxu0 0
  %190 = vmatprep.subr.bf16.mxu0 0
  %191 = vmatpush1.bf16.xpose.msra.mxu0 0
  %192 = vmatprep.subr.bf16.mxu0 0
  %193 = vmatpush1.bf16.xpose.msra.mxu0 0
  %194 = vmatprep.subr.bf16.mxu0 0
  %195 = vmatpush1.bf16.xpose.msra.mxu0 0
  %196 = vmatprep.subr.bf16.mxu0 0
  %197 = vmatpush1.bf16.xpose.msra.mxu0 0
  %198 = vmatprep.subr.bf16.mxu0 0
  %199 = vmatpush1.bf16.xpose.msra.mxu0 %v182
  %200 = vmatprep.subr.bf16.mxu0 0
  %201 = vmatpush2.bf16.xpose.msra.mxu0 0
  %202 = vmatprep.subr.bf16.mxu0 0
  %203 = vmatpush2.bf16.xpose.msra.mxu0 0
  %204 = vmatprep.subr.bf16.mxu0 0
  %205 = vmatpush2.bf16.xpose.msra.mxu0 0
  %206 = vmatprep.subr.bf16.mxu0 0
  %207 = vmatpush2.bf16.xpose.msra.mxu0 0
  %208 = vmatprep.subr.bf16.mxu0 0
  %209 = vmatpush2.bf16.xpose.msra.mxu0 0
  %210 = vmatprep.subr.bf16.mxu0 0
  %211 = vmatpush2.bf16.xpose.msra.mxu0 0
  %212 = vmatprep.subr.bf16.mxu0 0
  %213 = vmatpush2.bf16.xpose.msra.mxu0 0
  %214 = vmatprep.subr.bf16.mxu0 0
  %215 = vmatpush2.bf16.xpose.msra.mxu0 0
  %216 = vmatprep.mubr.bf16.mxu0 0
  %217 = vmatmul.mubr.bf16.gmra.mxu0 %v179
  %v218 = vpop.f32.mrf.mxu0
  %v219 = vadd.f32 0.0, %v218
  %v220 = vpop.f32.mrf.mxu0
  %v221 = vpop.f32.mrf.mxu0
  %v222 = vpop.f32.mrf.mxu0
  %223 = vdwg.mxu0
  %v224 = vmul.f32 %v81, 0.35355338
  %v225 = vmul.f32 %v127, 0.35355338
  %v226 = vmul.f32 %v173, 0.35355338
  %v227 = vmul.f32 %v219, 0.35355338
  %v228 = vsel %vm39, %v224, -inf
  %229 = vmax.xlane.f32.xlu0 %v228
  %v230 = vpop.xlane.xlu0 %229
  %v231 = vsel %vm39, %v225, -inf
  %232 = vmax.xlane.f32.xlu0 %v231
  %v233 = vpop.xlane.xlu0 %232
  %v234 = vsel %vm39, %v226, -inf
  %235 = vmax.xlane.f32.xlu0 %v234
  %v236 = vpop.xlane.xlu0 %235
  %v237 = vsel %vm39, %v227, -inf
  %238 = vmax.xlane.f32.xlu0 %v237
  %v239 = vpop.xlane.xlu0 %238
  %v240 = vsub.f32 %v224, %v230
  %v241 = vsub.f32 %v225, %v233
  %v242 = vsub.f32 %v226, %v236
  %v243 = vsub.f32 %v227, %v239
  %v244 = vmul.f32 %v240, 1.442695
  %v245 = vpow.pop %v244
  %v246 = vmul.f32 %v241, 1.442695
  %v247 = vpow.pop %v246
  %v248 = vmul.f32 %v242, 1.442695
  %v249 = vpow.pop %v248
  %v250 = vmul.f32 %v243, 1.442695
  %v251 = vpow.pop %v250
  %v252 = vsel %vm39, %v245, 0.0
  %253 = vadd.xlane.f32.xlu0 %v252
  %v254 = vpop.xlane.xlu0 %253
  %v255 = vsel %vm39, %v247, 0.0
  %256 = vadd.xlane.f32.xlu0 %v255
  %v257 = vpop.xlane.xlu0 %256
  %v258 = vsel %vm39, %v249, 0.0
  %259 = vadd.xlane.f32.xlu0 %v258
  %v260 = vpop.xlane.xlu0 %259
  %v261 = vsel %vm39, %v251, 0.0
  %262 = vadd.xlane.f32.xlu0 %v261
  %v263 = vpop.xlane.xlu0 %262
  %v264 = vrcp.pop %v254
  %v265 = vrcp.pop %v257
  %v266 = vrcp.pop %v260
  %v267 = vrcp.pop %v263
  %v268 = vmul.f32 %v245, %v264
  %v269 = vmul.f32 %v247, %v265
  %v270 = vmul.f32 %v249, %v266
  %v271 = vmul.f32 %v251, %v267
  %v272 = vpack.c.bf16 %v268, %v268
  %v273 = vpack.c.bf16 %v269, %v269
  %v274 = vpack.c.bf16 %v270, %v270
  %v275 = vpack.c.bf16 %v271, %v271
  %v277 = vsel %vm39, %v272, 0
  %vm279 = vcmask 1043456
  %v281 = vsel %vm279, %v35, 0
  %283 = vmatprep.subr.bf16.mxu0 0
  %284 = vmatpush1.bf16.msra.mxu0 0
  %285 = vmatprep.subr.bf16.mxu0 0
  %286 = vmatpush1.bf16.msra.mxu0 0
  %287 = vmatprep.subr.bf16.mxu0 0
  %288 = vmatpush1.bf16.msra.mxu0 0
  %289 = vmatprep.subr.bf16.mxu0 0
  %290 = vmatpush1.bf16.msra.mxu0 0
  %291 = vmatprep.subr.bf16.mxu0 0
  %292 = vmatpush1.bf16.msra.mxu0 0
  %293 = vmatprep.subr.bf16.mxu0 0
  %294 = vmatpush1.bf16.msra.mxu0 0
  %295 = vmatprep.subr.bf16.mxu0 0
  %296 = vmatpush1.bf16.msra.mxu0 0
  %297 = vmatprep.subr.bf16.mxu0 0
  %298 = vmatpush1.bf16.msra.mxu0 %v281
  %299 = vmatprep.subr.bf16.mxu0 0
  %300 = vmatpush2.bf16.msra.mxu0 0
  %301 = vmatprep.subr.bf16.mxu0 0
  %302 = vmatpush2.bf16.msra.mxu0 0
  %303 = vmatprep.subr.bf16.mxu0 0
  %304 = vmatpush2.bf16.msra.mxu0 0
  %305 = vmatprep.subr.bf16.mxu0 0
  %306 = vmatpush2.bf16.msra.mxu0 0
  %307 = vmatprep.subr.bf16.mxu0 0
  %308 = vmatpush2.bf16.msra.mxu0 0
  %309 = vmatprep.subr.bf16.mxu0 0
  %310 = vmatpush2.bf16.msra.mxu0 0
  %311 = vmatprep.subr.bf16.mxu0 0
  %312 = vmatpush2.bf16.msra.mxu0 0
  %313 = vmatprep.subr.bf16.mxu0 0
  %314 = vmatpush2.bf16.msra.mxu0 0
  %315 = vmatprep.mubr.bf16.mxu0 0
  %316 = vmatmul.mubr.bf16.gmra.mxu0 %v277
  %v317 = vpop.f32.mrf.mxu0
  %v318 = vadd.f32 0.0, %v317
  %v319 = vpop.f32.mrf.mxu0
  %v320 = vpop.f32.mrf.mxu0
  %v321 = vpop.f32.mrf.mxu0
  %322 = vdwg.mxu0
  %v324 = vsel %vm39, %v273, 0
  %v327 = vsel %vm279, %v36, 0
  %329 = vmatprep.subr.bf16.mxu0 0
  %330 = vmatpush1.bf16.msra.mxu0 0
  %331 = vmatprep.subr.bf16.mxu0 0
  %332 = vmatpush1.bf16.msra.mxu0 0
  %333 = vmatprep.subr.bf16.mxu0 0
  %334 = vmatpush1.bf16.msra.mxu0 0
  %335 = vmatprep.subr.bf16.mxu0 0
  %336 = vmatpush1.bf16.msra.mxu0 0
  %337 = vmatprep.subr.bf16.mxu0 0
  %338 = vmatpush1.bf16.msra.mxu0 0
  %339 = vmatprep.subr.bf16.mxu0 0
  %340 = vmatpush1.bf16.msra.mxu0 0
  %341 = vmatprep.subr.bf16.mxu0 0
  %342 = vmatpush1.bf16.msra.mxu0 0
  %343 = vmatprep.subr.bf16.mxu0 0
  %344 = vmatpush1.bf16.msra.mxu0 %v327
  %345 = vmatprep.subr.bf16.mxu0 0
  %346 = vmatpush2.bf16.msra.mxu0 0
  %347 = vmatprep.subr.bf16.mxu0 0
  %348 = vmatpush2.bf16.msra.mxu0 0
  %349 = vmatprep.subr.bf16.mxu0 0
  %350 = vmatpush2.bf16.msra.mxu0 0
  %351 = vmatprep.subr.bf16.mxu0 0
  %352 = vmatpush2.bf16.msra.mxu0 0
  %353 = vmatprep.subr.bf16.mxu0 0
  %354 = vmatpush2.bf16.msra.mxu0 0
  %355 = vmatprep.subr.bf16.mxu0 0
  %356 = vmatpush2.bf16.msra.mxu0 0
  %357 = vmatprep.subr.bf16.mxu0 0
  %358 = vmatpush2.bf16.msra.mxu0 0
  %359 = vmatprep.subr.bf16.mxu0 0
  %360 = vmatpush2.bf16.msra.mxu0 0
  %361 = vmatprep.mubr.bf16.mxu0 0
  %362 = vmatmul.mubr.bf16.gmra.mxu0 %v324
  %v363 = vpop.f32.mrf.mxu0
  %v364 = vadd.f32 0.0, %v363
  %v365 = vpop.f32.mrf.mxu0
  %v366 = vpop.f32.mrf.mxu0
  %v367 = vpop.f32.mrf.mxu0
  %368 = vdwg.mxu0
  %v370 = vsel %vm39, %v274, 0
  %v373 = vsel %vm279, %v37, 0
  %375 = vmatprep.subr.bf16.mxu0 0
  %376 = vmatpush1.bf16.msra.mxu0 0
  %377 = vmatprep.subr.bf16.mxu0 0
  %378 = vmatpush1.bf16.msra.mxu0 0
  %379 = vmatprep.subr.bf16.mxu0 0
  %380 = vmatpush1.bf16.msra.mxu0 0
  %381 = vmatprep.subr.bf16.mxu0 0
  %382 = vmatpush1.bf16.msra.mxu0 0
  %383 = vmatprep.subr.bf16.mxu0 0
  %384 = vmatpush1.bf16.msra.mxu0 0
  %385 = vmatprep.subr.bf16.mxu0 0
  %386 = vmatpush1.bf16.msra.mxu0 0
  %387 = vmatprep.subr.bf16.mxu0 0
  %388 = vmatpush1.bf16.msra.mxu0 0
  %389 = vmatprep.subr.bf16.mxu0 0
  %390 = vmatpush1.bf16.msra.mxu0 %v373
  %391 = vmatprep.subr.bf16.mxu0 0
  %392 = vmatpush2.bf16.msra.mxu0 0
  %393 = vmatprep.subr.bf16.mxu0 0
  %394 = vmatpush2.bf16.msra.mxu0 0
  %395 = vmatprep.subr.bf16.mxu0 0
  %396 = vmatpush2.bf16.msra.mxu0 0
  %397 = vmatprep.subr.bf16.mxu0 0
  %398 = vmatpush2.bf16.msra.mxu0 0
  %399 = vmatprep.subr.bf16.mxu0 0
  %400 = vmatpush2.bf16.msra.mxu0 0
  %401 = vmatprep.subr.bf16.mxu0 0
  %402 = vmatpush2.bf16.msra.mxu0 0
  %403 = vmatprep.subr.bf16.mxu0 0
  %404 = vmatpush2.bf16.msra.mxu0 0
  %405 = vmatprep.subr.bf16.mxu0 0
  %406 = vmatpush2.bf16.msra.mxu0 0
  %407 = vmatprep.mubr.bf16.mxu0 0
  %408 = vmatmul.mubr.bf16.gmra.mxu0 %v370
  %v409 = vpop.f32.mrf.mxu0
  %v410 = vadd.f32 0.0, %v409
  %v411 = vpop.f32.mrf.mxu0
  %v412 = vpop.f32.mrf.mxu0
  %v413 = vpop.f32.mrf.mxu0
  %414 = vdwg.mxu0
  %v416 = vsel %vm39, %v275, 0
  %v419 = vsel %vm279, %v38, 0
  %421 = vmatprep.subr.bf16.mxu0 0
  %422 = vmatpush1.bf16.msra.mxu0 0
  %423 = vmatprep.subr.bf16.mxu0 0
  %424 = vmatpush1.bf16.msra.mxu0 0
  %425 = vmatprep.subr.bf16.mxu0 0
  %426 = vmatpush1.bf16.msra.mxu0 0
  %427 = vmatprep.subr.bf16.mxu0 0
  %428 = vmatpush1.bf16.msra.mxu0 0
  %429 = vmatprep.subr.bf16.mxu0 0
  %430 = vmatpush1.bf16.msra.mxu0 0
  %431 = vmatprep.subr.bf16.mxu0 0
  %432 = vmatpush1.bf16.msra.mxu0 0
  %433 = vmatprep.subr.bf16.mxu0 0
  %434 = vmatpush1.bf16.msra.mxu0 0
  %435 = vmatprep.subr.bf16.mxu0 0
  %436 = vmatpush1.bf16.msra.mxu0 %v419
  %437 = vmatprep.subr.bf16.mxu0 0
  %438 = vmatpush2.bf16.msra.mxu0 0
  %439 = vmatprep.subr.bf16.mxu0 0
  %440 = vmatpush2.bf16.msra.mxu0 0
  %441 = vmatprep.subr.bf16.mxu0 0
  %442 = vmatpush2.bf16.msra.mxu0 0
  %443 = vmatprep.subr.bf16.mxu0 0
  %444 = vmatpush2.bf16.msra.mxu0 0
  %445 = vmatprep.subr.bf16.mxu0 0
  %446 = vmatpush2.bf16.msra.mxu0 0
  %447 = vmatprep.subr.bf16.mxu0 0
  %448 = vmatpush2.bf16.msra.mxu0 0
  %449 = vmatprep.subr.bf16.mxu0 0
  %450 = vmatpush2.bf16.msra.mxu0 0
  %451 = vmatprep.subr.bf16.mxu0 0
  %452 = vmatpush2.bf16.msra.mxu0 0
  %453 = vmatprep.mubr.bf16.mxu0 0
  %454 = vmatmul.mubr.bf16.gmra.mxu0 %v416
  %v455 = vpop.f32.mrf.mxu0
  %v456 = vadd.f32 0.0, %v455
  %v457 = vpop.f32.mrf.mxu0
  %v458 = vpop.f32.mrf.mxu0
  %v459 = vpop.f32.mrf.mxu0
  %460 = vdwg.mxu0
  %462 = vrot.lane.b32.xlu0 %v27, 120
  %v463 = vpop.permute.xlu0 %462
  %465 = vrot.lane.b32.xlu0 %v31, 120
  %v466 = vpop.permute.xlu0 %465
  %v468 = vsel %vm39, %v463, 0
  %v471 = vsel %vm39, %v466, 0
  %473 = vmatprep.subr.bf16.mxu0 0
  %474 = vmatpush1.bf16.xpose.msra.mxu0 0
  %475 = vmatprep.subr.bf16.mxu0 0
  %476 = vmatpush1.bf16.xpose.msra.mxu0 0
  %477 = vmatprep.subr.bf16.mxu0 0
  %478 = vmatpush1.bf16.xpose.msra.mxu0 0
  %479 = vmatprep.subr.bf16.mxu0 0
  %480 = vmatpush1.bf16.xpose.msra.mxu0 0
  %481 = vmatprep.subr.bf16.mxu0 0
  %482 = vmatpush1.bf16.xpose.msra.mxu0 0
  %483 = vmatprep.subr.bf16.mxu0 0
  %484 = vmatpush1.bf16.xpose.msra.mxu0 0
  %485 = vmatprep.subr.bf16.mxu0 0
  %486 = vmatpush1.bf16.xpose.msra.mxu0 0
  %487 = vmatprep.subr.bf16.mxu0 0
  %488 = vmatpush1.bf16.xpose.msra.mxu0 %v471
  %489 = vmatprep.subr.bf16.mxu0 0
  %490 = vmatpush2.bf16.xpose.msra.mxu0 0
  %491 = vmatprep.subr.bf16.mxu0 0
  %492 = vmatpush2.bf16.xpose.msra.mxu0 0
  %493 = vmatprep.subr.bf16.mxu0 0
  %494 = vmatpush2.bf16.xpose.msra.mxu0 0
  %495 = vmatprep.subr.bf16.mxu0 0
  %496 = vmatpush2.bf16.xpose.msra.mxu0 0
  %497 = vmatprep.subr.bf16.mxu0 0
  %498 = vmatpush2.bf16.xpose.msra.mxu0 0
  %499 = vmatprep.subr.bf16.mxu0 0
  %500 = vmatpush2.bf16.xpose.msra.mxu0 0
  %501 = vmatprep.subr.bf16.mxu0 0
  %502 = vmatpush2.bf16.xpose.msra.mxu0 0
  %503 = vmatprep.subr.bf16.mxu0 0
  %504 = vmatpush2.bf16.xpose.msra.mxu0 0
  %505 = vmatprep.mubr.bf16.mxu0 0
  %506 = vmatmul.mubr.bf16.gmra.mxu0 %v468
  %v507 = vpop.f32.mrf.mxu0
  %v508 = vadd.f32 0.0, %v507
  %v509 = vpop.f32.mrf.mxu0
  %v510 = vpop.f32.mrf.mxu0
  %v511 = vpop.f32.mrf.mxu0
  %512 = vdwg.mxu0
  %514 = vrot.lane.b32.xlu0 %v28, 120
  %v515 = vpop.permute.xlu0 %514
  %517 = vrot.lane.b32.xlu0 %v32, 120
  %v518 = vpop.permute.xlu0 %517
  %v520 = vsel %vm39, %v515, 0
  %v523 = vsel %vm39, %v518, 0
  %525 = vmatprep.subr.bf16.mxu0 0
  %526 = vmatpush1.bf16.xpose.msra.mxu0 0
  %527 = vmatprep.subr.bf16.mxu0 0
  %528 = vmatpush1.bf16.xpose.msra.mxu0 0
  %529 = vmatprep.subr.bf16.mxu0 0
  %530 = vmatpush1.bf16.xpose.msra.mxu0 0
  %531 = vmatprep.subr.bf16.mxu0 0
  %532 = vmatpush1.bf16.xpose.msra.mxu0 0
  %533 = vmatprep.subr.bf16.mxu0 0
  %534 = vmatpush1.bf16.xpose.msra.mxu0 0
  %535 = vmatprep.subr.bf16.mxu0 0
  %536 = vmatpush1.bf16.xpose.msra.mxu0 0
  %537 = vmatprep.subr.bf16.mxu0 0
  %538 = vmatpush1.bf16.xpose.msra.mxu0 0
  %539 = vmatprep.subr.bf16.mxu0 0
  %540 = vmatpush1.bf16.xpose.msra.mxu0 %v523
  %541 = vmatprep.subr.bf16.mxu0 0
  %542 = vmatpush2.bf16.xpose.msra.mxu0 0
  %543 = vmatprep.subr.bf16.mxu0 0
  %544 = vmatpush2.bf16.xpose.msra.mxu0 0
  %545 = vmatprep.subr.bf16.mxu0 0
  %546 = vmatpush2.bf16.xpose.msra.mxu0 0
  %547 = vmatprep.subr.bf16.mxu0 0
  %548 = vmatpush2.bf16.xpose.msra.mxu0 0
  %549 = vmatprep.subr.bf16.mxu0 0
  %550 = vmatpush2.bf16.xpose.msra.mxu0 0
  %551 = vmatprep.subr.bf16.mxu0 0
  %552 = vmatpush2.bf16.xpose.msra.mxu0 0
  %553 = vmatprep.subr.bf16.mxu0 0
  %554 = vmatpush2.bf16.xpose.msra.mxu0 0
  %555 = vmatprep.subr.bf16.mxu0 0
  %556 = vmatpush2.bf16.xpose.msra.mxu0 0
  %557 = vmatprep.mubr.bf16.mxu0 0
  %558 = vmatmul.mubr.bf16.gmra.mxu0 %v520
  %v559 = vpop.f32.mrf.mxu0
  %v560 = vadd.f32 0.0, %v559
  %v561 = vpop.f32.mrf.mxu0
  %v562 = vpop.f32.mrf.mxu0
  %v563 = vpop.f32.mrf.mxu0
  %564 = vdwg.mxu0
  %566 = vrot.lane.b32.xlu0 %v29, 120
  %v567 = vpop.permute.xlu0 %566
  %569 = vrot.lane.b32.xlu0 %v33, 120
  %v570 = vpop.permute.xlu0 %569
  %v572 = vsel %vm39, %v567, 0
  %v575 = vsel %vm39, %v570, 0
  %577 = vmatprep.subr.bf16.mxu0 0
  %578 = vmatpush1.bf16.xpose.msra.mxu0 0
  %579 = vmatprep.subr.bf16.mxu0 0
  %580 = vmatpush1.bf16.xpose.msra.mxu0 0
  %581 = vmatprep.subr.bf16.mxu0 0
  %582 = vmatpush1.bf16.xpose.msra.mxu0 0
  %583 = vmatprep.subr.bf16.mxu0 0
  %584 = vmatpush1.bf16.xpose.msra.mxu0 0
  %585 = vmatprep.subr.bf16.mxu0 0
  %586 = vmatpush1.bf16.xpose.msra.mxu0 0
  %587 = vmatprep.subr.bf16.mxu0 0
  %588 = vmatpush1.bf16.xpose.msra.mxu0 0
  %589 = vmatprep.subr.bf16.mxu0 0
  %590 = vmatpush1.bf16.xpose.msra.mxu0 0
  %591 = vmatprep.subr.bf16.mxu0 0
  %592 = vmatpush1.bf16.xpose.msra.mxu0 %v575
  %593 = vmatprep.subr.bf16.mxu0 0
  %594 = vmatpush2.bf16.xpose.msra.mxu0 0
  %595 = vmatprep.subr.bf16.mxu0 0
  %596 = vmatpush2.bf16.xpose.msra.mxu0 0
  %597 = vmatprep.subr.bf16.mxu0 0
  %598 = vmatpush2.bf16.xpose.msra.mxu0 0
  %599 = vmatprep.subr.bf16.mxu0 0
  %600 = vmatpush2.bf16.xpose.msra.mxu0 0
  %601 = vmatprep.subr.bf16.mxu0 0
  %602 = vmatpush2.bf16.xpose.msra.mxu0 0
  %603 = vmatprep.subr.bf16.mxu0 0
  %604 = vmatpush2.bf16.xpose.msra.mxu0 0
  %605 = vmatprep.subr.bf16.mxu0 0
  %606 = vmatpush2.bf16.xpose.msra.mxu0 0
  %607 = vmatprep.subr.bf16.mxu0 0
  %608 = vmatpush2.bf16.xpose.msra.mxu0 0
  %609 = vmatprep.mubr.bf16.mxu0 0
  %610 = vmatmul.mubr.bf16.gmra.mxu0 %v572
  %v611 = vpop.f32.mrf.mxu0
  %v612 = vadd.f32 0.0, %v611
  %v613 = vpop.f32.mrf.mxu0
  %v614 = vpop.f32.mrf.mxu0
  %v615 = vpop.f32.mrf.mxu0
  %616 = vdwg.mxu0
  %618 = vrot.lane.b32.xlu0 %v30, 120
  %v619 = vpop.permute.xlu0 %618
  %621 = vrot.lane.b32.xlu0 %v34, 120
  %v622 = vpop.permute.xlu0 %621
  %v624 = vsel %vm39, %v619, 0
  %v627 = vsel %vm39, %v622, 0
  %629 = vmatprep.subr.bf16.mxu0 0
  %630 = vmatpush1.bf16.xpose.msra.mxu0 0
  %631 = vmatprep.subr.bf16.mxu0 0
  %632 = vmatpush1.bf16.xpose.msra.mxu0 0
  %633 = vmatprep.subr.bf16.mxu0 0
  %634 = vmatpush1.bf16.xpose.msra.mxu0 0
  %635 = vmatprep.subr.bf16.mxu0 0
  %636 = vmatpush1.bf16.xpose.msra.mxu0 0
  %637 = vmatprep.subr.bf16.mxu0 0
  %638 = vmatpush1.bf16.xpose.msra.mxu0 0
  %639 = vmatprep.subr.bf16.mxu0 0
  %640 = vmatpush1.bf16.xpose.msra.mxu0 0
  %641 = vmatprep.subr.bf16.mxu0 0
  %642 = vmatpush1.bf16.xpose.msra.mxu0 0
  %643 = vmatprep.subr.bf16.mxu0 0
  %644 = vmatpush1.bf16.xpose.msra.mxu0 %v627
  %645 = vmatprep.subr.bf16.mxu0 0
  %646 = vmatpush2.bf16.xpose.msra.mxu0 0
  %647 = vmatprep.subr.bf16.mxu0 0
  %648 = vmatpush2.bf16.xpose.msra.mxu0 0
  %649 = vmatprep.subr.bf16.mxu0 0
  %650 = vmatpush2.bf16.xpose.msra.mxu0 0
  %651 = vmatprep.subr.bf16.mxu0 0
  %652 = vmatpush2.bf16.xpose.msra.mxu0 0
  %653 = vmatprep.subr.bf16.mxu0 0
  %654 = vmatpush2.bf16.xpose.msra.mxu0 0
  %655 = vmatprep.subr.bf16.mxu0 0
  %656 = vmatpush2.bf16.xpose.msra.mxu0 0
  %657 = vmatprep.subr.bf16.mxu0 0
  %658 = vmatpush2.bf16.xpose.msra.mxu0 0
  %659 = vmatprep.subr.bf16.mxu0 0
  %660 = vmatpush2.bf16.xpose.msra.mxu0 0
  %661 = vmatprep.mubr.bf16.mxu0 0
  %662 = vmatmul.mubr.bf16.gmra.mxu0 %v624
  %v663 = vpop.f32.mrf.mxu0
  %v664 = vadd.f32 0.0, %v663
  %v665 = vpop.f32.mrf.mxu0
  %v666 = vpop.f32.mrf.mxu0
  %v667 = vpop.f32.mrf.mxu0
  %668 = vdwg.mxu0
  %v669 = vmul.f32 %v508, 0.35355338
  %v670 = vmul.f32 %v560, 0.35355338
  %v671 = vmul.f32 %v612, 0.35355338
  %v672 = vmul.f32 %v664, 0.35355338
  %v673 = vsel %vm39, %v669, -inf
  %674 = vmax.xlane.f32.xlu0 %v673
  %v675 = vpop.xlane.xlu0 %674
  %v676 = vsel %vm39, %v670, -inf
  %677 = vmax.xlane.f32.xlu0 %v676
  %v678 = vpop.xlane.xlu0 %677
  %v679 = vsel %vm39, %v671, -inf
  %680 = vmax.xlane.f32.xlu0 %v679
  %v681 = vpop.xlane.xlu0 %680
  %v682 = vsel %vm39, %v672, -inf
  %683 = vmax.xlane.f32.xlu0 %v682
  %v684 = vpop.xlane.xlu0 %683
  %v685 = vsub.f32 %v669, %v675
  %v686 = vsub.f32 %v670, %v678
  %v687 = vsub.f32 %v671, %v681
  %v688 = vsub.f32 %v672, %v684
  %v689 = vmul.f32 %v685, 1.442695
  %v690 = vpow.pop %v689
  %v691 = vmul.f32 %v686, 1.442695
  %v692 = vpow.pop %v691
  %v693 = vmul.f32 %v687, 1.442695
  %v694 = vpow.pop %v693
  %v695 = vmul.f32 %v688, 1.442695
  %v696 = vpow.pop %v695
  %v697 = vsel %vm39, %v690, 0.0
  %698 = vadd.xlane.f32.xlu0 %v697
  %v699 = vpop.xlane.xlu0 %698
  %v700 = vsel %vm39, %v692, 0.0
  %701 = vadd.xlane.f32.xlu0 %v700
  %v702 = vpop.xlane.xlu0 %701
  %v703 = vsel %vm39, %v694, 0.0
  %704 = vadd.xlane.f32.xlu0 %v703
  %v705 = vpop.xlane.xlu0 %704
  %v706 = vsel %vm39, %v696, 0.0
  %707 = vadd.xlane.f32.xlu0 %v706
  %v708 = vpop.xlane.xlu0 %707
  %v709 = vrcp.pop %v699
  %v710 = vrcp.pop %v702
  %v711 = vrcp.pop %v705
  %v712 = vrcp.pop %v708
  %v713 = vmul.f32 %v690, %v709
  %v714 = vmul.f32 %v692, %v710
  %v715 = vmul.f32 %v694, %v711
  %v716 = vmul.f32 %v696, %v712
  %v717 = vpack.c.bf16 %v713, %v713
  %v718 = vpack.c.bf16 %v714, %v714
  %v719 = vpack.c.bf16 %v715, %v715
  %v720 = vpack.c.bf16 %v716, %v716
  %722 = vrot.lane.b32.xlu0 %v35, 120
  %v723 = vpop.permute.xlu0 %722
  %v725 = vsel %vm39, %v717, 0
  %v728 = vsel %vm279, %v723, 0
  %730 = vmatprep.subr.bf16.mxu0 0
  %731 = vmatpush1.bf16.msra.mxu0 0
  %732 = vmatprep.subr.bf16.mxu0 0
  %733 = vmatpush1.bf16.msra.mxu0 0
  %734 = vmatprep.subr.bf16.mxu0 0
  %735 = vmatpush1.bf16.msra.mxu0 0
  %736 = vmatprep.subr.bf16.mxu0 0
  %737 = vmatpush1.bf16.msra.mxu0 0
  %738 = vmatprep.subr.bf16.mxu0 0
  %739 = vmatpush1.bf16.msra.mxu0 0
  %740 = vmatprep.subr.bf16.mxu0 0
  %741 = vmatpush1.bf16.msra.mxu0 0
  %742 = vmatprep.subr.bf16.mxu0 0
  %743 = vmatpush1.bf16.msra.mxu0 0
  %744 = vmatprep.subr.bf16.mxu0 0
  %745 = vmatpush1.bf16.msra.mxu0 %v728
  %746 = vmatprep.subr.bf16.mxu0 0
  %747 = vmatpush2.bf16.msra.mxu0 0
  %748 = vmatprep.subr.bf16.mxu0 0
  %749 = vmatpush2.bf16.msra.mxu0 0
  %750 = vmatprep.subr.bf16.mxu0 0
  %751 = vmatpush2.bf16.msra.mxu0 0
  %752 = vmatprep.subr.bf16.mxu0 0
  %753 = vmatpush2.bf16.msra.mxu0 0
  %754 = vmatprep.subr.bf16.mxu0 0
  %755 = vmatpush2.bf16.msra.mxu0 0
  %756 = vmatprep.subr.bf16.mxu0 0
  %757 = vmatpush2.bf16.msra.mxu0 0
  %758 = vmatprep.subr.bf16.mxu0 0
  %759 = vmatpush2.bf16.msra.mxu0 0
  %760 = vmatprep.subr.bf16.mxu0 0
  %761 = vmatpush2.bf16.msra.mxu0 0
  %762 = vmatprep.mubr.bf16.mxu0 0
  %763 = vmatmul.mubr.bf16.gmra.mxu0 %v725
  %v764 = vpop.f32.mrf.mxu0
  %v765 = vadd.f32 0.0, %v764
  %v766 = vpop.f32.mrf.mxu0
  %v767 = vpop.f32.mrf.mxu0
  %v768 = vpop.f32.mrf.mxu0
  %769 = vdwg.mxu0
  %771 = vrot.lane.b32.xlu0 %v36, 120
  %v772 = vpop.permute.xlu0 %771
  %v774 = vsel %vm39, %v718, 0
  %v777 = vsel %vm279, %v772, 0
  %779 = vmatprep.subr.bf16.mxu0 0
  %780 = vmatpush1.bf16.msra.mxu0 0
  %781 = vmatprep.subr.bf16.mxu0 0
  %782 = vmatpush1.bf16.msra.mxu0 0
  %783 = vmatprep.subr.bf16.mxu0 0
  %784 = vmatpush1.bf16.msra.mxu0 0
  %785 = vmatprep.subr.bf16.mxu0 0
  %786 = vmatpush1.bf16.msra.mxu0 0
  %787 = vmatprep.subr.bf16.mxu0 0
  %788 = vmatpush1.bf16.msra.mxu0 0
  %789 = vmatprep.subr.bf16.mxu0 0
  %790 = vmatpush1.bf16.msra.mxu0 0
  %791 = vmatprep.subr.bf16.mxu0 0
  %792 = vmatpush1.bf16.msra.mxu0 0
  %793 = vmatprep.subr.bf16.mxu0 0
  %794 = vmatpush1.bf16.msra.mxu0 %v777
  %795 = vmatprep.subr.bf16.mxu0 0
  %796 = vmatpush2.bf16.msra.mxu0 0
  %797 = vmatprep.subr.bf16.mxu0 0
  %798 = vmatpush2.bf16.msra.mxu0 0
  %799 = vmatprep.subr.bf16.mxu0 0
  %800 = vmatpush2.bf16.msra.mxu0 0
  %801 = vmatprep.subr.bf16.mxu0 0
  %802 = vmatpush2.bf16.msra.mxu0 0
  %803 = vmatprep.subr.bf16.mxu0 0
  %804 = vmatpush2.bf16.msra.mxu0 0
  %805 = vmatprep.subr.bf16.mxu0 0
  %806 = vmatpush2.bf16.msra.mxu0 0
  %807 = vmatprep.subr.bf16.mxu0 0
  %808 = vmatpush2.bf16.msra.mxu0 0
  %809 = vmatprep.subr.bf16.mxu0 0
  %810 = vmatpush2.bf16.msra.mxu0 0
  %811 = vmatprep.mubr.bf16.mxu0 0
  %812 = vmatmul.mubr.bf16.gmra.mxu0 %v774
  %v813 = vpop.f32.mrf.mxu0
  %v814 = vadd.f32 0.0, %v813
  %v815 = vpop.f32.mrf.mxu0
  %v816 = vpop.f32.mrf.mxu0
  %v817 = vpop.f32.mrf.mxu0
  %818 = vdwg.mxu0
  %820 = vrot.lane.b32.xlu0 %v37, 120
  %v821 = vpop.permute.xlu0 %820
  %v823 = vsel %vm39, %v719, 0
  %v826 = vsel %vm279, %v821, 0
  %828 = vmatprep.subr.bf16.mxu0 0
  %829 = vmatpush1.bf16.msra.mxu0 0
  %830 = vmatprep.subr.bf16.mxu0 0
  %831 = vmatpush1.bf16.msra.mxu0 0
  %832 = vmatprep.subr.bf16.mxu0 0
  %833 = vmatpush1.bf16.msra.mxu0 0
  %834 = vmatprep.subr.bf16.mxu0 0
  %835 = vmatpush1.bf16.msra.mxu0 0
  %836 = vmatprep.subr.bf16.mxu0 0
  %837 = vmatpush1.bf16.msra.mxu0 0
  %838 = vmatprep.subr.bf16.mxu0 0
  %839 = vmatpush1.bf16.msra.mxu0 0
  %840 = vmatprep.subr.bf16.mxu0 0
  %841 = vmatpush1.bf16.msra.mxu0 0
  %842 = vmatprep.subr.bf16.mxu0 0
  %843 = vmatpush1.bf16.msra.mxu0 %v826
  %844 = vmatprep.subr.bf16.mxu0 0
  %845 = vmatpush2.bf16.msra.mxu0 0
  %846 = vmatprep.subr.bf16.mxu0 0
  %847 = vmatpush2.bf16.msra.mxu0 0
  %848 = vmatprep.subr.bf16.mxu0 0
  %849 = vmatpush2.bf16.msra.mxu0 0
  %850 = vmatprep.subr.bf16.mxu0 0
  %851 = vmatpush2.bf16.msra.mxu0 0
  %852 = vmatprep.subr.bf16.mxu0 0
  %853 = vmatpush2.bf16.msra.mxu0 0
  %854 = vmatprep.subr.bf16.mxu0 0
  %855 = vmatpush2.bf16.msra.mxu0 0
  %856 = vmatprep.subr.bf16.mxu0 0
  %857 = vmatpush2.bf16.msra.mxu0 0
  %858 = vmatprep.subr.bf16.mxu0 0
  %859 = vmatpush2.bf16.msra.mxu0 0
  %860 = vmatprep.mubr.bf16.mxu0 0
  %861 = vmatmul.mubr.bf16.gmra.mxu0 %v823
  %v862 = vpop.f32.mrf.mxu0
  %v863 = vadd.f32 0.0, %v862
  %v864 = vpop.f32.mrf.mxu0
  %v865 = vpop.f32.mrf.mxu0
  %v866 = vpop.f32.mrf.mxu0
  %867 = vdwg.mxu0
  %869 = vrot.lane.b32.xlu0 %v38, 120
  %v870 = vpop.permute.xlu0 %869
  %v872 = vsel %vm39, %v720, 0
  %v875 = vsel %vm279, %v870, 0
  %877 = vmatprep.subr.bf16.mxu0 0
  %878 = vmatpush1.bf16.msra.mxu0 0
  %879 = vmatprep.subr.bf16.mxu0 0
  %880 = vmatpush1.bf16.msra.mxu0 0
  %881 = vmatprep.subr.bf16.mxu0 0
  %882 = vmatpush1.bf16.msra.mxu0 0
  %883 = vmatprep.subr.bf16.mxu0 0
  %884 = vmatpush1.bf16.msra.mxu0 0
  %885 = vmatprep.subr.bf16.mxu0 0
  %886 = vmatpush1.bf16.msra.mxu0 0
  %887 = vmatprep.subr.bf16.mxu0 0
  %888 = vmatpush1.bf16.msra.mxu0 0
  %889 = vmatprep.subr.bf16.mxu0 0
  %890 = vmatpush1.bf16.msra.mxu0 0
  %891 = vmatprep.subr.bf16.mxu0 0
  %892 = vmatpush1.bf16.msra.mxu0 %v875
  %893 = vmatprep.subr.bf16.mxu0 0
  %894 = vmatpush2.bf16.msra.mxu0 0
  %895 = vmatprep.subr.bf16.mxu0 0
  %896 = vmatpush2.bf16.msra.mxu0 0
  %897 = vmatprep.subr.bf16.mxu0 0
  %898 = vmatpush2.bf16.msra.mxu0 0
  %899 = vmatprep.subr.bf16.mxu0 0
  %900 = vmatpush2.bf16.msra.mxu0 0
  %901 = vmatprep.subr.bf16.mxu0 0
  %902 = vmatpush2.bf16.msra.mxu0 0
  %903 = vmatprep.subr.bf16.mxu0 0
  %904 = vmatpush2.bf16.msra.mxu0 0
  %905 = vmatprep.subr.bf16.mxu0 0
  %906 = vmatpush2.bf16.msra.mxu0 0
  %907 = vmatprep.subr.bf16.mxu0 0
  %908 = vmatpush2.bf16.msra.mxu0 0
  %909 = vmatprep.mubr.bf16.mxu0 0
  %910 = vmatmul.mubr.bf16.gmra.mxu0 %v872
  %v911 = vpop.f32.mrf.mxu0
  %v912 = vadd.f32 0.0, %v911
  %v913 = vpop.f32.mrf.mxu0
  %v914 = vpop.f32.mrf.mxu0
  %v915 = vpop.f32.mrf.mxu0
  %916 = vdwg.mxu0
  %917 = vrot.lane.b32.xlu0 %v27, 112
  %v918 = vpop.permute.xlu0 %917
  %919 = vrot.lane.b32.xlu0 %v31, 112
  %v920 = vpop.permute.xlu0 %919
  %v922 = vsel %vm39, %v918, 0
  %v925 = vsel %vm39, %v920, 0
  %927 = vmatprep.subr.bf16.mxu0 0
  %928 = vmatpush1.bf16.xpose.msra.mxu0 0
  %929 = vmatprep.subr.bf16.mxu0 0
  %930 = vmatpush1.bf16.xpose.msra.mxu0 0
  %931 = vmatprep.subr.bf16.mxu0 0
  %932 = vmatpush1.bf16.xpose.msra.mxu0 0
  %933 = vmatprep.subr.bf16.mxu0 0
  %934 = vmatpush1.bf16.xpose.msra.mxu0 0
  %935 = vmatprep.subr.bf16.mxu0 0
  %936 = vmatpush1.bf16.xpose.msra.mxu0 0
  %937 = vmatprep.subr.bf16.mxu0 0
  %938 = vmatpush1.bf16.xpose.msra.mxu0 0
  %939 = vmatprep.subr.bf16.mxu0 0
  %940 = vmatpush1.bf16.xpose.msra.mxu0 0
  %941 = vmatprep.subr.bf16.mxu0 0
  %942 = vmatpush1.bf16.xpose.msra.mxu0 %v925
  %943 = vmatprep.subr.bf16.mxu0 0
  %944 = vmatpush2.bf16.xpose.msra.mxu0 0
  %945 = vmatprep.subr.bf16.mxu0 0
  %946 = vmatpush2.bf16.xpose.msra.mxu0 0
  %947 = vmatprep.subr.bf16.mxu0 0
  %948 = vmatpush2.bf16.xpose.msra.mxu0 0
  %949 = vmatprep.subr.bf16.mxu0 0
  %950 = vmatpush2.bf16.xpose.msra.mxu0 0
  %951 = vmatprep.subr.bf16.mxu0 0
  %952 = vmatpush2.bf16.xpose.msra.mxu0 0
  %953 = vmatprep.subr.bf16.mxu0 0
  %954 = vmatpush2.bf16.xpose.msra.mxu0 0
  %955 = vmatprep.subr.bf16.mxu0 0
  %956 = vmatpush2.bf16.xpose.msra.mxu0 0
  %957 = vmatprep.subr.bf16.mxu0 0
  %958 = vmatpush2.bf16.xpose.msra.mxu0 0
  %959 = vmatprep.mubr.bf16.mxu0 0
  %960 = vmatmul.mubr.bf16.gmra.mxu0 %v922
  %v961 = vpop.f32.mrf.mxu0
  %v962 = vadd.f32 0.0, %v961
  %v963 = vpop.f32.mrf.mxu0
  %v964 = vpop.f32.mrf.mxu0
  %v965 = vpop.f32.mrf.mxu0
  %966 = vdwg.mxu0
  %967 = vrot.lane.b32.xlu0 %v28, 112
  %v968 = vpop.permute.xlu0 %967
  %969 = vrot.lane.b32.xlu0 %v32, 112
  %v970 = vpop.permute.xlu0 %969
  %v972 = vsel %vm39, %v968, 0
  %v975 = vsel %vm39, %v970, 0
  %977 = vmatprep.subr.bf16.mxu0 0
  %978 = vmatpush1.bf16.xpose.msra.mxu0 0
  %979 = vmatprep.subr.bf16.mxu0 0
  %980 = vmatpush1.bf16.xpose.msra.mxu0 0
  %981 = vmatprep.subr.bf16.mxu0 0
  %982 = vmatpush1.bf16.xpose.msra.mxu0 0
  %983 = vmatprep.subr.bf16.mxu0 0
  %984 = vmatpush1.bf16.xpose.msra.mxu0 0
  %985 = vmatprep.subr.bf16.mxu0 0
  %986 = vmatpush1.bf16.xpose.msra.mxu0 0
  %987 = vmatprep.subr.bf16.mxu0 0
  %988 = vmatpush1.bf16.xpose.msra.mxu0 0
  %989 = vmatprep.subr.bf16.mxu0 0
  %990 = vmatpush1.bf16.xpose.msra.mxu0 0
  %991 = vmatprep.subr.bf16.mxu0 0
  %992 = vmatpush1.bf16.xpose.msra.mxu0 %v975
  %993 = vmatprep.subr.bf16.mxu0 0
  %994 = vmatpush2.bf16.xpose.msra.mxu0 0
  %995 = vmatprep.subr.bf16.mxu0 0
  %996 = vmatpush2.bf16.xpose.msra.mxu0 0
  %997 = vmatprep.subr.bf16.mxu0 0
  %998 = vmatpush2.bf16.xpose.msra.mxu0 0
  %999 = vmatprep.subr.bf16.mxu0 0
  %1000 = vmatpush2.bf16.xpose.msra.mxu0 0
  %1001 = vmatprep.subr.bf16.mxu0 0
  %1002 = vmatpush2.bf16.xpose.msra.mxu0 0
  %1003 = vmatprep.subr.bf16.mxu0 0
  %1004 = vmatpush2.bf16.xpose.msra.mxu0 0
  %1005 = vmatprep.subr.bf16.mxu0 0
  %1006 = vmatpush2.bf16.xpose.msra.mxu0 0
  %1007 = vmatprep.subr.bf16.mxu0 0
  %1008 = vmatpush2.bf16.xpose.msra.mxu0 0
  %1009 = vmatprep.mubr.bf16.mxu0 0
  %1010 = vmatmul.mubr.bf16.gmra.mxu0 %v972
  %v1011 = vpop.f32.mrf.mxu0
  %v1012 = vadd.f32 0.0, %v1011
  %v1013 = vpop.f32.mrf.mxu0
  %v1014 = vpop.f32.mrf.mxu0
  %v1015 = vpop.f32.mrf.mxu0
  %1016 = vdwg.mxu0
  %1017 = vrot.lane.b32.xlu0 %v29, 112
  %v1018 = vpop.permute.xlu0 %1017
  %1019 = vrot.lane.b32.xlu0 %v33, 112
  %v1020 = vpop.permute.xlu0 %1019
  %v1022 = vsel %vm39, %v1018, 0
  %v1025 = vsel %vm39, %v1020, 0
  %1027 = vmatprep.subr.bf16.mxu0 0
  %1028 = vmatpush1.bf16.xpose.msra.mxu0 0
  %1029 = vmatprep.subr.bf16.mxu0 0
  %1030 = vmatpush1.bf16.xpose.msra.mxu0 0
  %1031 = vmatprep.subr.bf16.mxu0 0
  %1032 = vmatpush1.bf16.xpose.msra.mxu0 0
  %1033 = vmatprep.subr.bf16.mxu0 0
  %1034 = vmatpush1.bf16.xpose.msra.mxu0 0
  %1035 = vmatprep.subr.bf16.mxu0 0
  %1036 = vmatpush1.bf16.xpose.msra.mxu0 0
  %1037 = vmatprep.subr.bf16.mxu0 0
  %1038 = vmatpush1.bf16.xpose.msra.mxu0 0
  %1039 = vmatprep.subr.bf16.mxu0 0
  %1040 = vmatpush1.bf16.xpose.msra.mxu0 0
  %1041 = vmatprep.subr.bf16.mxu0 0
  %1042 = vmatpush1.bf16.xpose.msra.mxu0 %v1025
  %1043 = vmatprep.subr.bf16.mxu0 0
  %1044 = vmatpush2.bf16.xpose.msra.mxu0 0
  %1045 = vmatprep.subr.bf16.mxu0 0
  %1046 = vmatpush2.bf16.xpose.msra.mxu0 0
  %1047 = vmatprep.subr.bf16.mxu0 0
  %1048 = vmatpush2.bf16.xpose.msra.mxu0 0
  %1049 = vmatprep.subr.bf16.mxu0 0
  %1050 = vmatpush2.bf16.xpose.msra.mxu0 0
  %1051 = vmatprep.subr.bf16.mxu0 0
  %1052 = vmatpush2.bf16.xpose.msra.mxu0 0
  %1053 = vmatprep.subr.bf16.mxu0 0
  %1054 = vmatpush2.bf16.xpose.msra.mxu0 0
  %1055 = vmatprep.subr.bf16.mxu0 0
  %1056 = vmatpush2.bf16.xpose.msra.mxu0 0
  %1057 = vmatprep.subr.bf16.mxu0 0
  %1058 = vmatpush2.bf16.xpose.msra.mxu0 0
  %1059 = vmatprep.mubr.bf16.mxu0 0
  %1060 = vmatmul.mubr.bf16.gmra.mxu0 %v1022
  %v1061 = vpop.f32.mrf.mxu0
  %v1062 = vadd.f32 0.0, %v1061
  %v1063 = vpop.f32.mrf.mxu0
  %v1064 = vpop.f32.mrf.mxu0
  %v1065 = vpop.f32.mrf.mxu0
  %1066 = vdwg.mxu0
  %1067 = vrot.lane.b32.xlu0 %v30, 112
  %v1068 = vpop.permute.xlu0 %1067
  %1069 = vrot.lane.b32.xlu0 %v34, 112
  %v1070 = vpop.permute.xlu0 %1069
  %v1072 = vsel %vm39, %v1068, 0
  %v1075 = vsel %vm39, %v1070, 0
  %1077 = vmatprep.subr.bf16.mxu0 0
  %1078 = vmatpush1.bf16.xpose.msra.mxu0 0
  %1079 = vmatprep.subr.bf16.mxu0 0
  %1080 = vmatpush1.bf16.xpose.msra.mxu0 0
  %1081 = vmatprep.subr.bf16.mxu0 0
  %1082 = vmatpush1.bf16.xpose.msra.mxu0 0
  %1083 = vmatprep.subr.bf16.mxu0 0
  %1084 = vmatpush1.bf16.xpose.msra.mxu0 0
  %1085 = vmatprep.subr.bf16.mxu0 0
  %1086 = vmatpush1.bf16.xpose.msra.mxu0 0
  %1087 = vmatprep.subr.bf16.mxu0 0
  %1088 = vmatpush1.bf16.xpose.msra.mxu0 0
  %1089 = vmatprep.subr.bf16.mxu0 0
  %1090 = vmatpush1.bf16.xpose.msra.mxu0 0
  %1091 = vmatprep.subr.bf16.mxu0 0
  %1092 = vmatpush1.bf16.xpose.msra.mxu0 %v1075
  %1093 = vmatprep.subr.bf16.mxu0 0
  %1094 = vmatpush2.bf16.xpose.msra.mxu0 0
  %1095 = vmatprep.subr.bf16.mxu0 0
  %1096 = vmatpush2.bf16.xpose.msra.mxu0 0
  %1097 = vmatprep.subr.bf16.mxu0 0
  %1098 = vmatpush2.bf16.xpose.msra.mxu0 0
  %1099 = vmatprep.subr.bf16.mxu0 0
  %1100 = vmatpush2.bf16.xpose.msra.mxu0 0
  %1101 = vmatprep.subr.bf16.mxu0 0
  %1102 = vmatpush2.bf16.xpose.msra.mxu0 0
  %1103 = vmatprep.subr.bf16.mxu0 0
  %1104 = vmatpush2.bf16.xpose.msra.mxu0 0
  %1105 = vmatprep.subr.bf16.mxu0 0
  %1106 = vmatpush2.bf16.xpose.msra.mxu0 0
  %1107 = vmatprep.subr.bf16.mxu0 0
  %1108 = vmatpush2.bf16.xpose.msra.mxu0 0
  %1109 = vmatprep.mubr.bf16.mxu0 0
  %1110 = vmatmul.mubr.bf16.gmra.mxu0 %v1072
  %v1111 = vpop.f32.mrf.mxu0
  %v1112 = vadd.f32 0.0, %v1111
  %v1113 = vpop.f32.mrf.mxu0
  %v1114 = vpop.f32.mrf.mxu0
  %v1115 = vpop.f32.mrf.mxu0
  %1116 = vdwg.mxu0
  %v1117 = vmul.f32 %v962, 0.35355338
  %v1118 = vmul.f32 %v1012, 0.35355338
  %v1119 = vmul.f32 %v1062, 0.35355338
  %v1120 = vmul.f32 %v1112, 0.35355338
  %v1121 = vsel %vm39, %v1117, -inf
  %1122 = vmax.xlane.f32.xlu0 %v1121
  %v1123 = vpop.xlane.xlu0 %1122
  %v1124 = vsel %vm39, %v1118, -inf
  %1125 = vmax.xlane.f32.xlu0 %v1124
  %v1126 = vpop.xlane.xlu0 %1125
  %v1127 = vsel %vm39, %v1119, -inf
  %1128 = vmax.xlane.f32.xlu0 %v1127
  %v1129 = vpop.xlane.xlu0 %1128
  %v1130 = vsel %vm39, %v1120, -inf
  %1131 = vmax.xlane.f32.xlu0 %v1130
  %v1132 = vpop.xlane.xlu0 %1131
  %v1133 = vsub.f32 %v1117, %v1123
  %v1134 = vsub.f32 %v1118, %v1126
  %v1135 = vsub.f32 %v1119, %v1129
  %v1136 = vsub.f32 %v1120, %v1132
  %v1137 = vmul.f32 %v1133, 1.442695
  %v1138 = vpow.pop %v1137
  %v1139 = vmul.f32 %v1134, 1.442695
  %v1140 = vpow.pop %v1139
  %v1141 = vmul.f32 %v1135, 1.442695
  %v1142 = vpow.pop %v1141
  %v1143 = vmul.f32 %v1136, 1.442695
  %v1144 = vpow.pop %v1143
  %v1145 = vsel %vm39, %v1138, 0.0
  %1146 = vadd.xlane.f32.xlu0 %v1145
  %v1147 = vpop.xlane.xlu0 %1146
  %v1148 = vsel %vm39, %v1140, 0.0
  %1149 = vadd.xlane.f32.xlu0 %v1148
  %v1150 = vpop.xlane.xlu0 %1149
  %v1151 = vsel %vm39, %v1142, 0.0
  %1152 = vadd.xlane.f32.xlu0 %v1151
  %v1153 = vpop.xlane.xlu0 %1152
  %v1154 = vsel %vm39, %v1144, 0.0
  %1155 = vadd.xlane.f32.xlu0 %v1154
  %v1156 = vpop.xlane.xlu0 %1155
  %v1157 = vrcp.pop %v1147
  %v1158 = vrcp.pop %v1150
  %v1159 = vrcp.pop %v1153
  %v1160 = vrcp.pop %v1156
  %v1161 = vmul.f32 %v1138, %v1157
  %v1162 = vmul.f32 %v1140, %v1158
  %v1163 = vmul.f32 %v1142, %v1159
  %v1164 = vmul.f32 %v1144, %v1160
  %v1165 = vpack.c.bf16 %v1161, %v1161
  %v1166 = vpack.c.bf16 %v1162, %v1162
  %v1167 = vpack.c.bf16 %v1163, %v1163
  %v1168 = vpack.c.bf16 %v1164, %v1164
  %1169 = vrot.lane.b32.xlu0 %v35, 112
  %v1170 = vpop.permute.xlu0 %1169
  %v1172 = vsel %vm39, %v1165, 0
  %v1175 = vsel %vm279, %v1170, 0
  %1177 = vmatprep.subr.bf16.mxu0 0
  %1178 = vmatpush1.bf16.msra.mxu0 0
  %1179 = vmatprep.subr.bf16.mxu0 0
  %1180 = vmatpush1.bf16.msra.mxu0 0
  %1181 = vmatprep.subr.bf16.mxu0 0
  %1182 = vmatpush1.bf16.msra.mxu0 0
  %1183 = vmatprep.subr.bf16.mxu0 0
  %1184 = vmatpush1.bf16.msra.mxu0 0
  %1185 = vmatprep.subr.bf16.mxu0 0
  %1186 = vmatpush1.bf16.msra.mxu0 0
  %1187 = vmatprep.subr.bf16.mxu0 0
  %1188 = vmatpush1.bf16.msra.mxu0 0
  %1189 = vmatprep.subr.bf16.mxu0 0
  %1190 = vmatpush1.bf16.msra.mxu0 0
  %1191 = vmatprep.subr.bf16.mxu0 0
  %1192 = vmatpush1.bf16.msra.mxu0 %v1175
  %1193 = vmatprep.subr.bf16.mxu0 0
  %1194 = vmatpush2.bf16.msra.mxu0 0
  %1195 = vmatprep.subr.bf16.mxu0 0
  %1196 = vmatpush2.bf16.msra.mxu0 0
  %1197 = vmatprep.subr.bf16.mxu0 0
  %1198 = vmatpush2.bf16.msra.mxu0 0
  %1199 = vmatprep.subr.bf16.mxu0 0
  %1200 = vmatpush2.bf16.msra.mxu0 0
  %1201 = vmatprep.subr.bf16.mxu0 0
  %1202 = vmatpush2.bf16.msra.mxu0 0
  %1203 = vmatprep.subr.bf16.mxu0 0
  %1204 = vmatpush2.bf16.msra.mxu0 0
  %1205 = vmatprep.subr.bf16.mxu0 0
  %1206 = vmatpush2.bf16.msra.mxu0 0
  %1207 = vmatprep.subr.bf16.mxu0 0
  %1208 = vmatpush2.bf16.msra.mxu0 0
  %1209 = vmatprep.mubr.bf16.mxu0 0
  %1210 = vmatmul.mubr.bf16.gmra.mxu0 %v1172
  %v1211 = vpop.f32.mrf.mxu0
  %v1212 = vadd.f32 0.0, %v1211
  %v1213 = vpop.f32.mrf.mxu0
  %v1214 = vpop.f32.mrf.mxu0
  %v1215 = vpop.f32.mrf.mxu0
  %1216 = vdwg.mxu0
  %1217 = vrot.lane.b32.xlu0 %v36, 112
  %v1218 = vpop.permute.xlu0 %1217
  %v1220 = vsel %vm39, %v1166, 0
  %v1223 = vsel %vm279, %v1218, 0
  %1225 = vmatprep.subr.bf16.mxu0 0
  %1226 = vmatpush1.bf16.msra.mxu0 0
  %1227 = vmatprep.subr.bf16.mxu0 0
  %1228 = vmatpush1.bf16.msra.mxu0 0
  %1229 = vmatprep.subr.bf16.mxu0 0
  %1230 = vmatpush1.bf16.msra.mxu0 0
  %1231 = vmatprep.subr.bf16.mxu0 0
  %1232 = vmatpush1.bf16.msra.mxu0 0
  %1233 = vmatprep.subr.bf16.mxu0 0
  %1234 = vmatpush1.bf16.msra.mxu0 0
  %1235 = vmatprep.subr.bf16.mxu0 0
  %1236 = vmatpush1.bf16.msra.mxu0 0
  %1237 = vmatprep.subr.bf16.mxu0 0
  %1238 = vmatpush1.bf16.msra.mxu0 0
  %1239 = vmatprep.subr.bf16.mxu0 0
  %1240 = vmatpush1.bf16.msra.mxu0 %v1223
  %1241 = vmatprep.subr.bf16.mxu0 0
  %1242 = vmatpush2.bf16.msra.mxu0 0
  %1243 = vmatprep.subr.bf16.mxu0 0
  %1244 = vmatpush2.bf16.msra.mxu0 0
  %1245 = vmatprep.subr.bf16.mxu0 0
  %1246 = vmatpush2.bf16.msra.mxu0 0
  %1247 = vmatprep.subr.bf16.mxu0 0
  %1248 = vmatpush2.bf16.msra.mxu0 0
  %1249 = vmatprep.subr.bf16.mxu0 0
  %1250 = vmatpush2.bf16.msra.mxu0 0
  %1251 = vmatprep.subr.bf16.mxu0 0
  %1252 = vmatpush2.bf16.msra.mxu0 0
  %1253 = vmatprep.subr.bf16.mxu0 0
  %1254 = vmatpush2.bf16.msra.mxu0 0
  %1255 = vmatprep.subr.bf16.mxu0 0
  %1256 = vmatpush2.bf16.msra.mxu0 0
  %1257 = vmatprep.mubr.bf16.mxu0 0
  %1258 = vmatmul.mubr.bf16.gmra.mxu0 %v1220
  %v1259 = vpop.f32.mrf.mxu0
  %v1260 = vadd.f32 0.0, %v1259
  %v1261 = vpop.f32.mrf.mxu0
  %v1262 = vpop.f32.mrf.mxu0
  %v1263 = vpop.f32.mrf.mxu0
  %1264 = vdwg.mxu0
  %1265 = vrot.lane.b32.xlu0 %v37, 112
  %v1266 = vpop.permute.xlu0 %1265
  %v1268 = vsel %vm39, %v1167, 0
  %v1271 = vsel %vm279, %v1266, 0
  %1273 = vmatprep.subr.bf16.mxu0 0
  %1274 = vmatpush1.bf16.msra.mxu0 0
  %1275 = vmatprep.subr.bf16.mxu0 0
  %1276 = vmatpush1.bf16.msra.mxu0 0
  %1277 = vmatprep.subr.bf16.mxu0 0
  %1278 = vmatpush1.bf16.msra.mxu0 0
  %1279 = vmatprep.subr.bf16.mxu0 0
  %1280 = vmatpush1.bf16.msra.mxu0 0
  %1281 = vmatprep.subr.bf16.mxu0 0
  %1282 = vmatpush1.bf16.msra.mxu0 0
  %1283 = vmatprep.subr.bf16.mxu0 0
  %1284 = vmatpush1.bf16.msra.mxu0 0
  %1285 = vmatprep.subr.bf16.mxu0 0
  %1286 = vmatpush1.bf16.msra.mxu0 0
  %1287 = vmatprep.subr.bf16.mxu0 0
  %1288 = vmatpush1.bf16.msra.mxu0 %v1271
  %1289 = vmatprep.subr.bf16.mxu0 0
  %1290 = vmatpush2.bf16.msra.mxu0 0
  %1291 = vmatprep.subr.bf16.mxu0 0
  %1292 = vmatpush2.bf16.msra.mxu0 0
  %1293 = vmatprep.subr.bf16.mxu0 0
  %1294 = vmatpush2.bf16.msra.mxu0 0
  %1295 = vmatprep.subr.bf16.mxu0 0
  %1296 = vmatpush2.bf16.msra.mxu0 0
  %1297 = vmatprep.subr.bf16.mxu0 0
  %1298 = vmatpush2.bf16.msra.mxu0 0
  %1299 = vmatprep.subr.bf16.mxu0 0
  %1300 = vmatpush2.bf16.msra.mxu0 0
  %1301 = vmatprep.subr.bf16.mxu0 0
  %1302 = vmatpush2.bf16.msra.mxu0 0
  %1303 = vmatprep.subr.bf16.mxu0 0
  %1304 = vmatpush2.bf16.msra.mxu0 0
  %1305 = vmatprep.mubr.bf16.mxu0 0
  %1306 = vmatmul.mubr.bf16.gmra.mxu0 %v1268
  %v1307 = vpop.f32.mrf.mxu0
  %v1308 = vadd.f32 0.0, %v1307
  %v1309 = vpop.f32.mrf.mxu0
  %v1310 = vpop.f32.mrf.mxu0
  %v1311 = vpop.f32.mrf.mxu0
  %1312 = vdwg.mxu0
  %1313 = vrot.lane.b32.xlu0 %v38, 112
  %v1314 = vpop.permute.xlu0 %1313
  %v1316 = vsel %vm39, %v1168, 0
  %v1319 = vsel %vm279, %v1314, 0
  %1321 = vmatprep.subr.bf16.mxu0 0
  %1322 = vmatpush1.bf16.msra.mxu0 0
  %1323 = vmatprep.subr.bf16.mxu0 0
  %1324 = vmatpush1.bf16.msra.mxu0 0
  %1325 = vmatprep.subr.bf16.mxu0 0
  %1326 = vmatpush1.bf16.msra.mxu0 0
  %1327 = vmatprep.subr.bf16.mxu0 0
  %1328 = vmatpush1.bf16.msra.mxu0 0
  %1329 = vmatprep.subr.bf16.mxu0 0
  %1330 = vmatpush1.bf16.msra.mxu0 0
  %1331 = vmatprep.subr.bf16.mxu0 0
  %1332 = vmatpush1.bf16.msra.mxu0 0
  %1333 = vmatprep.subr.bf16.mxu0 0
  %1334 = vmatpush1.bf16.msra.mxu0 0
  %1335 = vmatprep.subr.bf16.mxu0 0
  %1336 = vmatpush1.bf16.msra.mxu0 %v1319
  %1337 = vmatprep.subr.bf16.mxu0 0
  %1338 = vmatpush2.bf16.msra.mxu0 0
  %1339 = vmatprep.subr.bf16.mxu0 0
  %1340 = vmatpush2.bf16.msra.mxu0 0
  %1341 = vmatprep.subr.bf16.mxu0 0
  %1342 = vmatpush2.bf16.msra.mxu0 0
  %1343 = vmatprep.subr.bf16.mxu0 0
  %1344 = vmatpush2.bf16.msra.mxu0 0
  %1345 = vmatprep.subr.bf16.mxu0 0
  %1346 = vmatpush2.bf16.msra.mxu0 0
  %1347 = vmatprep.subr.bf16.mxu0 0
  %1348 = vmatpush2.bf16.msra.mxu0 0
  %1349 = vmatprep.subr.bf16.mxu0 0
  %1350 = vmatpush2.bf16.msra.mxu0 0
  %1351 = vmatprep.subr.bf16.mxu0 0
  %1352 = vmatpush2.bf16.msra.mxu0 0
  %1353 = vmatprep.mubr.bf16.mxu0 0
  %1354 = vmatmul.mubr.bf16.gmra.mxu0 %v1316
  %v1355 = vpop.f32.mrf.mxu0
  %v1356 = vadd.f32 0.0, %v1355
  %v1357 = vpop.f32.mrf.mxu0
  %v1358 = vpop.f32.mrf.mxu0
  %v1359 = vpop.f32.mrf.mxu0
  %1360 = vdwg.mxu0
  %1361 = vrot.lane.b32.xlu0 %v27, 104
  %v1362 = vpop.permute.xlu0 %1361
  %1363 = vrot.lane.b32.xlu0 %v31, 104
  %v1364 = vpop.permute.xlu0 %1363
  %v1366 = vsel %vm39, %v1362, 0
  %v1369 = vsel %vm39, %v1364, 0
  %1371 = vmatprep.subr.bf16.mxu0 0
  %1372 = vmatpush1.bf16.xpose.msra.mxu0 0
  %1373 = vmatprep.subr.bf16.mxu0 0
  %1374 = vmatpush1.bf16.xpose.msra.mxu0 0
  %1375 = vmatprep.subr.bf16.mxu0 0
  %1376 = vmatpush1.bf16.xpose.msra.mxu0 0
  %1377 = vmatprep.subr.bf16.mxu0 0
  %1378 = vmatpush1.bf16.xpose.msra.mxu0 0
  %1379 = vmatprep.subr.bf16.mxu0 0
  %1380 = vmatpush1.bf16.xpose.msra.mxu0 0
  %1381 = vmatprep.subr.bf16.mxu0 0
  %1382 = vmatpush1.bf16.xpose.msra.mxu0 0
  %1383 = vmatprep.subr.bf16.mxu0 0
  %1384 = vmatpush1.bf16.xpose.msra.mxu0 0
  %1385 = vmatprep.subr.bf16.mxu0 0
  %1386 = vmatpush1.bf16.xpose.msra.mxu0 %v1369
  %1387 = vmatprep.subr.bf16.mxu0 0
  %1388 = vmatpush2.bf16.xpose.msra.mxu0 0
  %1389 = vmatprep.subr.bf16.mxu0 0
  %1390 = vmatpush2.bf16.xpose.msra.mxu0 0
  %1391 = vmatprep.subr.bf16.mxu0 0
  %1392 = vmatpush2.bf16.xpose.msra.mxu0 0
  %1393 = vmatprep.subr.bf16.mxu0 0
  %1394 = vmatpush2.bf16.xpose.msra.mxu0 0
  %1395 = vmatprep.subr.bf16.mxu0 0
  %1396 = vmatpush2.bf16.xpose.msra.mxu0 0
  %1397 = vmatprep.subr.bf16.mxu0 0
  %1398 = vmatpush2.bf16.xpose.msra.mxu0 0
  %1399 = vmatprep.subr.bf16.mxu0 0
  %1400 = vmatpush2.bf16.xpose.msra.mxu0 0
  %1401 = vmatprep.subr.bf16.mxu0 0
  %1402 = vmatpush2.bf16.xpose.msra.mxu0 0
  %1403 = vmatprep.mubr.bf16.mxu0 0
  %1404 = vmatmul.mubr.bf16.gmra.mxu0 %v1366
  %v1405 = vpop.f32.mrf.mxu0
  %v1406 = vadd.f32 0.0, %v1405
  %v1407 = vpop.f32.mrf.mxu0
  %v1408 = vpop.f32.mrf.mxu0
  %v1409 = vpop.f32.mrf.mxu0
  %1410 = vdwg.mxu0
  %1411 = vrot.lane.b32.xlu0 %v28, 104
  %v1412 = vpop.permute.xlu0 %1411
  %1413 = vrot.lane.b32.xlu0 %v32, 104
  %v1414 = vpop.permute.xlu0 %1413
  %v1416 = vsel %vm39, %v1412, 0
  %v1419 = vsel %vm39, %v1414, 0
  %1421 = vmatprep.subr.bf16.mxu0 0
  %1422 = vmatpush1.bf16.xpose.msra.mxu0 0
  %1423 = vmatprep.subr.bf16.mxu0 0
  %1424 = vmatpush1.bf16.xpose.msra.mxu0 0
  %1425 = vmatprep.subr.bf16.mxu0 0
  %1426 = vmatpush1.bf16.xpose.msra.mxu0 0
  %1427 = vmatprep.subr.bf16.mxu0 0
  %1428 = vmatpush1.bf16.xpose.msra.mxu0 0
  %1429 = vmatprep.subr.bf16.mxu0 0
  %1430 = vmatpush1.bf16.xpose.msra.mxu0 0
  %1431 = vmatprep.subr.bf16.mxu0 0
  %1432 = vmatpush1.bf16.xpose.msra.mxu0 0
  %1433 = vmatprep.subr.bf16.mxu0 0
  %1434 = vmatpush1.bf16.xpose.msra.mxu0 0
  %1435 = vmatprep.subr.bf16.mxu0 0
  %1436 = vmatpush1.bf16.xpose.msra.mxu0 %v1419
  %1437 = vmatprep.subr.bf16.mxu0 0
  %1438 = vmatpush2.bf16.xpose.msra.mxu0 0
  %1439 = vmatprep.subr.bf16.mxu0 0
  %1440 = vmatpush2.bf16.xpose.msra.mxu0 0
  %1441 = vmatprep.subr.bf16.mxu0 0
  %1442 = vmatpush2.bf16.xpose.msra.mxu0 0
  %1443 = vmatprep.subr.bf16.mxu0 0
  %1444 = vmatpush2.bf16.xpose.msra.mxu0 0
  %1445 = vmatprep.subr.bf16.mxu0 0
  %1446 = vmatpush2.bf16.xpose.msra.mxu0 0
  %1447 = vmatprep.subr.bf16.mxu0 0
  %1448 = vmatpush2.bf16.xpose.msra.mxu0 0
  %1449 = vmatprep.subr.bf16.mxu0 0
  %1450 = vmatpush2.bf16.xpose.msra.mxu0 0
  %1451 = vmatprep.subr.bf16.mxu0 0
  %1452 = vmatpush2.bf16.xpose.msra.mxu0 0
  %1453 = vmatprep.mubr.bf16.mxu0 0
  %1454 = vmatmul.mubr.bf16.gmra.mxu0 %v1416
  %v1455 = vpop.f32.mrf.mxu0
  %v1456 = vadd.f32 0.0, %v1455
  %v1457 = vpop.f32.mrf.mxu0
  %v1458 = vpop.f32.mrf.mxu0
  %v1459 = vpop.f32.mrf.mxu0
  %1460 = vdwg.mxu0
  %1461 = vrot.lane.b32.xlu0 %v29, 104
  %v1462 = vpop.permute.xlu0 %1461
  %1463 = vrot.lane.b32.xlu0 %v33, 104
  %v1464 = vpop.permute.xlu0 %1463
  %v1466 = vsel %vm39, %v1462, 0
  %v1469 = vsel %vm39, %v1464, 0
  %1471 = vmatprep.subr.bf16.mxu0 0
  %1472 = vmatpush1.bf16.xpose.msra.mxu0 0
  %1473 = vmatprep.subr.bf16.mxu0 0
  %1474 = vmatpush1.bf16.xpose.msra.mxu0 0
  %1475 = vmatprep.subr.bf16.mxu0 0
  %1476 = vmatpush1.bf16.xpose.msra.mxu0 0
  %1477 = vmatprep.subr.bf16.mxu0 0
  %1478 = vmatpush1.bf16.xpose.msra.mxu0 0
  %1479 = vmatprep.subr.bf16.mxu0 0
  %1480 = vmatpush1.bf16.xpose.msra.mxu0 0
  %1481 = vmatprep.subr.bf16.mxu0 0
  %1482 = vmatpush1.bf16.xpose.msra.mxu0 0
  %1483 = vmatprep.subr.bf16.mxu0 0
  %1484 = vmatpush1.bf16.xpose.msra.mxu0 0
  %1485 = vmatprep.subr.bf16.mxu0 0
  %1486 = vmatpush1.bf16.xpose.msra.mxu0 %v1469
  %1487 = vmatprep.subr.bf16.mxu0 0
  %1488 = vmatpush2.bf16.xpose.msra.mxu0 0
  %1489 = vmatprep.subr.bf16.mxu0 0
  %1490 = vmatpush2.bf16.xpose.msra.mxu0 0
  %1491 = vmatprep.subr.bf16.mxu0 0
  %1492 = vmatpush2.bf16.xpose.msra.mxu0 0
  %1493 = vmatprep.subr.bf16.mxu0 0
  %1494 = vmatpush2.bf16.xpose.msra.mxu0 0
  %1495 = vmatprep.subr.bf16.mxu0 0
  %1496 = vmatpush2.bf16.xpose.msra.mxu0 0
  %1497 = vmatprep.subr.bf16.mxu0 0
  %1498 = vmatpush2.bf16.xpose.msra.mxu0 0
  %1499 = vmatprep.subr.bf16.mxu0 0
  %1500 = vmatpush2.bf16.xpose.msra.mxu0 0
  %1501 = vmatprep.subr.bf16.mxu0 0
  %1502 = vmatpush2.bf16.xpose.msra.mxu0 0
  %1503 = vmatprep.mubr.bf16.mxu0 0
  %1504 = vmatmul.mubr.bf16.gmra.mxu0 %v1466
  %v1505 = vpop.f32.mrf.mxu0
  %v1506 = vadd.f32 0.0, %v1505
  %v1507 = vpop.f32.mrf.mxu0
  %v1508 = vpop.f32.mrf.mxu0
  %v1509 = vpop.f32.mrf.mxu0
  %1510 = vdwg.mxu0
  %1511 = vrot.lane.b32.xlu0 %v30, 104
  %v1512 = vpop.permute.xlu0 %1511
  %1513 = vrot.lane.b32.xlu0 %v34, 104
  %v1514 = vpop.permute.xlu0 %1513
  %v1516 = vsel %vm39, %v1512, 0
  %v1519 = vsel %vm39, %v1514, 0
  %1521 = vmatprep.subr.bf16.mxu0 0
  %1522 = vmatpush1.bf16.xpose.msra.mxu0 0
  %1523 = vmatprep.subr.bf16.mxu0 0
  %1524 = vmatpush1.bf16.xpose.msra.mxu0 0
  %1525 = vmatprep.subr.bf16.mxu0 0
  %1526 = vmatpush1.bf16.xpose.msra.mxu0 0
  %1527 = vmatprep.subr.bf16.mxu0 0
  %1528 = vmatpush1.bf16.xpose.msra.mxu0 0
  %1529 = vmatprep.subr.bf16.mxu0 0
  %1530 = vmatpush1.bf16.xpose.msra.mxu0 0
  %1531 = vmatprep.subr.bf16.mxu0 0
  %1532 = vmatpush1.bf16.xpose.msra.mxu0 0
  %1533 = vmatprep.subr.bf16.mxu0 0
  %1534 = vmatpush1.bf16.xpose.msra.mxu0 0
  %1535 = vmatprep.subr.bf16.mxu0 0
  %1536 = vmatpush1.bf16.xpose.msra.mxu0 %v1519
  %1537 = vmatprep.subr.bf16.mxu0 0
  %1538 = vmatpush2.bf16.xpose.msra.mxu0 0
  %1539 = vmatprep.subr.bf16.mxu0 0
  %1540 = vmatpush2.bf16.xpose.msra.mxu0 0
  %1541 = vmatprep.subr.bf16.mxu0 0
  %1542 = vmatpush2.bf16.xpose.msra.mxu0 0
  %1543 = vmatprep.subr.bf16.mxu0 0
  %1544 = vmatpush2.bf16.xpose.msra.mxu0 0
  %1545 = vmatprep.subr.bf16.mxu0 0
  %1546 = vmatpush2.bf16.xpose.msra.mxu0 0
  %1547 = vmatprep.subr.bf16.mxu0 0
  %1548 = vmatpush2.bf16.xpose.msra.mxu0 0
  %1549 = vmatprep.subr.bf16.mxu0 0
  %1550 = vmatpush2.bf16.xpose.msra.mxu0 0
  %1551 = vmatprep.subr.bf16.mxu0 0
  %1552 = vmatpush2.bf16.xpose.msra.mxu0 0
  %1553 = vmatprep.mubr.bf16.mxu0 0
  %1554 = vmatmul.mubr.bf16.gmra.mxu0 %v1516
  %v1555 = vpop.f32.mrf.mxu0
  %v1556 = vadd.f32 0.0, %v1555
  %v1557 = vpop.f32.mrf.mxu0
  %v1558 = vpop.f32.mrf.mxu0
  %v1559 = vpop.f32.mrf.mxu0
  %1560 = vdwg.mxu0
  %v1561 = vmul.f32 %v1406, 0.35355338
  %v1562 = vmul.f32 %v1456, 0.35355338
  %v1563 = vmul.f32 %v1506, 0.35355338
  %v1564 = vmul.f32 %v1556, 0.35355338
  %v1565 = vsel %vm39, %v1561, -inf
  %1566 = vmax.xlane.f32.xlu0 %v1565
  %v1567 = vpop.xlane.xlu0 %1566
  %v1568 = vsel %vm39, %v1562, -inf
  %1569 = vmax.xlane.f32.xlu0 %v1568
  %v1570 = vpop.xlane.xlu0 %1569
  %v1571 = vsel %vm39, %v1563, -inf
  %1572 = vmax.xlane.f32.xlu0 %v1571
  %v1573 = vpop.xlane.xlu0 %1572
  %v1574 = vsel %vm39, %v1564, -inf
  %1575 = vmax.xlane.f32.xlu0 %v1574
  %v1576 = vpop.xlane.xlu0 %1575
  %v1577 = vsub.f32 %v1561, %v1567
  %v1578 = vsub.f32 %v1562, %v1570
  %v1579 = vsub.f32 %v1563, %v1573
  %v1580 = vsub.f32 %v1564, %v1576
  %v1581 = vmul.f32 %v1577, 1.442695
  %v1582 = vpow.pop %v1581
  %v1583 = vmul.f32 %v1578, 1.442695
  %v1584 = vpow.pop %v1583
  %v1585 = vmul.f32 %v1579, 1.442695
  %v1586 = vpow.pop %v1585
  %v1587 = vmul.f32 %v1580, 1.442695
  %v1588 = vpow.pop %v1587
  %v1589 = vsel %vm39, %v1582, 0.0
  %1590 = vadd.xlane.f32.xlu0 %v1589
  %v1591 = vpop.xlane.xlu0 %1590
  %v1592 = vsel %vm39, %v1584, 0.0
  %1593 = vadd.xlane.f32.xlu0 %v1592
  %v1594 = vpop.xlane.xlu0 %1593
  %v1595 = vsel %vm39, %v1586, 0.0
  %1596 = vadd.xlane.f32.xlu0 %v1595
  %v1597 = vpop.xlane.xlu0 %1596
  %v1598 = vsel %vm39, %v1588, 0.0
  %1599 = vadd.xlane.f32.xlu0 %v1598
  %v1600 = vpop.xlane.xlu0 %1599
  %v1601 = vrcp.pop %v1591
  %v1602 = vrcp.pop %v1594
  %v1603 = vrcp.pop %v1597
  %v1604 = vrcp.pop %v1600
  %v1605 = vmul.f32 %v1582, %v1601
  %v1606 = vmul.f32 %v1584, %v1602
  %v1607 = vmul.f32 %v1586, %v1603
  %v1608 = vmul.f32 %v1588, %v1604
  %v1609 = vpack.c.bf16 %v1605, %v1605
  %v1610 = vpack.c.bf16 %v1606, %v1606
  %v1611 = vpack.c.bf16 %v1607, %v1607
  %v1612 = vpack.c.bf16 %v1608, %v1608
  %1613 = vrot.lane.b32.xlu0 %v35, 104
  %v1614 = vpop.permute.xlu0 %1613
  %v1616 = vsel %vm39, %v1609, 0
  %v1619 = vsel %vm279, %v1614, 0
  %1621 = vmatprep.subr.bf16.mxu0 0
  %1622 = vmatpush1.bf16.msra.mxu0 0
  %1623 = vmatprep.subr.bf16.mxu0 0
  %1624 = vmatpush1.bf16.msra.mxu0 0
  %1625 = vmatprep.subr.bf16.mxu0 0
  %1626 = vmatpush1.bf16.msra.mxu0 0
  %1627 = vmatprep.subr.bf16.mxu0 0
  %1628 = vmatpush1.bf16.msra.mxu0 0
  %1629 = vmatprep.subr.bf16.mxu0 0
  %1630 = vmatpush1.bf16.msra.mxu0 0
  %1631 = vmatprep.subr.bf16.mxu0 0
  %1632 = vmatpush1.bf16.msra.mxu0 0
  %1633 = vmatprep.subr.bf16.mxu0 0
  %1634 = vmatpush1.bf16.msra.mxu0 0
  %1635 = vmatprep.subr.bf16.mxu0 0
  %1636 = vmatpush1.bf16.msra.mxu0 %v1619
  %1637 = vmatprep.subr.bf16.mxu0 0
  %1638 = vmatpush2.bf16.msra.mxu0 0
  %1639 = vmatprep.subr.bf16.mxu0 0
  %1640 = vmatpush2.bf16.msra.mxu0 0
  %1641 = vmatprep.subr.bf16.mxu0 0
  %1642 = vmatpush2.bf16.msra.mxu0 0
  %1643 = vmatprep.subr.bf16.mxu0 0
  %1644 = vmatpush2.bf16.msra.mxu0 0
  %1645 = vmatprep.subr.bf16.mxu0 0
  %1646 = vmatpush2.bf16.msra.mxu0 0
  %1647 = vmatprep.subr.bf16.mxu0 0
  %1648 = vmatpush2.bf16.msra.mxu0 0
  %1649 = vmatprep.subr.bf16.mxu0 0
  %1650 = vmatpush2.bf16.msra.mxu0 0
  %1651 = vmatprep.subr.bf16.mxu0 0
  %1652 = vmatpush2.bf16.msra.mxu0 0
  %1653 = vmatprep.mubr.bf16.mxu0 0
  %1654 = vmatmul.mubr.bf16.gmra.mxu0 %v1616
  %v1655 = vpop.f32.mrf.mxu0
  %v1656 = vadd.f32 0.0, %v1655
  %v1657 = vpop.f32.mrf.mxu0
  %v1658 = vpop.f32.mrf.mxu0
  %v1659 = vpop.f32.mrf.mxu0
  %1660 = vdwg.mxu0
  %1661 = vrot.lane.b32.xlu0 %v36, 104
  %v1662 = vpop.permute.xlu0 %1661
  %v1664 = vsel %vm39, %v1610, 0
  %v1667 = vsel %vm279, %v1662, 0
  %1669 = vmatprep.subr.bf16.mxu0 0
  %1670 = vmatpush1.bf16.msra.mxu0 0
  %1671 = vmatprep.subr.bf16.mxu0 0
  %1672 = vmatpush1.bf16.msra.mxu0 0
  %1673 = vmatprep.subr.bf16.mxu0 0
  %1674 = vmatpush1.bf16.msra.mxu0 0
  %1675 = vmatprep.subr.bf16.mxu0 0
  %1676 = vmatpush1.bf16.msra.mxu0 0
  %1677 = vmatprep.subr.bf16.mxu0 0
  %1678 = vmatpush1.bf16.msra.mxu0 0
  %1679 = vmatprep.subr.bf16.mxu0 0
  %1680 = vmatpush1.bf16.msra.mxu0 0
  %1681 = vmatprep.subr.bf16.mxu0 0
  %1682 = vmatpush1.bf16.msra.mxu0 0
  %1683 = vmatprep.subr.bf16.mxu0 0
  %1684 = vmatpush1.bf16.msra.mxu0 %v1667
  %1685 = vmatprep.subr.bf16.mxu0 0
  %1686 = vmatpush2.bf16.msra.mxu0 0
  %1687 = vmatprep.subr.bf16.mxu0 0
  %1688 = vmatpush2.bf16.msra.mxu0 0
  %1689 = vmatprep.subr.bf16.mxu0 0
  %1690 = vmatpush2.bf16.msra.mxu0 0
  %1691 = vmatprep.subr.bf16.mxu0 0
  %1692 = vmatpush2.bf16.msra.mxu0 0
  %1693 = vmatprep.subr.bf16.mxu0 0
  %1694 = vmatpush2.bf16.msra.mxu0 0
  %1695 = vmatprep.subr.bf16.mxu0 0
  %1696 = vmatpush2.bf16.msra.mxu0 0
  %1697 = vmatprep.subr.bf16.mxu0 0
  %1698 = vmatpush2.bf16.msra.mxu0 0
  %1699 = vmatprep.subr.bf16.mxu0 0
  %1700 = vmatpush2.bf16.msra.mxu0 0
  %1701 = vmatprep.mubr.bf16.mxu0 0
  %1702 = vmatmul.mubr.bf16.gmra.mxu0 %v1664
  %v1703 = vpop.f32.mrf.mxu0
  %v1704 = vadd.f32 0.0, %v1703
  %v1705 = vpop.f32.mrf.mxu0
  %v1706 = vpop.f32.mrf.mxu0
  %v1707 = vpop.f32.mrf.mxu0
  %1708 = vdwg.mxu0
  %1709 = vrot.lane.b32.xlu0 %v37, 104
  %v1710 = vpop.permute.xlu0 %1709
  %v1712 = vsel %vm39, %v1611, 0
  %v1715 = vsel %vm279, %v1710, 0
  %1717 = vmatprep.subr.bf16.mxu0 0
  %1718 = vmatpush1.bf16.msra.mxu0 0
  %1719 = vmatprep.subr.bf16.mxu0 0
  %1720 = vmatpush1.bf16.msra.mxu0 0
  %1721 = vmatprep.subr.bf16.mxu0 0
  %1722 = vmatpush1.bf16.msra.mxu0 0
  %1723 = vmatprep.subr.bf16.mxu0 0
  %1724 = vmatpush1.bf16.msra.mxu0 0
  %1725 = vmatprep.subr.bf16.mxu0 0
  %1726 = vmatpush1.bf16.msra.mxu0 0
  %1727 = vmatprep.subr.bf16.mxu0 0
  %1728 = vmatpush1.bf16.msra.mxu0 0
  %1729 = vmatprep.subr.bf16.mxu0 0
  %1730 = vmatpush1.bf16.msra.mxu0 0
  %1731 = vmatprep.subr.bf16.mxu0 0
  %1732 = vmatpush1.bf16.msra.mxu0 %v1715
  %1733 = vmatprep.subr.bf16.mxu0 0
  %1734 = vmatpush2.bf16.msra.mxu0 0
  %1735 = vmatprep.subr.bf16.mxu0 0
  %1736 = vmatpush2.bf16.msra.mxu0 0
  %1737 = vmatprep.subr.bf16.mxu0 0
  %1738 = vmatpush2.bf16.msra.mxu0 0
  %1739 = vmatprep.subr.bf16.mxu0 0
  %1740 = vmatpush2.bf16.msra.mxu0 0
  %1741 = vmatprep.subr.bf16.mxu0 0
  %1742 = vmatpush2.bf16.msra.mxu0 0
  %1743 = vmatprep.subr.bf16.mxu0 0
  %1744 = vmatpush2.bf16.msra.mxu0 0
  %1745 = vmatprep.subr.bf16.mxu0 0
  %1746 = vmatpush2.bf16.msra.mxu0 0
  %1747 = vmatprep.subr.bf16.mxu0 0
  %1748 = vmatpush2.bf16.msra.mxu0 0
  %1749 = vmatprep.mubr.bf16.mxu0 0
  %1750 = vmatmul.mubr.bf16.gmra.mxu0 %v1712
  %v1751 = vpop.f32.mrf.mxu0
  %v1752 = vadd.f32 0.0, %v1751
  %v1753 = vpop.f32.mrf.mxu0
  %v1754 = vpop.f32.mrf.mxu0
  %v1755 = vpop.f32.mrf.mxu0
  %1756 = vdwg.mxu0
  %1757 = vrot.lane.b32.xlu0 %v38, 104
  %v1758 = vpop.permute.xlu0 %1757
  %v1760 = vsel %vm39, %v1612, 0
  %v1763 = vsel %vm279, %v1758, 0
  %1765 = vmatprep.subr.bf16.mxu0 0
  %1766 = vmatpush1.bf16.msra.mxu0 0
  %1767 = vmatprep.subr.bf16.mxu0 0
  %1768 = vmatpush1.bf16.msra.mxu0 0
  %1769 = vmatprep.subr.bf16.mxu0 0
  %1770 = vmatpush1.bf16.msra.mxu0 0
  %1771 = vmatprep.subr.bf16.mxu0 0
  %1772 = vmatpush1.bf16.msra.mxu0 0
  %1773 = vmatprep.subr.bf16.mxu0 0
  %1774 = vmatpush1.bf16.msra.mxu0 0
  %1775 = vmatprep.subr.bf16.mxu0 0
  %1776 = vmatpush1.bf16.msra.mxu0 0
  %1777 = vmatprep.subr.bf16.mxu0 0
  %1778 = vmatpush1.bf16.msra.mxu0 0
  %1779 = vmatprep.subr.bf16.mxu0 0
  %1780 = vmatpush1.bf16.msra.mxu0 %v1763
  %1781 = vmatprep.subr.bf16.mxu0 0
  %1782 = vmatpush2.bf16.msra.mxu0 0
  %1783 = vmatprep.subr.bf16.mxu0 0
  %1784 = vmatpush2.bf16.msra.mxu0 0
  %1785 = vmatprep.subr.bf16.mxu0 0
  %1786 = vmatpush2.bf16.msra.mxu0 0
  %1787 = vmatprep.subr.bf16.mxu0 0
  %1788 = vmatpush2.bf16.msra.mxu0 0
  %1789 = vmatprep.subr.bf16.mxu0 0
  %1790 = vmatpush2.bf16.msra.mxu0 0
  %1791 = vmatprep.subr.bf16.mxu0 0
  %1792 = vmatpush2.bf16.msra.mxu0 0
  %1793 = vmatprep.subr.bf16.mxu0 0
  %1794 = vmatpush2.bf16.msra.mxu0 0
  %1795 = vmatprep.subr.bf16.mxu0 0
  %1796 = vmatpush2.bf16.msra.mxu0 0
  %1797 = vmatprep.mubr.bf16.mxu0 0
  %1798 = vmatmul.mubr.bf16.gmra.mxu0 %v1760
  %v1799 = vpop.f32.mrf.mxu0
  %v1800 = vadd.f32 0.0, %v1799
  %v1801 = vpop.f32.mrf.mxu0
  %v1802 = vpop.f32.mrf.mxu0
  %v1803 = vpop.f32.mrf.mxu0
  %1804 = vdwg.mxu0
  %1809 = vrot.lane.b32.xlu0 %v765, 8
  %v1810 = vpop.permute.xlu0 %1809
  %1811 = vrot.lane.b32.xlu0 %v814, 8
  %v1812 = vpop.permute.xlu0 %1811
  %1813 = vrot.lane.b32.xlu0 %v863, 8
  %v1814 = vpop.permute.xlu0 %1813
  %1815 = vrot.lane.b32.xlu0 %v912, 8
  %v1816 = vpop.permute.xlu0 %1815
  %1825 = vrot.lane.b32.xlu0 %v1212, 16
  %v1826 = vpop.permute.xlu0 %1825
  %1827 = vrot.lane.b32.xlu0 %v1260, 16
  %v1828 = vpop.permute.xlu0 %1827
  %1829 = vrot.lane.b32.xlu0 %v1308, 16
  %v1830 = vpop.permute.xlu0 %1829
  %1831 = vrot.lane.b32.xlu0 %v1356, 16
  %v1832 = vpop.permute.xlu0 %1831
  %1841 = vrot.lane.b32.xlu0 %v1656, 24
  %v1842 = vpop.permute.xlu0 %1841
  %1843 = vrot.lane.b32.xlu0 %v1704, 24
  %v1844 = vpop.permute.xlu0 %1843
  %1845 = vrot.lane.b32.xlu0 %v1752, 24
  %v1846 = vpop.permute.xlu0 %1845
  %1847 = vrot.lane.b32.xlu0 %v1800, 24
  %v1848 = vpop.permute.xlu0 %1847
  %v1853 = vsel %vm39, %v318, %v1810
  %v1854 = vsel %vm39, %v364, %v1812
  %v1855 = vsel %vm39, %v410, %v1814
  %v1856 = vsel %vm39, %v456, %v1816
  %vm1857 = vcmask 130048
  %v1858 = vsel %vm1857, %v1853, %v1826
  %v1859 = vsel %vm1857, %v1854, %v1828
  %v1860 = vsel %vm1857, %v1855, %v1830
  %v1861 = vsel %vm1857, %v1856, %v1832
  %vm1862 = vcmask 195584
  %v1863 = vsel %vm1862, %v1858, %v1842
  %v1864 = vsel %vm1862, %v1859, %v1844
  %v1865 = vsel %vm1862, %v1860, %v1846
  %v1866 = vsel %vm1862, %v1861, %v1848
  %vm1867 = vcmask 261120
  %1868 = vst.msk [vmem:[%s3] sm:$0xff] %vm1867, %v1863
  %1869 = vst.msk [vmem:[%s3 + $0x8] sm:$0xff] %vm1867, %v1864
  %1870 = vst.msk [vmem:[%s3 + $0x10] sm:$0xff] %vm1867, %v1865
  %1871 = vst.msk [vmem:[%s3 + $0x18] sm:$0xff] %vm1867, %v1866
  // Predicated region
  $region14: #{ijepa_forward.16} parent=0 // pred_check
    _
  $region15: #{ijepa_forward.16} parent=0 // pred_check_branch
    %1873 = sbr.rel (0) target = $region17
  $region16: #{ijepa_forward.16} parent=0 // pred_region
    _
  $region17: #{ijepa_forward.16} parent=0 // pred_fallthru
    _
  // Predicated region
  $region18: #{ijepa_forward.16} parent=0 // pred_check
    _
  $region19: #{ijepa_forward.16} parent=0 // pred_check_branch
    %1875 = sbr.rel (0) target = $region21
  $region20: #{ijepa_forward.16} parent=0 // pred_region
    _
  $region21: #{ijepa_forward.16} parent=0 // pred_fallthru
    _

// kernel: ijepa_forward.25
$region0: #{ijepa_forward.25}
  #allocation0 [shape = 'u32[]', space=smem, size = 0x4, offset = 0x4, fixed_abs, tag = 'smem constant byte address 0x4 - core index']
  #allocation1 [shape = 'u32[144,128]{1,0:T(1,128)}', space=vmem, size = 0x12000, scoped, tag = 'internal scratch']
  %s0 = inlined_call_operand.vmem [shape: f32[32,32], index: 0, kind: input, shape index: {}]
  %s1 = inlined_call_operand.vmem [shape: f32[1,32], index: 1, kind: input, shape index: {}]
  %s2 = inlined_call_operand.vmem [shape: f32[1,32], index: 2, kind: input, shape index: {}]
  %s3 = inlined_call_operand.hbm [shape: f32[32,32], index: 3, kind: output, shape index: {}]
  %s4 = sld [smem:[#allocation0]]
  $region22: #{ijepa_forward.25} parent=0
    _
  %s6 = ssub.s32 1, %s4
  %s7 = scalar_select 0, %s6, %s4
  $region1: #{ijepa_forward.25} parent=0
    #allocation2 [shape = 'u8[16384]{0}', space=vmem, size = 0x4000, scoped, tag = 'output window, operand 0, single buffered']
    #allocation3 [shape = 's32[1]{0}', space=sflag, size = 0x4, scoped, tag = 'scoped memory for ijepa_forward.25']
    %8 = vsyncpa [#allocation3], 0
    // Predicated region
    $region2: #{ijepa_forward.25} parent=1 // pred_check
      _
    $region3: #{ijepa_forward.25} parent=1 // pred_check_branch
      %10 = sbr.rel (0) target = $region5
    $region4: #{ijepa_forward.25} parent=1 // pred_region
      _
    $region5: #{ijepa_forward.25} parent=1 // pred_fallthru
      _
    // Predicated region
    $region6: #{ijepa_forward.25} parent=1 // pred_check
      _
    $region7: #{ijepa_forward.25} parent=1 // pred_check_branch
      %12 = sbr.rel (0) target = $region9
    $region8: #{ijepa_forward.25} parent=1 // pred_region
      _
    $region9: #{ijepa_forward.25} parent=1 // pred_fallthru
      _
    // Predicated region
    $region10: #{ijepa_forward.25} parent=1 // pred_check
      _
    $region11: #{ijepa_forward.25} parent=1 // pred_check_branch
      %14 = sbr.rel (0) target = $region13
    $region12: #{ijepa_forward.25} parent=1 // pred_region
      _
    $region13: #{ijepa_forward.25} parent=1 // pred_fallthru
      _
    %v15 = vld [vmem:[%s0] sm:$0xff]
    %v16 = vld [vmem:[%s0 + $0x8] sm:$0xff]
    %v17 = vld [vmem:[%s0 + $0x10] sm:$0xff]
    %v18 = vld [vmem:[%s0 + $0x18] sm:$0xff]
    %vm19 = vcmask 261120
    %v20 = vsel %vm19, %v15, 0.0
    %21 = vadd.xlane.f32.xlu0 %v20
    %v22 = vpop.xlane.xlu0 %21
    %v23 = vsel %vm19, %v16, 0.0
    %24 = vadd.xlane.f32.xlu0 %v23
    %v25 = vpop.xlane.xlu0 %24
    %v26 = vsel %vm19, %v17, 0.0
    %27 = vadd.xlane.f32.xlu0 %v26
    %v28 = vpop.xlane.xlu0 %27
    %v29 = vsel %vm19, %v18, 0.0
    %30 = vadd.xlane.f32.xlu0 %v29
    %v31 = vpop.xlane.xlu0 %30
    %v32 = vrcp.pop 32.0
    %v33 = vmul.f32 %v22, %v32
    %v34 = vmul.f32 %v25, %v32
    %v35 = vmul.f32 %v28, %v32
    %v36 = vmul.f32 %v31, %v32
    %v37 = vsub.f32 %v15, %v33
    %v38 = vsub.f32 %v16, %v34
    %v39 = vsub.f32 %v17, %v35
    %v40 = vsub.f32 %v18, %v36
    %v41 = vmul.f32 %v37, %v37
    %v42 = vmul.f32 %v38, %v38
    %v43 = vmul.f32 %v39, %v39
    %v44 = vmul.f32 %v40, %v40
    %v45 = vsel %vm19, %v41, 0.0
    %46 = vadd.xlane.f32.xlu0 %v45
    %v47 = vpop.xlane.xlu0 %46
    %v48 = vsel %vm19, %v42, 0.0
    %49 = vadd.xlane.f32.xlu0 %v48
    %v50 = vpop.xlane.xlu0 %49
    %v51 = vsel %vm19, %v43, 0.0
    %52 = vadd.xlane.f32.xlu0 %v51
    %v53 = vpop.xlane.xlu0 %52
    %v54 = vsel %vm19, %v44, 0.0
    %55 = vadd.xlane.f32.xlu0 %v54
    %v56 = vpop.xlane.xlu0 %55
    %v57 = vmul.f32 %v47, %v32
    %v58 = vmul.f32 %v50, %v32
    %v59 = vmul.f32 %v53, %v32
    %v60 = vmul.f32 %v56, %v32
    %v61 = vadd.f32 %v57, 1e-05
    %v62 = vadd.f32 %v58, 1e-05
    %v63 = vadd.f32 %v59, 1e-05
    %v64 = vadd.f32 %v60, 1e-05
    %v65 = vrsqrt.pop %v61
    %v66 = vrsqrt.pop %v62
    %v67 = vrsqrt.pop %v63
    %v68 = vrsqrt.pop %v64
    %v69 = vmul.f32 %v37, %v65
    %v70 = vmul.f32 %v38, %v66
    %v71 = vmul.f32 %v39, %v67
    %v72 = vmul.f32 %v40, %v68
    %v73 = vld [vmem:[%s1] sm:$0x1]
    %v75 = vlaneseq
    %v76 = vshrl.u32 %v75, 7
    %v77 = vsub.s32 0, %v76
    %v78 = vrot.slane %v73, %v77
    %v80 = vmul.f32 %v69, %v78
    %v81 = vmul.f32 %v70, %v78
    %v82 = vmul.f32 %v71, %v78
    %v83 = vmul.f32 %v72, %v78
    %v84 = vld [vmem:[%s2] sm:$0x1]
    %v86 = vlaneseq
    %v87 = vshrl.u32 %v86, 7
    %v88 = vsub.s32 0, %v87
    %v89 = vrot.slane %v84, %v88
    %v91 = vadd.f32 %v80, %v89
    %v92 = vadd.f32 %v81, %v89
    %v93 = vadd.f32 %v82, %v89
    %v94 = vadd.f32 %v83, %v89
    %95 = vst.msk [vmem:[#allocation2] sm:$0xff] %vm19, %v91
    %96 = vst.msk [vmem:[#allocation2 + $0x8] sm:$0xff] %vm19, %v92
    %97 = vst.msk [vmem:[#allocation2 + $0x10] sm:$0xff] %vm19, %v93
    %98 = vst.msk [vmem:[#allocation2 + $0x18] sm:$0xff] %vm19, %v94
    // Predicated region
    $region14: #{ijepa_forward.25} parent=1 // pred_check
      _
    $region15: #{ijepa_forward.25} parent=1 // pred_check_branch
      %100 = sbr.rel (0) target = $region17
    $region16: #{ijepa_forward.25} parent=1 // pred_region
      %s102 = ssub.s32 512, 512
      %103 = vsyncadd [#allocation3], %s102
      %s104 = sshll.u32 [#allocation2], 4
      %s105 = int_to_ptr.vmem [resolvable:$true] %s104
      %110 = dma.vmem_to_hbm [thread:$0]  %s105, 512, %s3, [#allocation3], 128, 128, 8
    $region17: #{ijepa_forward.25} parent=1 // pred_fallthru
      _
    // Predicated region
    $region18: #{ijepa_forward.25} parent=1 // pred_check
      _
    $region19: #{ijepa_forward.25} parent=1 // pred_check_branch
      %112 = sbr.rel (0) target = $region21
    $region20: #{ijepa_forward.25} parent=1 // pred_region
      %113 = dma.done [#allocation3], 512
    $region21: #{ijepa_forward.25} parent=1 // pred_fallthru
      _
    %114 = vsyncpa [#allocation3], 1

</llo_original>
